<compile_context>
chip_gen: v5e
topology: v5e:2x2
jax: 0.10.0
libtpu: 0.0.40
codegen_flags: <defaults>
</compile_context>

<pallas_src>
import functools

import jax
import jax.numpy as jnp
from jax import lax
from jax.experimental import pallas as pl
from jax.experimental.pallas import tpu as pltpu


# ----------------------------------------------------------------------------
# Fused forward kernel: one grid step == one batch element.
# ----------------------------------------------------------------------------
def _sa_kernel(
    x_ref,                                               # (1, T, C_in)
    w1_ref, b1_ref, w2_ref, b2_ref, w3_ref, b3_ref,      # conv taps (K, Cin, Cout) + bias (1, Cout)
    tpgw_ref, tpgb_ref, nlw_ref, nlb_ref,                # non-local fused theta|phi|g proj + W
    gwi_ref, gbi_ref, gwh_ref, gbh_ref,                  # BiGRU block-diag packed (3,2H,2H)/(3,2H)
    fc1w_ref, fc1b_ref, fc2w_ref, fc2b_ref, scale_ref,   # heads + learned output scale
    o_ref,                                               # (1, 1, OUT)
    pad1, c1, pad2, c2, pad3, c3,                        # VMEM scratch
    *, T, H, Ci, L1, P1, L2, P2, L3, P3,
):
    f32 = jnp.float32

    def load_padded(pad_ref, act, L_in):
        # zero-pad (pad=1 on both ends) around the activation, all in VMEM
        zrow = jnp.zeros((1, pad_ref.shape[1]), f32)
        pad_ref[0:1, :] = zrow
        pad_ref[L_in + 1:L_in + 2, :] = zrow
        pad_ref[1:1 + L_in, :] = act

    def conv_relu_pool(pad_ref, w_ref, b_ref, cout_ref, K, dil, L_out, L_pool):
        # Conv1d as K shifted matmuls on the VMEM-resident padded activation
        acc = jnp.dot(pad_ref[0:L_out, :], w_ref[0], preferred_element_type=f32)
        for k in range(1, K):
            acc = acc + jnp.dot(pad_ref[k * dil:k * dil + L_out, :], w_ref[k],
                                preferred_element_type=f32)
        cout_ref[...] = jnp.maximum(acc + b_ref[...], 0.0)          # bias + ReLU
        even = cout_ref[pl.ds(0, L_pool, stride=2), :]              # MaxPool1d(2, 2), floor mode
        odd = cout_ref[pl.ds(1, L_pool, stride=2), :]
        return jnp.maximum(even, odd)

    # ---- conv stack (BatchNorm already folded into the conv weights) ----
    load_padded(pad1, x_ref[0], T)
    a1 = conv_relu_pool(pad1, w1_ref, b1_ref, c1, K=7, dil=1, L_out=L1, L_pool=P1)
    load_padded(pad2, a1, P1)
    a2 = conv_relu_pool(pad2, w2_ref, b2_ref, c2, K=7, dil=2, L_out=L2, L_pool=P2)
    load_padded(pad3, a2, P2)
    a3 = conv_relu_pool(pad3, w3_ref, b3_ref, c3, K=3, dil=4, L_out=L3, L_pool=P3)   # (P3, H)

    # ---- non-local block (embedded Gaussian), fused theta|phi|g projection ----
    proj = jnp.dot(a3, tpgw_ref[...], preferred_element_type=f32) + tpgb_ref[...]    # (P3, 3*Ci)
    theta = proj[:, 0:Ci]
    phi = proj[:, Ci:2 * Ci]
    g = proj[:, 2 * Ci:3 * Ci]
    f = jnp.einsum("ld,md->lm", theta, phi, preferred_element_type=f32)              # (P3, P3)
    f = f - jnp.max(f, axis=-1, keepdims=True)
    e = jnp.exp(f)
    attn = e * pl.reciprocal(jnp.sum(e, axis=-1, keepdims=True), approx=True)
    y = jnp.dot(attn, g, preferred_element_type=f32)                                 # (P3, Ci)
    xg = jnp.dot(y, nlw_ref[...], preferred_element_type=f32) + nlb_ref[...] + a3    # residual

    # ---- BiGRU (lane-stacked fwd/bwd state, block-diagonal packed weights) ----
    L = P3
    rows = lax.broadcasted_iota(jnp.int32, (L, L), 0)
    cols = lax.broadcasted_iota(jnp.int32, (L, L), 1)
    rev = (rows + cols == L - 1).astype(f32)                      # anti-identity permutation
    xg_rev = jnp.dot(rev, xg, preferred_element_type=f32)         # reversed sequence
    xcat = jnp.concatenate([xg, xg_rev], axis=-1)                 # (L, 2H)

    wh = [gwh_ref[i] for i in range(3)]                           # (2H, 2H) each, gates [r, z, n]
    bh = [gbh_ref[i:i + 1, :] for i in range(3)]                  # (1, 2H)
    # input-gate terms for all timesteps, hoisted out of the recurrence
    gi = [jnp.dot(xcat, gwi_ref[i], preferred_element_type=f32) + gbi_ref[i:i + 1, :]
          for i in range(3)]                                      # (L, 2H) each

    h = jnp.zeros((1, 2 * H), f32)
    for t in range(L):                                            # fully unrolled; no lane slicing
        gh_r = jnp.dot(h, wh[0], preferred_element_type=f32) + bh[0]
        gh_z = jnp.dot(h, wh[1], preferred_element_type=f32) + bh[1]
        gh_n = jnp.dot(h, wh[2], preferred_element_type=f32) + bh[2]
        r = jax.nn.sigmoid(gi[0][t:t + 1, :] + gh_r)
        z = jax.nn.sigmoid(gi[1][t:t + 1, :] + gh_z)
        n = jnp.tanh(gi[2][t:t + 1, :] + r * gh_n)
        h = (1.0 - z) * n + z * h
    # h == cat(output[:, -1, :H], output[:, 0, H:])  (fwd final state | bwd final state)

    # ---- heads: fc1 + ReLU (+ dropout==identity) + fc2 + learned scale ----
    y1 = jnp.maximum(jnp.dot(h, fc1w_ref[...], preferred_element_type=f32) + fc1b_ref[...], 0.0)
    y2 = jnp.dot(y1, fc2w_ref[...], preferred_element_type=f32) + fc2b_ref[...]
    o_ref[0] = (y2 * scale_ref[...]).astype(o_ref.dtype)


# ----------------------------------------------------------------------------
# Wrapper
# ----------------------------------------------------------------------------
def sa_model_forward(x, p):
    B, T, C_in = x.shape
    H = p["fc1_b"].shape[1]
    Ci = p["nl_W_w"].shape[0]
    OUT = p["fc2_b"].shape[1]

    # conv/pool static lengths (k=7,d=1,p=1) -> /2 ; (k=7,d=2,p=1) -> /2 ; (k=3,d=4,p=1) -> /2
    L1 = T + 2 - 1 * 6
    P1 = L1 // 2
    L2 = P1 + 2 - 2 * 6
    P2 = L2 // 2
    L3 = P2 + 2 - 4 * 2
    P3 = L3 // 2

    kernel = functools.partial(_sa_kernel, T=T, H=H, Ci=Ci,
                               L1=L1, P1=P1, L2=L2, P2=P2, L3=L3, P3=P3)
    full2 = lambda b: (0, 0)
    full3 = lambda b: (0, 0, 0)

    out = pl.pallas_call(
        kernel,
        out_shape=jax.ShapeDtypeStruct((B, 1, OUT), jnp.float32),
        grid=(B,),
        in_specs=[
            pl.BlockSpec((1, T, C_in), lambda b: (b, 0, 0)),
            pl.BlockSpec((7, C_in, H), full3), pl.BlockSpec((1, H), full2),
            pl.BlockSpec((7, H, H), full3), pl.BlockSpec((1, H), full2),
            pl.BlockSpec((3, H, H), full3), pl.BlockSpec((1, H), full2),
            pl.BlockSpec((H, 3 * Ci), full2), pl.BlockSpec((1, 3 * Ci), full2),
            pl.BlockSpec((Ci, H), full2), pl.BlockSpec((1, H), full2),
            pl.BlockSpec((3, 2 * H, 2 * H), full3), pl.BlockSpec((3, 2 * H), full2),
            pl.BlockSpec((3, 2 * H, 2 * H), full3), pl.BlockSpec((3, 2 * H), full2),
            pl.BlockSpec((2 * H, H), full2), pl.BlockSpec((1, H), full2),
            pl.BlockSpec((H, OUT), full2), pl.BlockSpec((1, OUT), full2),
            pl.BlockSpec((1, 1), full2),
        ],
        out_specs=pl.BlockSpec((1, 1, OUT), lambda b: (b, 0, 0)),
        scratch_shapes=[
            pltpu.VMEM((T + 2, C_in), jnp.float32),   # padded input (stage 1)
            pltpu.VMEM((L1, H), jnp.float32),         # conv1 output (pre-pool)
            pltpu.VMEM((P1 + 2, H), jnp.float32),     # padded input (stage 2)
            pltpu.VMEM((L2, H), jnp.float32),         # conv2 output
            pltpu.VMEM((P2 + 2, H), jnp.float32),     # padded input (stage 3)
            pltpu.VMEM((L3, H), jnp.float32),         # conv3 output
        ],
        compiler_params=pltpu.CompilerParams(dimension_semantics=("parallel",)),
    )(x,
      p["conv1_w"], p["conv1_b"], p["conv2_w"], p["conv2_b"], p["conv3_w"], p["conv3_b"],
      p["nl_tpg_w"], p["nl_tpg_b"], p["nl_W_w"], p["nl_W_b"],
      p["gru_wi"], p["gru_bi"], p["gru_wh"], p["gru_bh"],
      p["fc1_w"], p["fc1_b"], p["fc2_w"], p["fc2_b"], p["out_scale"])
    return out.reshape(B, OUT)


# ----------------------------------------------------------------------------
# Parameter prep (host-side): BN folding, per-tap conv layout, GRU block-diag pack.
# ----------------------------------------------------------------------------
def fold_bn_into_conv(w, b, gamma, beta, mean, var, eps=1e-5):
    """conv(BN_eval(x)) -> conv'(x).  w: torch layout (C_out, C_in, K).
    NOTE: the shift fold into the bias is exact here because default running stats
    give shift == 0; with trained stats the shift must be applied to the activation
    before zero padding instead."""
    s = gamma / jnp.sqrt(var + eps)
    t = beta - mean * s
    w_f = w * s[None, :, None]
    b_f = b + jnp.einsum("oik,i->o", w, t)
    return jnp.transpose(w_f, (2, 1, 0)).astype(jnp.float32), b_f.astype(jnp.float32)


def pack_bigru(wi_f, wh_f, bi_f, bh_f, wi_b, wh_b, bi_b, bh_b):
    """torch GRU layout (3H, H) weights / (3H,) biases, gate order [r; z; n]
    -> block-diagonal packed (3, 2H, 2H) weights and (3, 2H) biases for the
    lane-stacked [fwd | bwd] hidden state."""
    H = wi_f.shape[1]

    def blkdiag(g, wf, wb):
        m = jnp.zeros((2 * H, 2 * H), jnp.float32)
        m = m.at[:H, :H].set(wf[g * H:(g + 1) * H, :].T)
        m = m.at[H:, H:].set(wb[g * H:(g + 1) * H, :].T)
        return m

    wi_blk = jnp.stack([blkdiag(g, wi_f, wi_b) for g in range(3)])
    wh_blk = jnp.stack([blkdiag(g, wh_f, wh_b) for g in range(3)])
    bi_blk = jnp.stack([jnp.concatenate([bi_f[g * H:(g + 1) * H], bi_b[g * H:(g + 1) * H]])
                        for g in range(3)])
    bh_blk = jnp.stack([jnp.concatenate([bh_f[g * H:(g + 1) * H], bh_b[g * H:(g + 1) * H]])
                        for g in range(3)])
    return wi_blk, wh_blk, bi_blk, bh_blk


def init_params(key, input_size, hidden, output_size):
    H, Ci = hidden, max(hidden // 2, 1)
    ks = iter(jax.random.split(key, 40))

    def nrm(shape, scale=0.05):
        return (scale * jax.random.normal(next(ks), shape)).astype(jnp.float32)

    def bn_default(c):  # gamma, beta, running_mean, running_var  (torch eval defaults)
        return (jnp.ones((c,), jnp.float32), jnp.zeros((c,), jnp.float32),
                jnp.zeros((c,), jnp.float32), jnp.ones((c,), jnp.float32))

    p = {}
    # conv blocks (torch weight layout (C_out, C_in, K)), BN folded in
    for name, (cin, k) in (("conv1", (input_size, 7)), ("conv2", (H, 7)), ("conv3", (H, 3))):
        w, b = nrm((H, cin, k)), nrm((H,))
        wf, bf = fold_bn_into_conv(w, b, *bn_default(cin))
        p[name + "_w"], p[name + "_b"] = wf, bf.reshape(1, H)

    # non-local block (embedded Gaussian, 1x1 convs); fused theta|phi|g projection
    th_w, th_b = nrm((Ci, H, 1)), nrm((Ci,))
    ph_w, ph_b = nrm((Ci, H, 1)), nrm((Ci,))
    g_w, g_b = nrm((Ci, H, 1)), nrm((Ci,))
    W_w, W_b = nrm((H, Ci, 1)), nrm((H,))
    p["nl_tpg_w"] = jnp.concatenate([th_w[:, :, 0].T, ph_w[:, :, 0].T, g_w[:, :, 0].T], axis=1)
    p["nl_tpg_b"] = jnp.concatenate([th_b, ph_b, g_b]).reshape(1, 3 * Ci)
    p["nl_W_w"] = W_w[:, :, 0].T
    p["nl_W_b"] = W_b.reshape(1, H)

    # bidirectional GRU (torch layout, gate order [r; z; n])
    wi_f, wh_f, bi_f, bh_f = nrm((3 * H, H)), nrm((3 * H, H)), nrm((3 * H,)), nrm((3 * H,))
    wi_b, wh_b, bi_b, bh_b = nrm((3 * H, H)), nrm((3 * H, H)), nrm((3 * H,)), nrm((3 * H,))
    p["gru_wi"], p["gru_wh"], p["gru_bi"], p["gru_bh"] = pack_bigru(
        wi_f, wh_f, bi_f, bh_f, wi_b, wh_b, bi_b, bh_b)

    # heads (torch layout (out, in) -> stored transposed)
    fc1_w, fc1_b = nrm((H, 2 * H)), nrm((H,))
    fc2_w, fc2_b = nrm((output_size, H)), nrm((output_size,))
    p["fc1_w"], p["fc1_b"] = fc1_w.T, fc1_b.reshape(1, H)
    p["fc2_w"], p["fc2_b"] = fc2_w.T, fc2_b.reshape(1, output_size)
    p["out_scale"] = jnp.full((1, 1), 0.8, jnp.float32)   # self.weight
    return p


if __name__ == "__main__":
    B, T, C_IN, HIDDEN, OUT = 2, 128, 8, 32, 4   # T=128 -> conv stack seq lens 62/26/10
    key = jax.random.PRNGKey(0)
    k_x, k_p = jax.random.split(key)
    x = jax.random.normal(k_x, (B, T, C_IN), dtype=jnp.float32)
    params = init_params(k_p, C_IN, HIDDEN, OUT)

    fwd = jax.jit(sa_model_forward)
    out = jax.block_until_ready(fwd(x, params))
    assert out.shape == (B, OUT), out.shape
    assert bool(jnp.all(jnp.isfinite(out)))
    print("KERNEL_OK")
</pallas_src>

<mosaic_0001>
module attributes {stable_mosaic.version = 11 : i64} {
  func.func @_sa_kernel(%arg0: i32, %arg1: memref<1x128x8xf32, #tpu.memory_space<vmem>>, %arg2: memref<7x8x32xf32, #tpu.memory_space<vmem>>, %arg3: memref<1x32xf32, #tpu.memory_space<vmem>>, %arg4: memref<7x32x32xf32, #tpu.memory_space<vmem>>, %arg5: memref<1x32xf32, #tpu.memory_space<vmem>>, %arg6: memref<3x32x32xf32, #tpu.memory_space<vmem>>, %arg7: memref<1x32xf32, #tpu.memory_space<vmem>>, %arg8: memref<32x48xf32, #tpu.memory_space<vmem>>, %arg9: memref<1x48xf32, #tpu.memory_space<vmem>>, %arg10: memref<16x32xf32, #tpu.memory_space<vmem>>, %arg11: memref<1x32xf32, #tpu.memory_space<vmem>>, %arg12: memref<3x64x64xf32, #tpu.memory_space<vmem>>, %arg13: memref<3x64xf32, #tpu.memory_space<vmem>>, %arg14: memref<3x64x64xf32, #tpu.memory_space<vmem>>, %arg15: memref<3x64xf32, #tpu.memory_space<vmem>>, %arg16: memref<64x32xf32, #tpu.memory_space<vmem>>, %arg17: memref<1x32xf32, #tpu.memory_space<vmem>>, %arg18: memref<32x4xf32, #tpu.memory_space<vmem>>, %arg19: memref<1x4xf32, #tpu.memory_space<vmem>>, %arg20: memref<1x1xf32, #tpu.memory_space<vmem>>, %arg21: memref<1x1x4xf32, #tpu.memory_space<vmem>>, %arg22: memref<130x8xf32, #tpu.memory_space<vmem>>, %arg23: memref<124x32xf32, #tpu.memory_space<vmem>>, %arg24: memref<64x32xf32, #tpu.memory_space<vmem>>, %arg25: memref<52x32xf32, #tpu.memory_space<vmem>>, %arg26: memref<28x32xf32, #tpu.memory_space<vmem>>, %arg27: memref<20x32xf32, #tpu.memory_space<vmem>>) attributes {dimension_semantics = [#tpu.dimension_semantics<parallel>], iteration_bounds = array<i64: 2>, scalar_prefetch = 0 : i64, scratch_operands = 6 : i64, tpu.core_type = #tpu.core_type<tc>, window_params = [{transform_indices = @transform_0, window_bounds = array<i64: 1, 128, 8>}, {pipeline_mode = #tpu.pipeline_mode<synchronous>, transform_indices = @transform_1, window_bounds = array<i64: 7, 8, 32>}, {pipeline_mode = #tpu.pipeline_mode<synchronous>, transform_indices = @transform_2, window_bounds = array<i64: 1, 32>}, {pipeline_mode = #tpu.pipeline_mode<synchronous>, transform_indices = @transform_3, window_bounds = array<i64: 7, 32, 32>}, {pipeline_mode = #tpu.pipeline_mode<synchronous>, transform_indices = @transform_4, window_bounds = array<i64: 1, 32>}, {pipeline_mode = #tpu.pipeline_mode<synchronous>, transform_indices = @transform_5, window_bounds = array<i64: 3, 32, 32>}, {pipeline_mode = #tpu.pipeline_mode<synchronous>, transform_indices = @transform_6, window_bounds = array<i64: 1, 32>}, {pipeline_mode = #tpu.pipeline_mode<synchronous>, transform_indices = @transform_7, window_bounds = array<i64: 32, 48>}, {pipeline_mode = #tpu.pipeline_mode<synchronous>, transform_indices = @transform_8, window_bounds = array<i64: 1, 48>}, {pipeline_mode = #tpu.pipeline_mode<synchronous>, transform_indices = @transform_9, window_bounds = array<i64: 16, 32>}, {pipeline_mode = #tpu.pipeline_mode<synchronous>, transform_indices = @transform_10, window_bounds = array<i64: 1, 32>}, {pipeline_mode = #tpu.pipeline_mode<synchronous>, transform_indices = @transform_11, window_bounds = array<i64: 3, 64, 64>}, {pipeline_mode = #tpu.pipeline_mode<synchronous>, transform_indices = @transform_12, window_bounds = array<i64: 3, 64>}, {pipeline_mode = #tpu.pipeline_mode<synchronous>, transform_indices = @transform_13, window_bounds = array<i64: 3, 64, 64>}, {pipeline_mode = #tpu.pipeline_mode<synchronous>, transform_indices = @transform_14, window_bounds = array<i64: 3, 64>}, {pipeline_mode = #tpu.pipeline_mode<synchronous>, transform_indices = @transform_15, window_bounds = array<i64: 64, 32>}, {pipeline_mode = #tpu.pipeline_mode<synchronous>, transform_indices = @transform_16, window_bounds = array<i64: 1, 32>}, {pipeline_mode = #tpu.pipeline_mode<synchronous>, transform_indices = @transform_17, window_bounds = array<i64: 32, 4>}, {pipeline_mode = #tpu.pipeline_mode<synchronous>, transform_indices = @transform_18, window_bounds = array<i64: 1, 4>}, {pipeline_mode = #tpu.pipeline_mode<synchronous>, transform_indices = @transform_19, window_bounds = array<i64: 1, 1>}, {transform_indices = @transform_20, window_bounds = array<i64: 1, 1, 4>}]} {
    %c0 = arith.constant 0 : index
    %c0_0 = arith.constant 0 : index
    %c0_1 = arith.constant 0 : index
    %0 = vector.load %arg1[%c0, %c0_0, %c0_1] : memref<1x128x8xf32, #tpu.memory_space<vmem>>, vector<1x128x8xf32>
    %1 = vector.shape_cast %0 : vector<1x128x8xf32> to vector<128x8xf32>
    %cst = arith.constant 0.000000e+00 : f32
    %2 = vector.broadcast %cst : f32 to vector<1x8xf32>
    %c0_2 = arith.constant 0 : index
    %c0_3 = arith.constant 0 : index
    %3 = vector.load %arg22[%c0_2, %c0_3] : memref<130x8xf32, #tpu.memory_space<vmem>>, vector<1x8xf32>
    tpu.vector_store %arg22[%c0_2, %c0_3], %2 {strides = array<i32>} : memref<130x8xf32, #tpu.memory_space<vmem>>, vector<1x8xf32>,
    %c129 = arith.constant 129 : index
    %c0_4 = arith.constant 0 : index
    %4 = vector.load %arg22[%c129, %c0_4] : memref<130x8xf32, #tpu.memory_space<vmem>>, vector<1x8xf32>
    tpu.vector_store %arg22[%c129, %c0_4], %2 {strides = array<i32>} : memref<130x8xf32, #tpu.memory_space<vmem>>, vector<1x8xf32>,
    %c1 = arith.constant 1 : index
    %c0_5 = arith.constant 0 : index
    %5 = vector.load %arg22[%c1, %c0_5] : memref<130x8xf32, #tpu.memory_space<vmem>>, vector<128x8xf32>
    tpu.vector_store %arg22[%c1, %c0_5], %1 {strides = array<i32>} : memref<130x8xf32, #tpu.memory_space<vmem>>, vector<128x8xf32>,
    %c0_6 = arith.constant 0 : index
    %c0_7 = arith.constant 0 : index
    %6 = vector.load %arg22[%c0_6, %c0_7] : memref<130x8xf32, #tpu.memory_space<vmem>>, vector<124x8xf32>
    %c0_8 = arith.constant 0 : index
    %c0_9 = arith.constant 0 : index
    %c0_10 = arith.constant 0 : index
    %7 = vector.load %arg2[%c0_8, %c0_9, %c0_10] : memref<7x8x32xf32, #tpu.memory_space<vmem>>, vector<1x8x32xf32>
    %8 = vector.shape_cast %7 : vector<1x8x32xf32> to vector<8x32xf32>
    %cst_11 = arith.constant dense<0.000000e+00> : vector<124x32xf32>
    %9 = tpu.matmul %6, %8, %cst_11 {dimension_numbers = #tpu.dot_dimension_numbers<[1], [0], [0], [1], [0, 0, 1, 1], [], []>} : vector<124x8xf32>, vector<8x32xf32>, vector<124x32xf32> -> vector<124x32xf32>
    %c1_12 = arith.constant 1 : index
    %c0_13 = arith.constant 0 : index
    %10 = vector.load %arg22[%c1_12, %c0_13] : memref<130x8xf32, #tpu.memory_space<vmem>>, vector<124x8xf32>
    %c1_14 = arith.constant 1 : index
    %c0_15 = arith.constant 0 : index
    %c0_16 = arith.constant 0 : index
    %11 = vector.load %arg2[%c1_14, %c0_15, %c0_16] : memref<7x8x32xf32, #tpu.memory_space<vmem>>, vector<1x8x32xf32>
    %12 = vector.shape_cast %11 : vector<1x8x32xf32> to vector<8x32xf32>
    %cst_17 = arith.constant dense<0.000000e+00> : vector<124x32xf32>
    %13 = tpu.matmul %10, %12, %cst_17 {dimension_numbers = #tpu.dot_dimension_numbers<[1], [0], [0], [1], [0, 0, 1, 1], [], []>} : vector<124x8xf32>, vector<8x32xf32>, vector<124x32xf32> -> vector<124x32xf32>
    %14 = arith.addf %9, %13 : vector<124x32xf32>
    %c2 = arith.constant 2 : index
    %c0_18 = arith.constant 0 : index
    %15 = vector.load %arg22[%c2, %c0_18] : memref<130x8xf32, #tpu.memory_space<vmem>>, vector<124x8xf32>
    %c2_19 = arith.constant 2 : index
    %c0_20 = arith.constant 0 : index
    %c0_21 = arith.constant 0 : index
    %16 = vector.load %arg2[%c2_19, %c0_20, %c0_21] : memref<7x8x32xf32, #tpu.memory_space<vmem>>, vector<1x8x32xf32>
    %17 = vector.shape_cast %16 : vector<1x8x32xf32> to vector<8x32xf32>
    %cst_22 = arith.constant dense<0.000000e+00> : vector<124x32xf32>
    %18 = tpu.matmul %15, %17, %cst_22 {dimension_numbers = #tpu.dot_dimension_numbers<[1], [0], [0], [1], [0, 0, 1, 1], [], []>} : vector<124x8xf32>, vector<8x32xf32>, vector<124x32xf32> -> vector<124x32xf32>
    %19 = arith.addf %14, %18 : vector<124x32xf32>
    %c3 = arith.constant 3 : index
    %c0_23 = arith.constant 0 : index
    %20 = vector.load %arg22[%c3, %c0_23] : memref<130x8xf32, #tpu.memory_space<vmem>>, vector<124x8xf32>
    %c3_24 = arith.constant 3 : index
    %c0_25 = arith.constant 0 : index
    %c0_26 = arith.constant 0 : index
    %21 = vector.load %arg2[%c3_24, %c0_25, %c0_26] : memref<7x8x32xf32, #tpu.memory_space<vmem>>, vector<1x8x32xf32>
    %22 = vector.shape_cast %21 : vector<1x8x32xf32> to vector<8x32xf32>
    %cst_27 = arith.constant dense<0.000000e+00> : vector<124x32xf32>
    %23 = tpu.matmul %20, %22, %cst_27 {dimension_numbers = #tpu.dot_dimension_numbers<[1], [0], [0], [1], [0, 0, 1, 1], [], []>} : vector<124x8xf32>, vector<8x32xf32>, vector<124x32xf32> -> vector<124x32xf32>
    %24 = arith.addf %19, %23 : vector<124x32xf32>
    %c4 = arith.constant 4 : index
    %c0_28 = arith.constant 0 : index
    %25 = vector.load %arg22[%c4, %c0_28] : memref<130x8xf32, #tpu.memory_space<vmem>>, vector<124x8xf32>
    %c4_29 = arith.constant 4 : index
    %c0_30 = arith.constant 0 : index
    %c0_31 = arith.constant 0 : index
    %26 = vector.load %arg2[%c4_29, %c0_30, %c0_31] : memref<7x8x32xf32, #tpu.memory_space<vmem>>, vector<1x8x32xf32>
    %27 = vector.shape_cast %26 : vector<1x8x32xf32> to vector<8x32xf32>
    %cst_32 = arith.constant dense<0.000000e+00> : vector<124x32xf32>
    %28 = tpu.matmul %25, %27, %cst_32 {dimension_numbers = #tpu.dot_dimension_numbers<[1], [0], [0], [1], [0, 0, 1, 1], [], []>} : vector<124x8xf32>, vector<8x32xf32>, vector<124x32xf32> -> vector<124x32xf32>
    %29 = arith.addf %24, %28 : vector<124x32xf32>
    %c5 = arith.constant 5 : index
    %c0_33 = arith.constant 0 : index
    %30 = vector.load %arg22[%c5, %c0_33] : memref<130x8xf32, #tpu.memory_space<vmem>>, vector<124x8xf32>
    %c5_34 = arith.constant 5 : index
    %c0_35 = arith.constant 0 : index
    %c0_36 = arith.constant 0 : index
    %31 = vector.load %arg2[%c5_34, %c0_35, %c0_36] : memref<7x8x32xf32, #tpu.memory_space<vmem>>, vector<1x8x32xf32>
    %32 = vector.shape_cast %31 : vector<1x8x32xf32> to vector<8x32xf32>
    %cst_37 = arith.constant dense<0.000000e+00> : vector<124x32xf32>
    %33 = tpu.matmul %30, %32, %cst_37 {dimension_numbers = #tpu.dot_dimension_numbers<[1], [0], [0], [1], [0, 0, 1, 1], [], []>} : vector<124x8xf32>, vector<8x32xf32>, vector<124x32xf32> -> vector<124x32xf32>
    %34 = arith.addf %29, %33 : vector<124x32xf32>
    %c6 = arith.constant 6 : index
    %c0_38 = arith.constant 0 : index
    %35 = vector.load %arg22[%c6, %c0_38] : memref<130x8xf32, #tpu.memory_space<vmem>>, vector<124x8xf32>
    %c6_39 = arith.constant 6 : index
    %c0_40 = arith.constant 0 : index
    %c0_41 = arith.constant 0 : index
    %36 = vector.load %arg2[%c6_39, %c0_40, %c0_41] : memref<7x8x32xf32, #tpu.memory_space<vmem>>, vector<1x8x32xf32>
    %37 = vector.shape_cast %36 : vector<1x8x32xf32> to vector<8x32xf32>
    %cst_42 = arith.constant dense<0.000000e+00> : vector<124x32xf32>
    %38 = tpu.matmul %35, %37, %cst_42 {dimension_numbers = #tpu.dot_dimension_numbers<[1], [0], [0], [1], [0, 0, 1, 1], [], []>} : vector<124x8xf32>, vector<8x32xf32>, vector<124x32xf32> -> vector<124x32xf32>
    %39 = arith.addf %34, %38 : vector<124x32xf32>
    %c0_43 = arith.constant 0 : index
    %c0_44 = arith.constant 0 : index
    %40 = vector.load %arg3[%c0_43, %c0_44] : memref<1x32xf32, #tpu.memory_space<vmem>>, vector<1x32xf32>
    %41 = vector.broadcast %40 : vector<1x32xf32> to vector<124x32xf32>
    %42 = arith.addf %39, %41 : vector<124x32xf32>
    %cst_45 = arith.constant 0.000000e+00 : f32
    %43 = vector.broadcast %cst_45 : f32 to vector<124x32xf32>
    %44 = arith.maximumf %42, %43 : vector<124x32xf32>
    %c0_46 = arith.constant 0 : index
    %c0_47 = arith.constant 0 : index
    %45 = vector.load %arg23[%c0_46, %c0_47] : memref<124x32xf32, #tpu.memory_space<vmem>>, vector<124x32xf32>
    tpu.vector_store %arg23[%c0_46, %c0_47], %44 {strides = array<i32>} : memref<124x32xf32, #tpu.memory_space<vmem>>, vector<124x32xf32>,
    %c0_48 = arith.constant 0 : index
    %c0_49 = arith.constant 0 : index
    %46 = tpu.strided_load %arg23[%c0_48, %c0_49] {strides = array<i32: 2, 1>} : memref<124x32xf32, #tpu.memory_space<vmem>>, vector<62x32xf32>
    %c1_50 = arith.constant 1 : index
    %c0_51 = arith.constant 0 : index
    %47 = tpu.strided_load %arg23[%c1_50, %c0_51] {strides = array<i32: 2, 1>} : memref<124x32xf32, #tpu.memory_space<vmem>>, vector<62x32xf32>
    %48 = arith.maximumf %46, %47 : vector<62x32xf32>
    %cst_52 = arith.constant 0.000000e+00 : f32
    %49 = vector.broadcast %cst_52 : f32 to vector<1x32xf32>
    %c0_53 = arith.constant 0 : index
    %c0_54 = arith.constant 0 : index
    %50 = vector.load %arg24[%c0_53, %c0_54] : memref<64x32xf32, #tpu.memory_space<vmem>>, vector<1x32xf32>
    tpu.vector_store %arg24[%c0_53, %c0_54], %49 {strides = array<i32>} : memref<64x32xf32, #tpu.memory_space<vmem>>, vector<1x32xf32>,
    %c63 = arith.constant 63 : index
    %c0_55 = arith.constant 0 : index
    %51 = vector.load %arg24[%c63, %c0_55] : memref<64x32xf32, #tpu.memory_space<vmem>>, vector<1x32xf32>
    tpu.vector_store %arg24[%c63, %c0_55], %49 {strides = array<i32>} : memref<64x32xf32, #tpu.memory_space<vmem>>, vector<1x32xf32>,
    %c1_56 = arith.constant 1 : index
    %c0_57 = arith.constant 0 : index
    %52 = vector.load %arg24[%c1_56, %c0_57] : memref<64x32xf32, #tpu.memory_space<vmem>>, vector<62x32xf32>
    tpu.vector_store %arg24[%c1_56, %c0_57], %48 {strides = array<i32>} : memref<64x32xf32, #tpu.memory_space<vmem>>, vector<62x32xf32>,
    %c0_58 = arith.constant 0 : index
    %c0_59 = arith.constant 0 : index
    %53 = vector.load %arg24[%c0_58, %c0_59] : memref<64x32xf32, #tpu.memory_space<vmem>>, vector<52x32xf32>
    %c0_60 = arith.constant 0 : index
    %c0_61 = arith.constant 0 : index
    %c0_62 = arith.constant 0 : index
    %54 = vector.load %arg4[%c0_60, %c0_61, %c0_62] : memref<7x32x32xf32, #tpu.memory_space<vmem>>, vector<1x32x32xf32>
    %55 = vector.shape_cast %54 : vector<1x32x32xf32> to vector<32x32xf32>
    %cst_63 = arith.constant dense<0.000000e+00> : vector<52x32xf32>
    %56 = tpu.matmul %53, %55, %cst_63 {dimension_numbers = #tpu.dot_dimension_numbers<[1], [0], [0], [1], [0, 0, 1, 1], [], []>} : vector<52x32xf32>, vector<32x32xf32>, vector<52x32xf32> -> vector<52x32xf32>
    %c2_64 = arith.constant 2 : index
    %c0_65 = arith.constant 0 : index
    %57 = vector.load %arg24[%c2_64, %c0_65] : memref<64x32xf32, #tpu.memory_space<vmem>>, vector<52x32xf32>
    %c1_66 = arith.constant 1 : index
    %c0_67 = arith.constant 0 : index
    %c0_68 = arith.constant 0 : index
    %58 = vector.load %arg4[%c1_66, %c0_67, %c0_68] : memref<7x32x32xf32, #tpu.memory_space<vmem>>, vector<1x32x32xf32>
    %59 = vector.shape_cast %58 : vector<1x32x32xf32> to vector<32x32xf32>
    %cst_69 = arith.constant dense<0.000000e+00> : vector<52x32xf32>
    %60 = tpu.matmul %57, %59, %cst_69 {dimension_numbers = #tpu.dot_dimension_numbers<[1], [0], [0], [1], [0, 0, 1, 1], [], []>} : vector<52x32xf32>, vector<32x32xf32>, vector<52x32xf32> -> vector<52x32xf32>
    %61 = arith.addf %56, %60 : vector<52x32xf32>
    %c4_70 = arith.constant 4 : index
    %c0_71 = arith.constant 0 : index
    %62 = vector.load %arg24[%c4_70, %c0_71] : memref<64x32xf32, #tpu.memory_space<vmem>>, vector<52x32xf32>
    %c2_72 = arith.constant 2 : index
    %c0_73 = arith.constant 0 : index
    %c0_74 = arith.constant 0 : index
    %63 = vector.load %arg4[%c2_72, %c0_73, %c0_74] : memref<7x32x32xf32, #tpu.memory_space<vmem>>, vector<1x32x32xf32>
    %64 = vector.shape_cast %63 : vector<1x32x32xf32> to vector<32x32xf32>
    %cst_75 = arith.constant dense<0.000000e+00> : vector<52x32xf32>
    %65 = tpu.matmul %62, %64, %cst_75 {dimension_numbers = #tpu.dot_dimension_numbers<[1], [0], [0], [1], [0, 0, 1, 1], [], []>} : vector<52x32xf32>, vector<32x32xf32>, vector<52x32xf32> -> vector<52x32xf32>
    %66 = arith.addf %61, %65 : vector<52x32xf32>
    %c6_76 = arith.constant 6 : index
    %c0_77 = arith.constant 0 : index
    %67 = vector.load %arg24[%c6_76, %c0_77] : memref<64x32xf32, #tpu.memory_space<vmem>>, vector<52x32xf32>
    %c3_78 = arith.constant 3 : index
    %c0_79 = arith.constant 0 : index
    %c0_80 = arith.constant 0 : index
    %68 = vector.load %arg4[%c3_78, %c0_79, %c0_80] : memref<7x32x32xf32, #tpu.memory_space<vmem>>, vector<1x32x32xf32>
    %69 = vector.shape_cast %68 : vector<1x32x32xf32> to vector<32x32xf32>
    %cst_81 = arith.constant dense<0.000000e+00> : vector<52x32xf32>
    %70 = tpu.matmul %67, %69, %cst_81 {dimension_numbers = #tpu.dot_dimension_numbers<[1], [0], [0], [1], [0, 0, 1, 1], [], []>} : vector<52x32xf32>, vector<32x32xf32>, vector<52x32xf32> -> vector<52x32xf32>
    %71 = arith.addf %66, %70 : vector<52x32xf32>
    %c8 = arith.constant 8 : index
    %c0_82 = arith.constant 0 : index
    %72 = vector.load %arg24[%c8, %c0_82] : memref<64x32xf32, #tpu.memory_space<vmem>>, vector<52x32xf32>
    %c4_83 = arith.constant 4 : index
    %c0_84 = arith.constant 0 : index
    %c0_85 = arith.constant 0 : index
    %73 = vector.load %arg4[%c4_83, %c0_84, %c0_85] : memref<7x32x32xf32, #tpu.memory_space<vmem>>, vector<1x32x32xf32>
    %74 = vector.shape_cast %73 : vector<1x32x32xf32> to vector<32x32xf32>
    %cst_86 = arith.constant dense<0.000000e+00> : vector<52x32xf32>
    %75 = tpu.matmul %72, %74, %cst_86 {dimension_numbers = #tpu.dot_dimension_numbers<[1], [0], [0], [1], [0, 0, 1, 1], [], []>} : vector<52x32xf32>, vector<32x32xf32>, vector<52x32xf32> -> vector<52x32xf32>
    %76 = arith.addf %71, %75 : vector<52x32xf32>
    %c10 = arith.constant 10 : index
    %c0_87 = arith.constant 0 : index
    %77 = vector.load %arg24[%c10, %c0_87] : memref<64x32xf32, #tpu.memory_space<vmem>>, vector<52x32xf32>
    %c5_88 = arith.constant 5 : index
    %c0_89 = arith.constant 0 : index
    %c0_90 = arith.constant 0 : index
    %78 = vector.load %arg4[%c5_88, %c0_89, %c0_90] : memref<7x32x32xf32, #tpu.memory_space<vmem>>, vector<1x32x32xf32>
    %79 = vector.shape_cast %78 : vector<1x32x32xf32> to vector<32x32xf32>
    %cst_91 = arith.constant dense<0.000000e+00> : vector<52x32xf32>
    %80 = tpu.matmul %77, %79, %cst_91 {dimension_numbers = #tpu.dot_dimension_numbers<[1], [0], [0], [1], [0, 0, 1, 1], [], []>} : vector<52x32xf32>, vector<32x32xf32>, vector<52x32xf32> -> vector<52x32xf32>
    %81 = arith.addf %76, %80 : vector<52x32xf32>
    %c12 = arith.constant 12 : index
    %c0_92 = arith.constant 0 : index
    %82 = vector.load %arg24[%c12, %c0_92] : memref<64x32xf32, #tpu.memory_space<vmem>>, vector<52x32xf32>
    %c6_93 = arith.constant 6 : index
    %c0_94 = arith.constant 0 : index
    %c0_95 = arith.constant 0 : index
    %83 = vector.load %arg4[%c6_93, %c0_94, %c0_95] : memref<7x32x32xf32, #tpu.memory_space<vmem>>, vector<1x32x32xf32>
    %84 = vector.shape_cast %83 : vector<1x32x32xf32> to vector<32x32xf32>
    %cst_96 = arith.constant dense<0.000000e+00> : vector<52x32xf32>
    %85 = tpu.matmul %82, %84, %cst_96 {dimension_numbers = #tpu.dot_dimension_numbers<[1], [0], [0], [1], [0, 0, 1, 1], [], []>} : vector<52x32xf32>, vector<32x32xf32>, vector<52x32xf32> -> vector<52x32xf32>
    %86 = arith.addf %81, %85 : vector<52x32xf32>
    %c0_97 = arith.constant 0 : index
    %c0_98 = arith.constant 0 : index
    %87 = vector.load %arg5[%c0_97, %c0_98] : memref<1x32xf32, #tpu.memory_space<vmem>>, vector<1x32xf32>
    %88 = vector.broadcast %87 : vector<1x32xf32> to vector<52x32xf32>
    %89 = arith.addf %86, %88 : vector<52x32xf32>
    %cst_99 = arith.constant 0.000000e+00 : f32
    %90 = vector.broadcast %cst_99 : f32 to vector<52x32xf32>
    %91 = arith.maximumf %89, %90 : vector<52x32xf32>
    %c0_100 = arith.constant 0 : index
    %c0_101 = arith.constant 0 : index
    %92 = vector.load %arg25[%c0_100, %c0_101] : memref<52x32xf32, #tpu.memory_space<vmem>>, vector<52x32xf32>
    tpu.vector_store %arg25[%c0_100, %c0_101], %91 {strides = array<i32>} : memref<52x32xf32, #tpu.memory_space<vmem>>, vector<52x32xf32>,
    %c0_102 = arith.constant 0 : index
    %c0_103 = arith.constant 0 : index
    %93 = tpu.strided_load %arg25[%c0_102, %c0_103] {strides = array<i32: 2, 1>} : memref<52x32xf32, #tpu.memory_space<vmem>>, vector<26x32xf32>
    %c1_104 = arith.constant 1 : index
    %c0_105 = arith.constant 0 : index
    %94 = tpu.strided_load %arg25[%c1_104, %c0_105] {strides = array<i32: 2, 1>} : memref<52x32xf32, #tpu.memory_space<vmem>>, vector<26x32xf32>
    %95 = arith.maximumf %93, %94 : vector<26x32xf32>
    %cst_106 = arith.constant 0.000000e+00 : f32
    %96 = vector.broadcast %cst_106 : f32 to vector<1x32xf32>
    %c0_107 = arith.constant 0 : index
    %c0_108 = arith.constant 0 : index
    %97 = vector.load %arg26[%c0_107, %c0_108] : memref<28x32xf32, #tpu.memory_space<vmem>>, vector<1x32xf32>
    tpu.vector_store %arg26[%c0_107, %c0_108], %96 {strides = array<i32>} : memref<28x32xf32, #tpu.memory_space<vmem>>, vector<1x32xf32>,
    %c27 = arith.constant 27 : index
    %c0_109 = arith.constant 0 : index
    %98 = vector.load %arg26[%c27, %c0_109] : memref<28x32xf32, #tpu.memory_space<vmem>>, vector<1x32xf32>
    tpu.vector_store %arg26[%c27, %c0_109], %96 {strides = array<i32>} : memref<28x32xf32, #tpu.memory_space<vmem>>, vector<1x32xf32>,
    %c1_110 = arith.constant 1 : index
    %c0_111 = arith.constant 0 : index
    %99 = vector.load %arg26[%c1_110, %c0_111] : memref<28x32xf32, #tpu.memory_space<vmem>>, vector<26x32xf32>
    tpu.vector_store %arg26[%c1_110, %c0_111], %95 {strides = array<i32>} : memref<28x32xf32, #tpu.memory_space<vmem>>, vector<26x32xf32>,
    %c0_112 = arith.constant 0 : index
    %c0_113 = arith.constant 0 : index
    %100 = vector.load %arg26[%c0_112, %c0_113] : memref<28x32xf32, #tpu.memory_space<vmem>>, vector<20x32xf32>
    %c0_114 = arith.constant 0 : index
    %c0_115 = arith.constant 0 : index
    %c0_116 = arith.constant 0 : index
    %101 = vector.load %arg6[%c0_114, %c0_115, %c0_116] : memref<3x32x32xf32, #tpu.memory_space<vmem>>, vector<1x32x32xf32>
    %102 = vector.shape_cast %101 : vector<1x32x32xf32> to vector<32x32xf32>
    %cst_117 = arith.constant dense<0.000000e+00> : vector<20x32xf32>
    %103 = tpu.matmul %100, %102, %cst_117 {dimension_numbers = #tpu.dot_dimension_numbers<[1], [0], [0], [1], [0, 0, 1, 1], [], []>} : vector<20x32xf32>, vector<32x32xf32>, vector<20x32xf32> -> vector<20x32xf32>
    %c4_118 = arith.constant 4 : index
    %c0_119 = arith.constant 0 : index
    %104 = vector.load %arg26[%c4_118, %c0_119] : memref<28x32xf32, #tpu.memory_space<vmem>>, vector<20x32xf32>
    %c1_120 = arith.constant 1 : index
    %c0_121 = arith.constant 0 : index
    %c0_122 = arith.constant 0 : index
    %105 = vector.load %arg6[%c1_120, %c0_121, %c0_122] : memref<3x32x32xf32, #tpu.memory_space<vmem>>, vector<1x32x32xf32>
    %106 = vector.shape_cast %105 : vector<1x32x32xf32> to vector<32x32xf32>
    %cst_123 = arith.constant dense<0.000000e+00> : vector<20x32xf32>
    %107 = tpu.matmul %104, %106, %cst_123 {dimension_numbers = #tpu.dot_dimension_numbers<[1], [0], [0], [1], [0, 0, 1, 1], [], []>} : vector<20x32xf32>, vector<32x32xf32>, vector<20x32xf32> -> vector<20x32xf32>
    %108 = arith.addf %103, %107 : vector<20x32xf32>
    %c8_124 = arith.constant 8 : index
    %c0_125 = arith.constant 0 : index
    %109 = vector.load %arg26[%c8_124, %c0_125] : memref<28x32xf32, #tpu.memory_space<vmem>>, vector<20x32xf32>
    %c2_126 = arith.constant 2 : index
    %c0_127 = arith.constant 0 : index
    %c0_128 = arith.constant 0 : index
    %110 = vector.load %arg6[%c2_126, %c0_127, %c0_128] : memref<3x32x32xf32, #tpu.memory_space<vmem>>, vector<1x32x32xf32>
    %111 = vector.shape_cast %110 : vector<1x32x32xf32> to vector<32x32xf32>
    %cst_129 = arith.constant dense<0.000000e+00> : vector<20x32xf32>
    %112 = tpu.matmul %109, %111, %cst_129 {dimension_numbers = #tpu.dot_dimension_numbers<[1], [0], [0], [1], [0, 0, 1, 1], [], []>} : vector<20x32xf32>, vector<32x32xf32>, vector<20x32xf32> -> vector<20x32xf32>
    %113 = arith.addf %108, %112 : vector<20x32xf32>
    %c0_130 = arith.constant 0 : index
    %c0_131 = arith.constant 0 : index
    %114 = vector.load %arg7[%c0_130, %c0_131] : memref<1x32xf32, #tpu.memory_space<vmem>>, vector<1x32xf32>
    %115 = vector.broadcast %114 : vector<1x32xf32> to vector<20x32xf32>
    %116 = arith.addf %113, %115 : vector<20x32xf32>
    %cst_132 = arith.constant 0.000000e+00 : f32
    %117 = vector.broadcast %cst_132 : f32 to vector<20x32xf32>
    %118 = arith.maximumf %116, %117 : vector<20x32xf32>
    %c0_133 = arith.constant 0 : index
    %c0_134 = arith.constant 0 : index
    %119 = vector.load %arg27[%c0_133, %c0_134] : memref<20x32xf32, #tpu.memory_space<vmem>>, vector<20x32xf32>
    tpu.vector_store %arg27[%c0_133, %c0_134], %118 {strides = array<i32>} : memref<20x32xf32, #tpu.memory_space<vmem>>, vector<20x32xf32>,
    %c0_135 = arith.constant 0 : index
    %c0_136 = arith.constant 0 : index
    %120 = tpu.strided_load %arg27[%c0_135, %c0_136] {strides = array<i32: 2, 1>} : memref<20x32xf32, #tpu.memory_space<vmem>>, vector<10x32xf32>
    %c1_137 = arith.constant 1 : index
    %c0_138 = arith.constant 0 : index
    %121 = tpu.strided_load %arg27[%c1_137, %c0_138] {strides = array<i32: 2, 1>} : memref<20x32xf32, #tpu.memory_space<vmem>>, vector<10x32xf32>
    %122 = arith.maximumf %120, %121 : vector<10x32xf32>
    %c0_139 = arith.constant 0 : index
    %c0_140 = arith.constant 0 : index
    %123 = vector.load %arg8[%c0_139, %c0_140] : memref<32x48xf32, #tpu.memory_space<vmem>>, vector<32x48xf32>
    %cst_141 = arith.constant dense<0.000000e+00> : vector<10x48xf32>
    %124 = tpu.matmul %122, %123, %cst_141 {dimension_numbers = #tpu.dot_dimension_numbers<[1], [0], [0], [1], [0, 0, 1, 1], [], []>} : vector<10x32xf32>, vector<32x48xf32>, vector<10x48xf32> -> vector<10x48xf32>
    %c0_142 = arith.constant 0 : index
    %c0_143 = arith.constant 0 : index
    %125 = vector.load %arg9[%c0_142, %c0_143] : memref<1x48xf32, #tpu.memory_space<vmem>>, vector<1x48xf32>
    %126 = vector.broadcast %125 : vector<1x48xf32> to vector<10x48xf32>
    %127 = arith.addf %124, %126 : vector<10x48xf32>
    %128 = vector.extract_strided_slice %127 {offsets = [0, 0], sizes = [10, 16], strides = [1, 1]} : vector<10x48xf32> to vector<10x16xf32>
    %129 = vector.extract_strided_slice %127 {offsets = [0, 16], sizes = [10, 16], strides = [1, 1]} : vector<10x48xf32> to vector<10x16xf32>
    %130 = vector.extract_strided_slice %127 {offsets = [0, 32], sizes = [10, 16], strides = [1, 1]} : vector<10x48xf32> to vector<10x16xf32>
    "tpu.trace_start"() <{level = 10 : i32, message = "ld,md->lm"}> : () -> ()
    %cst_144 = arith.constant dense<0.000000e+00> : vector<10x10xf32>
    %131 = tpu.matmul %128, %129, %cst_144 {dimension_numbers = #tpu.dot_dimension_numbers<[1], [1], [0], [0], [0, 0, 1, 0], [], []>} : vector<10x16xf32>, vector<10x16xf32>, vector<10x10xf32> -> vector<10x10xf32>
    "tpu.trace_stop"() : () -> ()
    %cst_145 = arith.constant dense<0xFF800000> : vector<10xf32>
    %132 = vector.multi_reduction <maximumf>, %131, %cst_145 [1] : vector<10x10xf32> to vector<10xf32>
    %133 = vector.shape_cast %132 : vector<10xf32> to vector<10x1xf32>
    %134 = vector.broadcast %133 : vector<10x1xf32> to vector<10x10xf32>
    %135 = arith.subf %131, %134 : vector<10x10xf32>
    %136 = math.exp %135 : vector<10x10xf32>
    %cst_146 = arith.constant dense<0.000000e+00> : vector<10xf32>
    %137 = vector.multi_reduction <add>, %136, %cst_146 [1] : vector<10x10xf32> to vector<10xf32>
    %138 = vector.shape_cast %137 : vector<10xf32> to vector<10x1xf32>
    %139 = tpu.reciprocal %138 {approx = true} : vector<10x1xf32> -> vector<10x1xf32>
    %140 = vector.broadcast %139 : vector<10x1xf32> to vector<10x10xf32>
    %141 = arith.mulf %136, %140 : vector<10x10xf32>
    %cst_147 = arith.constant dense<0.000000e+00> : vector<10x16xf32>
    %142 = tpu.matmul %141, %130, %cst_147 {dimension_numbers = #tpu.dot_dimension_numbers<[1], [0], [0], [1], [0, 0, 1, 1], [], []>} : vector<10x10xf32>, vector<10x16xf32>, vector<10x16xf32> -> vector<10x16xf32>
    %c0_148 = arith.constant 0 : index
    %c0_149 = arith.constant 0 : index
    %143 = vector.load %arg10[%c0_148, %c0_149] : memref<16x32xf32, #tpu.memory_space<vmem>>, vector<16x32xf32>
    %cst_150 = arith.constant dense<0.000000e+00> : vector<10x32xf32>
    %144 = tpu.matmul %142, %143, %cst_150 {dimension_numbers = #tpu.dot_dimension_numbers<[1], [0], [0], [1], [0, 0, 1, 1], [], []>} : vector<10x16xf32>, vector<16x32xf32>, vector<10x32xf32> -> vector<10x32xf32>
    %c0_151 = arith.constant 0 : index
    %c0_152 = arith.constant 0 : index
    %145 = vector.load %arg11[%c0_151, %c0_152] : memref<1x32xf32, #tpu.memory_space<vmem>>, vector<1x32xf32>
    %146 = vector.broadcast %145 : vector<1x32xf32> to vector<10x32xf32>
    %147 = arith.addf %144, %146 : vector<10x32xf32>
    %148 = arith.addf %147, %122 : vector<10x32xf32>
    %149 = tpu.iota {dimensions = array<i32: 0>} : vector<10x10xi32>
    %150 = tpu.iota {dimensions = array<i32: 1>} : vector<10x10xi32>
    %151 = arith.addi %149, %150 : vector<10x10xi32>
    %c9_i32 = arith.constant 9 : i32
    %152 = vector.broadcast %c9_i32 : i32 to vector<10x10xi32>
    %153 = arith.cmpi eq, %151, %152 : vector<10x10xi32>
    %154 = arith.extui %153 : vector<10x10xi1> to vector<10x10xi32>
    %155 = arith.sitofp %154 : vector<10x10xi32> to vector<10x10xf32>
    %cst_153 = arith.constant dense<0.000000e+00> : vector<10x32xf32>
    %156 = tpu.matmul %155, %148, %cst_153 {dimension_numbers = #tpu.dot_dimension_numbers<[1], [0], [0], [1], [0, 0, 1, 1], [], []>} : vector<10x10xf32>, vector<10x32xf32>, vector<10x32xf32> -> vector<10x32xf32>
    %157 = tpu.concatenate %148, %156 in 1 : vector<10x32xf32>, vector<10x32xf32> -> vector<10x64xf32>
    %c0_154 = arith.constant 0 : index
    %c0_155 = arith.constant 0 : index
    %c0_156 = arith.constant 0 : index
    %158 = vector.load %arg14[%c0_154, %c0_155, %c0_156] : memref<3x64x64xf32, #tpu.memory_space<vmem>>, vector<1x64x64xf32>
    %159 = vector.shape_cast %158 : vector<1x64x64xf32> to vector<64x64xf32>
    %c1_157 = arith.constant 1 : index
    %c0_158 = arith.constant 0 : index
    %c0_159 = arith.constant 0 : index
    %160 = vector.load %arg14[%c1_157, %c0_158, %c0_159] : memref<3x64x64xf32, #tpu.memory_space<vmem>>, vector<1x64x64xf32>
    %161 = vector.shape_cast %160 : vector<1x64x64xf32> to vector<64x64xf32>
    %c2_160 = arith.constant 2 : index
    %c0_161 = arith.constant 0 : index
    %c0_162 = arith.constant 0 : index
    %162 = vector.load %arg14[%c2_160, %c0_161, %c0_162] : memref<3x64x64xf32, #tpu.memory_space<vmem>>, vector<1x64x64xf32>
    %163 = vector.shape_cast %162 : vector<1x64x64xf32> to vector<64x64xf32>
    %c0_163 = arith.constant 0 : index
    %c0_164 = arith.constant 0 : index
    %164 = vector.load %arg15[%c0_163, %c0_164] : memref<3x64xf32, #tpu.memory_space<vmem>>, vector<1x64xf32>
    %c1_165 = arith.constant 1 : index
    %c0_166 = arith.constant 0 : index
    %165 = vector.load %arg15[%c1_165, %c0_166] : memref<3x64xf32, #tpu.memory_space<vmem>>, vector<1x64xf32>
    %c2_167 = arith.constant 2 : index
    %c0_168 = arith.constant 0 : index
    %166 = vector.load %arg15[%c2_167, %c0_168] : memref<3x64xf32, #tpu.memory_space<vmem>>, vector<1x64xf32>
    %c0_169 = arith.constant 0 : index
    %c0_170 = arith.constant 0 : index
    %c0_171 = arith.constant 0 : index
    %167 = vector.load %arg12[%c0_169, %c0_170, %c0_171] : memref<3x64x64xf32, #tpu.memory_space<vmem>>, vector<1x64x64xf32>
    %168 = vector.shape_cast %167 : vector<1x64x64xf32> to vector<64x64xf32>
    %cst_172 = arith.constant dense<0.000000e+00> : vector<10x64xf32>
    %169 = tpu.matmul %157, %168, %cst_172 {dimension_numbers = #tpu.dot_dimension_numbers<[1], [0], [0], [1], [0, 0, 1, 1], [], []>} : vector<10x64xf32>, vector<64x64xf32>, vector<10x64xf32> -> vector<10x64xf32>
    %c0_173 = arith.constant 0 : index
    %c0_174 = arith.constant 0 : index
    %170 = vector.load %arg13[%c0_173, %c0_174] : memref<3x64xf32, #tpu.memory_space<vmem>>, vector<1x64xf32>
    %171 = vector.broadcast %170 : vector<1x64xf32> to vector<10x64xf32>
    %172 = arith.addf %169, %171 : vector<10x64xf32>
    %c1_175 = arith.constant 1 : index
    %c0_176 = arith.constant 0 : index
    %c0_177 = arith.constant 0 : index
    %173 = vector.load %arg12[%c1_175, %c0_176, %c0_177] : memref<3x64x64xf32, #tpu.memory_space<vmem>>, vector<1x64x64xf32>
    %174 = vector.shape_cast %173 : vector<1x64x64xf32> to vector<64x64xf32>
    %cst_178 = arith.constant dense<0.000000e+00> : vector<10x64xf32>
    %175 = tpu.matmul %157, %174, %cst_178 {dimension_numbers = #tpu.dot_dimension_numbers<[1], [0], [0], [1], [0, 0, 1, 1], [], []>} : vector<10x64xf32>, vector<64x64xf32>, vector<10x64xf32> -> vector<10x64xf32>
    %c1_179 = arith.constant 1 : index
    %c0_180 = arith.constant 0 : index
    %176 = vector.load %arg13[%c1_179, %c0_180] : memref<3x64xf32, #tpu.memory_space<vmem>>, vector<1x64xf32>
    %177 = vector.broadcast %176 : vector<1x64xf32> to vector<10x64xf32>
    %178 = arith.addf %175, %177 : vector<10x64xf32>
    %c2_181 = arith.constant 2 : index
    %c0_182 = arith.constant 0 : index
    %c0_183 = arith.constant 0 : index
    %179 = vector.load %arg12[%c2_181, %c0_182, %c0_183] : memref<3x64x64xf32, #tpu.memory_space<vmem>>, vector<1x64x64xf32>
    %180 = vector.shape_cast %179 : vector<1x64x64xf32> to vector<64x64xf32>
    %cst_184 = arith.constant dense<0.000000e+00> : vector<10x64xf32>
    %181 = tpu.matmul %157, %180, %cst_184 {dimension_numbers = #tpu.dot_dimension_numbers<[1], [0], [0], [1], [0, 0, 1, 1], [], []>} : vector<10x64xf32>, vector<64x64xf32>, vector<10x64xf32> -> vector<10x64xf32>
    %c2_185 = arith.constant 2 : index
    %c0_186 = arith.constant 0 : index
    %182 = vector.load %arg13[%c2_185, %c0_186] : memref<3x64xf32, #tpu.memory_space<vmem>>, vector<1x64xf32>
    %183 = vector.broadcast %182 : vector<1x64xf32> to vector<10x64xf32>
    %184 = arith.addf %181, %183 : vector<10x64xf32>
    %cst_187 = arith.constant 0.000000e+00 : f32
    %185 = vector.broadcast %cst_187 : f32 to vector<1x64xf32>
    %cst_188 = arith.constant dense<0.000000e+00> : vector<1x64xf32>
    %186 = tpu.matmul %185, %159, %cst_188 {dimension_numbers = #tpu.dot_dimension_numbers<[1], [0], [0], [1], [0, 0, 1, 1], [], []>} : vector<1x64xf32>, vector<64x64xf32>, vector<1x64xf32> -> vector<1x64xf32>
    %187 = arith.addf %186, %164 : vector<1x64xf32>
    %cst_189 = arith.constant dense<0.000000e+00> : vector<1x64xf32>
    %188 = tpu.matmul %185, %161, %cst_189 {dimension_numbers = #tpu.dot_dimension_numbers<[1], [0], [0], [1], [0, 0, 1, 1], [], []>} : vector<1x64xf32>, vector<64x64xf32>, vector<1x64xf32> -> vector<1x64xf32>
    %189 = arith.addf %188, %165 : vector<1x64xf32>
    %cst_190 = arith.constant dense<0.000000e+00> : vector<1x64xf32>
    %190 = tpu.matmul %185, %163, %cst_190 {dimension_numbers = #tpu.dot_dimension_numbers<[1], [0], [0], [1], [0, 0, 1, 1], [], []>} : vector<1x64xf32>, vector<64x64xf32>, vector<1x64xf32> -> vector<1x64xf32>
    %191 = arith.addf %190, %166 : vector<1x64xf32>
    %192 = vector.extract_strided_slice %172 {offsets = [0, 0], sizes = [1, 64], strides = [1, 1]} : vector<10x64xf32> to vector<1x64xf32>
    %193 = arith.addf %192, %187 : vector<1x64xf32>
    %194 = arith.negf %193 : vector<1x64xf32>
    %195 = math.exp %194 : vector<1x64xf32>
    %cst_191 = arith.constant 1.000000e+00 : f32
    %196 = vector.broadcast %cst_191 : f32 to vector<1x64xf32>
    %197 = arith.addf %196, %195 : vector<1x64xf32>
    %198 = arith.divf %196, %197 : vector<1x64xf32>
    %199 = vector.extract_strided_slice %178 {offsets = [0, 0], sizes = [1, 64], strides = [1, 1]} : vector<10x64xf32> to vector<1x64xf32>
    %200 = arith.addf %199, %189 : vector<1x64xf32>
    %201 = arith.negf %200 : vector<1x64xf32>
    %202 = math.exp %201 : vector<1x64xf32>
    %cst_192 = arith.constant 1.000000e+00 : f32
    %203 = vector.broadcast %cst_192 : f32 to vector<1x64xf32>
    %204 = arith.addf %203, %202 : vector<1x64xf32>
    %205 = arith.divf %203, %204 : vector<1x64xf32>
    %206 = vector.extract_strided_slice %184 {offsets = [0, 0], sizes = [1, 64], strides = [1, 1]} : vector<10x64xf32> to vector<1x64xf32>
    %207 = arith.mulf %198, %191 : vector<1x64xf32>
    %208 = arith.addf %206, %207 : vector<1x64xf32>
    %209 = math.tanh %208 : vector<1x64xf32>
    %cst_193 = arith.constant 1.000000e+00 : f32
    %210 = vector.broadcast %cst_193 : f32 to vector<1x64xf32>
    %211 = arith.subf %210, %205 : vector<1x64xf32>
    %212 = arith.mulf %211, %209 : vector<1x64xf32>
    %213 = arith.mulf %205, %185 : vector<1x64xf32>
    %214 = arith.addf %212, %213 : vector<1x64xf32>
    %cst_194 = arith.constant dense<0.000000e+00> : vector<1x64xf32>
    %215 = tpu.matmul %214, %159, %cst_194 {dimension_numbers = #tpu.dot_dimension_numbers<[1], [0], [0], [1], [0, 0, 1, 1], [], []>} : vector<1x64xf32>, vector<64x64xf32>, vector<1x64xf32> -> vector<1x64xf32>
    %216 = arith.addf %215, %164 : vector<1x64xf32>
    %cst_195 = arith.constant dense<0.000000e+00> : vector<1x64xf32>
    %217 = tpu.matmul %214, %161, %cst_195 {dimension_numbers = #tpu.dot_dimension_numbers<[1], [0], [0], [1], [0, 0, 1, 1], [], []>} : vector<1x64xf32>, vector<64x64xf32>, vector<1x64xf32> -> vector<1x64xf32>
    %218 = arith.addf %217, %165 : vector<1x64xf32>
    %cst_196 = arith.constant dense<0.000000e+00> : vector<1x64xf32>
    %219 = tpu.matmul %214, %163, %cst_196 {dimension_numbers = #tpu.dot_dimension_numbers<[1], [0], [0], [1], [0, 0, 1, 1], [], []>} : vector<1x64xf32>, vector<64x64xf32>, vector<1x64xf32> -> vector<1x64xf32>
    %220 = arith.addf %219, %166 : vector<1x64xf32>
    %221 = vector.extract_strided_slice %172 {offsets = [1, 0], sizes = [1, 64], strides = [1, 1]} : vector<10x64xf32> to vector<1x64xf32>
    %222 = arith.addf %221, %216 : vector<1x64xf32>
    %223 = arith.negf %222 : vector<1x64xf32>
    %224 = math.exp %223 : vector<1x64xf32>
    %cst_197 = arith.constant 1.000000e+00 : f32
    %225 = vector.broadcast %cst_197 : f32 to vector<1x64xf32>
    %226 = arith.addf %225, %224 : vector<1x64xf32>
    %227 = arith.divf %225, %226 : vector<1x64xf32>
    %228 = vector.extract_strided_slice %178 {offsets = [1, 0], sizes = [1, 64], strides = [1, 1]} : vector<10x64xf32> to vector<1x64xf32>
    %229 = arith.addf %228, %218 : vector<1x64xf32>
    %230 = arith.negf %229 : vector<1x64xf32>
    %231 = math.exp %230 : vector<1x64xf32>
    %cst_198 = arith.constant 1.000000e+00 : f32
    %232 = vector.broadcast %cst_198 : f32 to vector<1x64xf32>
    %233 = arith.addf %232, %231 : vector<1x64xf32>
    %234 = arith.divf %232, %233 : vector<1x64xf32>
    %235 = vector.extract_strided_slice %184 {offsets = [1, 0], sizes = [1, 64], strides = [1, 1]} : vector<10x64xf32> to vector<1x64xf32>
    %236 = arith.mulf %227, %220 : vector<1x64xf32>
    %237 = arith.addf %235, %236 : vector<1x64xf32>
    %238 = math.tanh %237 : vector<1x64xf32>
    %cst_199 = arith.constant 1.000000e+00 : f32
    %239 = vector.broadcast %cst_199 : f32 to vector<1x64xf32>
    %240 = arith.subf %239, %234 : vector<1x64xf32>
    %241 = arith.mulf %240, %238 : vector<1x64xf32>
    %242 = arith.mulf %234, %214 : vector<1x64xf32>
    %243 = arith.addf %241, %242 : vector<1x64xf32>
    %cst_200 = arith.constant dense<0.000000e+00> : vector<1x64xf32>
    %244 = tpu.matmul %243, %159, %cst_200 {dimension_numbers = #tpu.dot_dimension_numbers<[1], [0], [0], [1], [0, 0, 1, 1], [], []>} : vector<1x64xf32>, vector<64x64xf32>, vector<1x64xf32> -> vector<1x64xf32>
    %245 = arith.addf %244, %164 : vector<1x64xf32>
    %cst_201 = arith.constant dense<0.000000e+00> : vector<1x64xf32>
    %246 = tpu.matmul %243, %161, %cst_201 {dimension_numbers = #tpu.dot_dimension_numbers<[1], [0], [0], [1], [0, 0, 1, 1], [], []>} : vector<1x64xf32>, vector<64x64xf32>, vector<1x64xf32> -> vector<1x64xf32>
    %247 = arith.addf %246, %165 : vector<1x64xf32>
    %cst_202 = arith.constant dense<0.000000e+00> : vector<1x64xf32>
    %248 = tpu.matmul %243, %163, %cst_202 {dimension_numbers = #tpu.dot_dimension_numbers<[1], [0], [0], [1], [0, 0, 1, 1], [], []>} : vector<1x64xf32>, vector<64x64xf32>, vector<1x64xf32> -> vector<1x64xf32>
    %249 = arith.addf %248, %166 : vector<1x64xf32>
    %250 = vector.extract_strided_slice %172 {offsets = [2, 0], sizes = [1, 64], strides = [1, 1]} : vector<10x64xf32> to vector<1x64xf32>
    %251 = arith.addf %250, %245 : vector<1x64xf32>
    %252 = arith.negf %251 : vector<1x64xf32>
    %253 = math.exp %252 : vector<1x64xf32>
    %cst_203 = arith.constant 1.000000e+00 : f32
    %254 = vector.broadcast %cst_203 : f32 to vector<1x64xf32>
    %255 = arith.addf %254, %253 : vector<1x64xf32>
    %256 = arith.divf %254, %255 : vector<1x64xf32>
    %257 = vector.extract_strided_slice %178 {offsets = [2, 0], sizes = [1, 64], strides = [1, 1]} : vector<10x64xf32> to vector<1x64xf32>
    %258 = arith.addf %257, %247 : vector<1x64xf32>
    %259 = arith.negf %258 : vector<1x64xf32>
    %260 = math.exp %259 : vector<1x64xf32>
    %cst_204 = arith.constant 1.000000e+00 : f32
    %261 = vector.broadcast %cst_204 : f32 to vector<1x64xf32>
    %262 = arith.addf %261, %260 : vector<1x64xf32>
    %263 = arith.divf %261, %262 : vector<1x64xf32>
    %264 = vector.extract_strided_slice %184 {offsets = [2, 0], sizes = [1, 64], strides = [1, 1]} : vector<10x64xf32> to vector<1x64xf32>
    %265 = arith.mulf %256, %249 : vector<1x64xf32>
    %266 = arith.addf %264, %265 : vector<1x64xf32>
    %267 = math.tanh %266 : vector<1x64xf32>
    %cst_205 = arith.constant 1.000000e+00 : f32
    %268 = vector.broadcast %cst_205 : f32 to vector<1x64xf32>
    %269 = arith.subf %268, %263 : vector<1x64xf32>
    %270 = arith.mulf %269, %267 : vector<1x64xf32>
    %271 = arith.mulf %263, %243 : vector<1x64xf32>
    %272 = arith.addf %270, %271 : vector<1x64xf32>
    %cst_206 = arith.constant dense<0.000000e+00> : vector<1x64xf32>
    %273 = tpu.matmul %272, %159, %cst_206 {dimension_numbers = #tpu.dot_dimension_numbers<[1], [0], [0], [1], [0, 0, 1, 1], [], []>} : vector<1x64xf32>, vector<64x64xf32>, vector<1x64xf32> -> vector<1x64xf32>
    %274 = arith.addf %273, %164 : vector<1x64xf32>
    %cst_207 = arith.constant dense<0.000000e+00> : vector<1x64xf32>
    %275 = tpu.matmul %272, %161, %cst_207 {dimension_numbers = #tpu.dot_dimension_numbers<[1], [0], [0], [1], [0, 0, 1, 1], [], []>} : vector<1x64xf32>, vector<64x64xf32>, vector<1x64xf32> -> vector<1x64xf32>
    %276 = arith.addf %275, %165 : vector<1x64xf32>
    %cst_208 = arith.constant dense<0.000000e+00> : vector<1x64xf32>
    %277 = tpu.matmul %272, %163, %cst_208 {dimension_numbers = #tpu.dot_dimension_numbers<[1], [0], [0], [1], [0, 0, 1, 1], [], []>} : vector<1x64xf32>, vector<64x64xf32>, vector<1x64xf32> -> vector<1x64xf32>
    %278 = arith.addf %277, %166 : vector<1x64xf32>
    %279 = vector.extract_strided_slice %172 {offsets = [3, 0], sizes = [1, 64], strides = [1, 1]} : vector<10x64xf32> to vector<1x64xf32>
    %280 = arith.addf %279, %274 : vector<1x64xf32>
    %281 = arith.negf %280 : vector<1x64xf32>
    %282 = math.exp %281 : vector<1x64xf32>
    %cst_209 = arith.constant 1.000000e+00 : f32
    %283 = vector.broadcast %cst_209 : f32 to vector<1x64xf32>
    %284 = arith.addf %283, %282 : vector<1x64xf32>
    %285 = arith.divf %283, %284 : vector<1x64xf32>
    %286 = vector.extract_strided_slice %178 {offsets = [3, 0], sizes = [1, 64], strides = [1, 1]} : vector<10x64xf32> to vector<1x64xf32>
    %287 = arith.addf %286, %276 : vector<1x64xf32>
    %288 = arith.negf %287 : vector<1x64xf32>
    %289 = math.exp %288 : vector<1x64xf32>
    %cst_210 = arith.constant 1.000000e+00 : f32
    %290 = vector.broadcast %cst_210 : f32 to vector<1x64xf32>
    %291 = arith.addf %290, %289 : vector<1x64xf32>
    %292 = arith.divf %290, %291 : vector<1x64xf32>
    %293 = vector.extract_strided_slice %184 {offsets = [3, 0], sizes = [1, 64], strides = [1, 1]} : vector<10x64xf32> to vector<1x64xf32>
    %294 = arith.mulf %285, %278 : vector<1x64xf32>
    %295 = arith.addf %293, %294 : vector<1x64xf32>
    %296 = math.tanh %295 : vector<1x64xf32>
    %cst_211 = arith.constant 1.000000e+00 : f32
    %297 = vector.broadcast %cst_211 : f32 to vector<1x64xf32>
    %298 = arith.subf %297, %292 : vector<1x64xf32>
    %299 = arith.mulf %298, %296 : vector<1x64xf32>
    %300 = arith.mulf %292, %272 : vector<1x64xf32>
    %301 = arith.addf %299, %300 : vector<1x64xf32>
    %cst_212 = arith.constant dense<0.000000e+00> : vector<1x64xf32>
    %302 = tpu.matmul %301, %159, %cst_212 {dimension_numbers = #tpu.dot_dimension_numbers<[1], [0], [0], [1], [0, 0, 1, 1], [], []>} : vector<1x64xf32>, vector<64x64xf32>, vector<1x64xf32> -> vector<1x64xf32>
    %303 = arith.addf %302, %164 : vector<1x64xf32>
    %cst_213 = arith.constant dense<0.000000e+00> : vector<1x64xf32>
    %304 = tpu.matmul %301, %161, %cst_213 {dimension_numbers = #tpu.dot_dimension_numbers<[1], [0], [0], [1], [0, 0, 1, 1], [], []>} : vector<1x64xf32>, vector<64x64xf32>, vector<1x64xf32> -> vector<1x64xf32>
    %305 = arith.addf %304, %165 : vector<1x64xf32>
    %cst_214 = arith.constant dense<0.000000e+00> : vector<1x64xf32>
    %306 = tpu.matmul %301, %163, %cst_214 {dimension_numbers = #tpu.dot_dimension_numbers<[1], [0], [0], [1], [0, 0, 1, 1], [], []>} : vector<1x64xf32>, vector<64x64xf32>, vector<1x64xf32> -> vector<1x64xf32>
    %307 = arith.addf %306, %166 : vector<1x64xf32>
    %308 = vector.extract_strided_slice %172 {offsets = [4, 0], sizes = [1, 64], strides = [1, 1]} : vector<10x64xf32> to vector<1x64xf32>
    %309 = arith.addf %308, %303 : vector<1x64xf32>
    %310 = arith.negf %309 : vector<1x64xf32>
    %311 = math.exp %310 : vector<1x64xf32>
    %cst_215 = arith.constant 1.000000e+00 : f32
    %312 = vector.broadcast %cst_215 : f32 to vector<1x64xf32>
    %313 = arith.addf %312, %311 : vector<1x64xf32>
    %314 = arith.divf %312, %313 : vector<1x64xf32>
    %315 = vector.extract_strided_slice %178 {offsets = [4, 0], sizes = [1, 64], strides = [1, 1]} : vector<10x64xf32> to vector<1x64xf32>
    %316 = arith.addf %315, %305 : vector<1x64xf32>
    %317 = arith.negf %316 : vector<1x64xf32>
    %318 = math.exp %317 : vector<1x64xf32>
    %cst_216 = arith.constant 1.000000e+00 : f32
    %319 = vector.broadcast %cst_216 : f32 to vector<1x64xf32>
    %320 = arith.addf %319, %318 : vector<1x64xf32>
    %321 = arith.divf %319, %320 : vector<1x64xf32>
    %322 = vector.extract_strided_slice %184 {offsets = [4, 0], sizes = [1, 64], strides = [1, 1]} : vector<10x64xf32> to vector<1x64xf32>
    %323 = arith.mulf %314, %307 : vector<1x64xf32>
    %324 = arith.addf %322, %323 : vector<1x64xf32>
    %325 = math.tanh %324 : vector<1x64xf32>
    %cst_217 = arith.constant 1.000000e+00 : f32
    %326 = vector.broadcast %cst_217 : f32 to vector<1x64xf32>
    %327 = arith.subf %326, %321 : vector<1x64xf32>
    %328 = arith.mulf %327, %325 : vector<1x64xf32>
    %329 = arith.mulf %321, %301 : vector<1x64xf32>
    %330 = arith.addf %328, %329 : vector<1x64xf32>
    %cst_218 = arith.constant dense<0.000000e+00> : vector<1x64xf32>
    %331 = tpu.matmul %330, %159, %cst_218 {dimension_numbers = #tpu.dot_dimension_numbers<[1], [0], [0], [1], [0, 0, 1, 1], [], []>} : vector<1x64xf32>, vector<64x64xf32>, vector<1x64xf32> -> vector<1x64xf32>
    %332 = arith.addf %331, %164 : vector<1x64xf32>
    %cst_219 = arith.constant dense<0.000000e+00> : vector<1x64xf32>
    %333 = tpu.matmul %330, %161, %cst_219 {dimension_numbers = #tpu.dot_dimension_numbers<[1], [0], [0], [1], [0, 0, 1, 1], [], []>} : vector<1x64xf32>, vector<64x64xf32>, vector<1x64xf32> -> vector<1x64xf32>
    %334 = arith.addf %333, %165 : vector<1x64xf32>
    %cst_220 = arith.constant dense<0.000000e+00> : vector<1x64xf32>
    %335 = tpu.matmul %330, %163, %cst_220 {dimension_numbers = #tpu.dot_dimension_numbers<[1], [0], [0], [1], [0, 0, 1, 1], [], []>} : vector<1x64xf32>, vector<64x64xf32>, vector<1x64xf32> -> vector<1x64xf32>
    %336 = arith.addf %335, %166 : vector<1x64xf32>
    %337 = vector.extract_strided_slice %172 {offsets = [5, 0], sizes = [1, 64], strides = [1, 1]} : vector<10x64xf32> to vector<1x64xf32>
    %338 = arith.addf %337, %332 : vector<1x64xf32>
    %339 = arith.negf %338 : vector<1x64xf32>
    %340 = math.exp %339 : vector<1x64xf32>
    %cst_221 = arith.constant 1.000000e+00 : f32
    %341 = vector.broadcast %cst_221 : f32 to vector<1x64xf32>
    %342 = arith.addf %341, %340 : vector<1x64xf32>
    %343 = arith.divf %341, %342 : vector<1x64xf32>
    %344 = vector.extract_strided_slice %178 {offsets = [5, 0], sizes = [1, 64], strides = [1, 1]} : vector<10x64xf32> to vector<1x64xf32>
    %345 = arith.addf %344, %334 : vector<1x64xf32>
    %346 = arith.negf %345 : vector<1x64xf32>
    %347 = math.exp %346 : vector<1x64xf32>
    %cst_222 = arith.constant 1.000000e+00 : f32
    %348 = vector.broadcast %cst_222 : f32 to vector<1x64xf32>
    %349 = arith.addf %348, %347 : vector<1x64xf32>
    %350 = arith.divf %348, %349 : vector<1x64xf32>
    %351 = vector.extract_strided_slice %184 {offsets = [5, 0], sizes = [1, 64], strides = [1, 1]} : vector<10x64xf32> to vector<1x64xf32>
    %352 = arith.mulf %343, %336 : vector<1x64xf32>
    %353 = arith.addf %351, %352 : vector<1x64xf32>
    %354 = math.tanh %353 : vector<1x64xf32>
    %cst_223 = arith.constant 1.000000e+00 : f32
    %355 = vector.broadcast %cst_223 : f32 to vector<1x64xf32>
    %356 = arith.subf %355, %350 : vector<1x64xf32>
    %357 = arith.mulf %356, %354 : vector<1x64xf32>
    %358 = arith.mulf %350, %330 : vector<1x64xf32>
    %359 = arith.addf %357, %358 : vector<1x64xf32>
    %cst_224 = arith.constant dense<0.000000e+00> : vector<1x64xf32>
    %360 = tpu.matmul %359, %159, %cst_224 {dimension_numbers = #tpu.dot_dimension_numbers<[1], [0], [0], [1], [0, 0, 1, 1], [], []>} : vector<1x64xf32>, vector<64x64xf32>, vector<1x64xf32> -> vector<1x64xf32>
    %361 = arith.addf %360, %164 : vector<1x64xf32>
    %cst_225 = arith.constant dense<0.000000e+00> : vector<1x64xf32>
    %362 = tpu.matmul %359, %161, %cst_225 {dimension_numbers = #tpu.dot_dimension_numbers<[1], [0], [0], [1], [0, 0, 1, 1], [], []>} : vector<1x64xf32>, vector<64x64xf32>, vector<1x64xf32> -> vector<1x64xf32>
    %363 = arith.addf %362, %165 : vector<1x64xf32>
    %cst_226 = arith.constant dense<0.000000e+00> : vector<1x64xf32>
    %364 = tpu.matmul %359, %163, %cst_226 {dimension_numbers = #tpu.dot_dimension_numbers<[1], [0], [0], [1], [0, 0, 1, 1], [], []>} : vector<1x64xf32>, vector<64x64xf32>, vector<1x64xf32> -> vector<1x64xf32>
    %365 = arith.addf %364, %166 : vector<1x64xf32>
    %366 = vector.extract_strided_slice %172 {offsets = [6, 0], sizes = [1, 64], strides = [1, 1]} : vector<10x64xf32> to vector<1x64xf32>
    %367 = arith.addf %366, %361 : vector<1x64xf32>
    %368 = arith.negf %367 : vector<1x64xf32>
    %369 = math.exp %368 : vector<1x64xf32>
    %cst_227 = arith.constant 1.000000e+00 : f32
    %370 = vector.broadcast %cst_227 : f32 to vector<1x64xf32>
    %371 = arith.addf %370, %369 : vector<1x64xf32>
    %372 = arith.divf %370, %371 : vector<1x64xf32>
    %373 = vector.extract_strided_slice %178 {offsets = [6, 0], sizes = [1, 64], strides = [1, 1]} : vector<10x64xf32> to vector<1x64xf32>
    %374 = arith.addf %373, %363 : vector<1x64xf32>
    %375 = arith.negf %374 : vector<1x64xf32>
    %376 = math.exp %375 : vector<1x64xf32>
    %cst_228 = arith.constant 1.000000e+00 : f32
    %377 = vector.broadcast %cst_228 : f32 to vector<1x64xf32>
    %378 = arith.addf %377, %376 : vector<1x64xf32>
    %379 = arith.divf %377, %378 : vector<1x64xf32>
    %380 = vector.extract_strided_slice %184 {offsets = [6, 0], sizes = [1, 64], strides = [1, 1]} : vector<10x64xf32> to vector<1x64xf32>
    %381 = arith.mulf %372, %365 : vector<1x64xf32>
    %382 = arith.addf %380, %381 : vector<1x64xf32>
    %383 = math.tanh %382 : vector<1x64xf32>
    %cst_229 = arith.constant 1.000000e+00 : f32
    %384 = vector.broadcast %cst_229 : f32 to vector<1x64xf32>
    %385 = arith.subf %384, %379 : vector<1x64xf32>
    %386 = arith.mulf %385, %383 : vector<1x64xf32>
    %387 = arith.mulf %379, %359 : vector<1x64xf32>
    %388 = arith.addf %386, %387 : vector<1x64xf32>
    %cst_230 = arith.constant dense<0.000000e+00> : vector<1x64xf32>
    %389 = tpu.matmul %388, %159, %cst_230 {dimension_numbers = #tpu.dot_dimension_numbers<[1], [0], [0], [1], [0, 0, 1, 1], [], []>} : vector<1x64xf32>, vector<64x64xf32>, vector<1x64xf32> -> vector<1x64xf32>
    %390 = arith.addf %389, %164 : vector<1x64xf32>
    %cst_231 = arith.constant dense<0.000000e+00> : vector<1x64xf32>
    %391 = tpu.matmul %388, %161, %cst_231 {dimension_numbers = #tpu.dot_dimension_numbers<[1], [0], [0], [1], [0, 0, 1, 1], [], []>} : vector<1x64xf32>, vector<64x64xf32>, vector<1x64xf32> -> vector<1x64xf32>
    %392 = arith.addf %391, %165 : vector<1x64xf32>
    %cst_232 = arith.constant dense<0.000000e+00> : vector<1x64xf32>
    %393 = tpu.matmul %388, %163, %cst_232 {dimension_numbers = #tpu.dot_dimension_numbers<[1], [0], [0], [1], [0, 0, 1, 1], [], []>} : vector<1x64xf32>, vector<64x64xf32>, vector<1x64xf32> -> vector<1x64xf32>
    %394 = arith.addf %393, %166 : vector<1x64xf32>
    %395 = vector.extract_strided_slice %172 {offsets = [7, 0], sizes = [1, 64], strides = [1, 1]} : vector<10x64xf32> to vector<1x64xf32>
    %396 = arith.addf %395, %390 : vector<1x64xf32>
    %397 = arith.negf %396 : vector<1x64xf32>
    %398 = math.exp %397 : vector<1x64xf32>
    %cst_233 = arith.constant 1.000000e+00 : f32
    %399 = vector.broadcast %cst_233 : f32 to vector<1x64xf32>
    %400 = arith.addf %399, %398 : vector<1x64xf32>
    %401 = arith.divf %399, %400 : vector<1x64xf32>
    %402 = vector.extract_strided_slice %178 {offsets = [7, 0], sizes = [1, 64], strides = [1, 1]} : vector<10x64xf32> to vector<1x64xf32>
    %403 = arith.addf %402, %392 : vector<1x64xf32>
    %404 = arith.negf %403 : vector<1x64xf32>
    %405 = math.exp %404 : vector<1x64xf32>
    %cst_234 = arith.constant 1.000000e+00 : f32
    %406 = vector.broadcast %cst_234 : f32 to vector<1x64xf32>
    %407 = arith.addf %406, %405 : vector<1x64xf32>
    %408 = arith.divf %406, %407 : vector<1x64xf32>
    %409 = vector.extract_strided_slice %184 {offsets = [7, 0], sizes = [1, 64], strides = [1, 1]} : vector<10x64xf32> to vector<1x64xf32>
    %410 = arith.mulf %401, %394 : vector<1x64xf32>
    %411 = arith.addf %409, %410 : vector<1x64xf32>
    %412 = math.tanh %411 : vector<1x64xf32>
    %cst_235 = arith.constant 1.000000e+00 : f32
    %413 = vector.broadcast %cst_235 : f32 to vector<1x64xf32>
    %414 = arith.subf %413, %408 : vector<1x64xf32>
    %415 = arith.mulf %414, %412 : vector<1x64xf32>
    %416 = arith.mulf %408, %388 : vector<1x64xf32>
    %417 = arith.addf %415, %416 : vector<1x64xf32>
    %cst_236 = arith.constant dense<0.000000e+00> : vector<1x64xf32>
    %418 = tpu.matmul %417, %159, %cst_236 {dimension_numbers = #tpu.dot_dimension_numbers<[1], [0], [0], [1], [0, 0, 1, 1], [], []>} : vector<1x64xf32>, vector<64x64xf32>, vector<1x64xf32> -> vector<1x64xf32>
    %419 = arith.addf %418, %164 : vector<1x64xf32>
    %cst_237 = arith.constant dense<0.000000e+00> : vector<1x64xf32>
    %420 = tpu.matmul %417, %161, %cst_237 {dimension_numbers = #tpu.dot_dimension_numbers<[1], [0], [0], [1], [0, 0, 1, 1], [], []>} : vector<1x64xf32>, vector<64x64xf32>, vector<1x64xf32> -> vector<1x64xf32>
    %421 = arith.addf %420, %165 : vector<1x64xf32>
    %cst_238 = arith.constant dense<0.000000e+00> : vector<1x64xf32>
    %422 = tpu.matmul %417, %163, %cst_238 {dimension_numbers = #tpu.dot_dimension_numbers<[1], [0], [0], [1], [0, 0, 1, 1], [], []>} : vector<1x64xf32>, vector<64x64xf32>, vector<1x64xf32> -> vector<1x64xf32>
    %423 = arith.addf %422, %166 : vector<1x64xf32>
    %424 = vector.extract_strided_slice %172 {offsets = [8, 0], sizes = [1, 64], strides = [1, 1]} : vector<10x64xf32> to vector<1x64xf32>
    %425 = arith.addf %424, %419 : vector<1x64xf32>
    %426 = arith.negf %425 : vector<1x64xf32>
    %427 = math.exp %426 : vector<1x64xf32>
    %cst_239 = arith.constant 1.000000e+00 : f32
    %428 = vector.broadcast %cst_239 : f32 to vector<1x64xf32>
    %429 = arith.addf %428, %427 : vector<1x64xf32>
    %430 = arith.divf %428, %429 : vector<1x64xf32>
    %431 = vector.extract_strided_slice %178 {offsets = [8, 0], sizes = [1, 64], strides = [1, 1]} : vector<10x64xf32> to vector<1x64xf32>
    %432 = arith.addf %431, %421 : vector<1x64xf32>
    %433 = arith.negf %432 : vector<1x64xf32>
    %434 = math.exp %433 : vector<1x64xf32>
    %cst_240 = arith.constant 1.000000e+00 : f32
    %435 = vector.broadcast %cst_240 : f32 to vector<1x64xf32>
    %436 = arith.addf %435, %434 : vector<1x64xf32>
    %437 = arith.divf %435, %436 : vector<1x64xf32>
    %438 = vector.extract_strided_slice %184 {offsets = [8, 0], sizes = [1, 64], strides = [1, 1]} : vector<10x64xf32> to vector<1x64xf32>
    %439 = arith.mulf %430, %423 : vector<1x64xf32>
    %440 = arith.addf %438, %439 : vector<1x64xf32>
    %441 = math.tanh %440 : vector<1x64xf32>
    %cst_241 = arith.constant 1.000000e+00 : f32
    %442 = vector.broadcast %cst_241 : f32 to vector<1x64xf32>
    %443 = arith.subf %442, %437 : vector<1x64xf32>
    %444 = arith.mulf %443, %441 : vector<1x64xf32>
    %445 = arith.mulf %437, %417 : vector<1x64xf32>
    %446 = arith.addf %444, %445 : vector<1x64xf32>
    %cst_242 = arith.constant dense<0.000000e+00> : vector<1x64xf32>
    %447 = tpu.matmul %446, %159, %cst_242 {dimension_numbers = #tpu.dot_dimension_numbers<[1], [0], [0], [1], [0, 0, 1, 1], [], []>} : vector<1x64xf32>, vector<64x64xf32>, vector<1x64xf32> -> vector<1x64xf32>
    %448 = arith.addf %447, %164 : vector<1x64xf32>
    %cst_243 = arith.constant dense<0.000000e+00> : vector<1x64xf32>
    %449 = tpu.matmul %446, %161, %cst_243 {dimension_numbers = #tpu.dot_dimension_numbers<[1], [0], [0], [1], [0, 0, 1, 1], [], []>} : vector<1x64xf32>, vector<64x64xf32>, vector<1x64xf32> -> vector<1x64xf32>
    %450 = arith.addf %449, %165 : vector<1x64xf32>
    %cst_244 = arith.constant dense<0.000000e+00> : vector<1x64xf32>
    %451 = tpu.matmul %446, %163, %cst_244 {dimension_numbers = #tpu.dot_dimension_numbers<[1], [0], [0], [1], [0, 0, 1, 1], [], []>} : vector<1x64xf32>, vector<64x64xf32>, vector<1x64xf32> -> vector<1x64xf32>
    %452 = arith.addf %451, %166 : vector<1x64xf32>
    %453 = vector.extract_strided_slice %172 {offsets = [9, 0], sizes = [1, 64], strides = [1, 1]} : vector<10x64xf32> to vector<1x64xf32>
    %454 = arith.addf %453, %448 : vector<1x64xf32>
    %455 = arith.negf %454 : vector<1x64xf32>
    %456 = math.exp %455 : vector<1x64xf32>
    %cst_245 = arith.constant 1.000000e+00 : f32
    %457 = vector.broadcast %cst_245 : f32 to vector<1x64xf32>
    %458 = arith.addf %457, %456 : vector<1x64xf32>
    %459 = arith.divf %457, %458 : vector<1x64xf32>
    %460 = vector.extract_strided_slice %178 {offsets = [9, 0], sizes = [1, 64], strides = [1, 1]} : vector<10x64xf32> to vector<1x64xf32>
    %461 = arith.addf %460, %450 : vector<1x64xf32>
    %462 = arith.negf %461 : vector<1x64xf32>
    %463 = math.exp %462 : vector<1x64xf32>
    %cst_246 = arith.constant 1.000000e+00 : f32
    %464 = vector.broadcast %cst_246 : f32 to vector<1x64xf32>
    %465 = arith.addf %464, %463 : vector<1x64xf32>
    %466 = arith.divf %464, %465 : vector<1x64xf32>
    %467 = vector.extract_strided_slice %184 {offsets = [9, 0], sizes = [1, 64], strides = [1, 1]} : vector<10x64xf32> to vector<1x64xf32>
    %468 = arith.mulf %459, %452 : vector<1x64xf32>
    %469 = arith.addf %467, %468 : vector<1x64xf32>
    %470 = math.tanh %469 : vector<1x64xf32>
    %cst_247 = arith.constant 1.000000e+00 : f32
    %471 = vector.broadcast %cst_247 : f32 to vector<1x64xf32>
    %472 = arith.subf %471, %466 : vector<1x64xf32>
    %473 = arith.mulf %472, %470 : vector<1x64xf32>
    %474 = arith.mulf %466, %446 : vector<1x64xf32>
    %475 = arith.addf %473, %474 : vector<1x64xf32>
    %c0_248 = arith.constant 0 : index
    %c0_249 = arith.constant 0 : index
    %476 = vector.load %arg16[%c0_248, %c0_249] : memref<64x32xf32, #tpu.memory_space<vmem>>, vector<64x32xf32>
    %cst_250 = arith.constant dense<0.000000e+00> : vector<1x32xf32>
    %477 = tpu.matmul %475, %476, %cst_250 {dimension_numbers = #tpu.dot_dimension_numbers<[1], [0], [0], [1], [0, 0, 1, 1], [], []>} : vector<1x64xf32>, vector<64x32xf32>, vector<1x32xf32> -> vector<1x32xf32>
    %c0_251 = arith.constant 0 : index
    %c0_252 = arith.constant 0 : index
    %478 = vector.load %arg17[%c0_251, %c0_252] : memref<1x32xf32, #tpu.memory_space<vmem>>, vector<1x32xf32>
    %479 = arith.addf %477, %478 : vector<1x32xf32>
    %cst_253 = arith.constant 0.000000e+00 : f32
    %480 = vector.broadcast %cst_253 : f32 to vector<1x32xf32>
    %481 = arith.maximumf %479, %480 : vector<1x32xf32>
    %c0_254 = arith.constant 0 : index
    %c0_255 = arith.constant 0 : index
    %482 = vector.load %arg18[%c0_254, %c0_255] : memref<32x4xf32, #tpu.memory_space<vmem>>, vector<32x4xf32>
    %cst_256 = arith.constant dense<0.000000e+00> : vector<1x4xf32>
    %483 = tpu.matmul %481, %482, %cst_256 {dimension_numbers = #tpu.dot_dimension_numbers<[1], [0], [0], [1], [0, 0, 1, 1], [], []>} : vector<1x32xf32>, vector<32x4xf32>, vector<1x4xf32> -> vector<1x4xf32>
    %c0_257 = arith.constant 0 : index
    %c0_258 = arith.constant 0 : index
    %484 = vector.load %arg19[%c0_257, %c0_258] : memref<1x4xf32, #tpu.memory_space<vmem>>, vector<1x4xf32>
    %485 = arith.addf %483, %484 : vector<1x4xf32>
    %c0_259 = arith.constant 0 : index
    %c0_260 = arith.constant 0 : index
    %486 = vector.load %arg20[%c0_259, %c0_260] : memref<1x1xf32, #tpu.memory_space<vmem>>, vector<1x1xf32>
    %487 = vector.broadcast %486 : vector<1x1xf32> to vector<1x4xf32>
    %488 = arith.mulf %485, %487 : vector<1x4xf32>
    %c0_261 = arith.constant 0 : index
    %c0_262 = arith.constant 0 : index
    %c0_263 = arith.constant 0 : index
    %489 = vector.load %arg21[%c0_261, %c0_262, %c0_263] : memref<1x1x4xf32, #tpu.memory_space<vmem>>, vector<1x1x4xf32>
    %490 = vector.shape_cast %489 : vector<1x1x4xf32> to vector<1x4xf32>
    %491 = vector.shape_cast %488 : vector<1x4xf32> to vector<1x1x4xf32>
    tpu.vector_store %arg21[%c0_261, %c0_262, %c0_263], %491 {strides = array<i32>} : memref<1x1x4xf32, #tpu.memory_space<vmem>>, vector<1x1x4xf32>,
    return
  }
  func.func @transform_0(%arg0: i32) -> (i32, i32, i32) {
    %c0_i32 = arith.constant 0 : i32
    %c0_i32_0 = arith.constant 0 : i32
    %c0_i32_1 = arith.constant 0 : i32
    return %arg0, %c0_i32, %c0_i32_0 : i32, i32, i32
  }
  func.func @transform_1(%arg0: i32) -> (i32, i32, i32) {
    %c0_i32 = arith.constant 0 : i32
    %c0_i32_0 = arith.constant 0 : i32
    %c0_i32_1 = arith.constant 0 : i32
    %c0_i32_2 = arith.constant 0 : i32
    return %c0_i32, %c0_i32_0, %c0_i32_1 : i32, i32, i32
  }
  func.func @transform_2(%arg0: i32) -> (i32, i32) {
    %c0_i32 = arith.constant 0 : i32
    %c0_i32_0 = arith.constant 0 : i32
    %c0_i32_1 = arith.constant 0 : i32
    return %c0_i32, %c0_i32_0 : i32, i32
  }
  func.func @transform_3(%arg0: i32) -> (i32, i32, i32) {
    %c0_i32 = arith.constant 0 : i32
    %c0_i32_0 = arith.constant 0 : i32
    %c0_i32_1 = arith.constant 0 : i32
    %c0_i32_2 = arith.constant 0 : i32
    return %c0_i32, %c0_i32_0, %c0_i32_1 : i32, i32, i32
  }
  func.func @transform_4(%arg0: i32) -> (i32, i32) {
    %c0_i32 = arith.constant 0 : i32
    %c0_i32_0 = arith.constant 0 : i32
    %c0_i32_1 = arith.constant 0 : i32
    return %c0_i32, %c0_i32_0 : i32, i32
  }
  func.func @transform_5(%arg0: i32) -> (i32, i32, i32) {
    %c0_i32 = arith.constant 0 : i32
    %c0_i32_0 = arith.constant 0 : i32
    %c0_i32_1 = arith.constant 0 : i32
    %c0_i32_2 = arith.constant 0 : i32
    return %c0_i32, %c0_i32_0, %c0_i32_1 : i32, i32, i32
  }
  func.func @transform_6(%arg0: i32) -> (i32, i32) {
    %c0_i32 = arith.constant 0 : i32
    %c0_i32_0 = arith.constant 0 : i32
    %c0_i32_1 = arith.constant 0 : i32
    return %c0_i32, %c0_i32_0 : i32, i32
  }
  func.func @transform_7(%arg0: i32) -> (i32, i32) {
    %c0_i32 = arith.constant 0 : i32
    %c0_i32_0 = arith.constant 0 : i32
    %c0_i32_1 = arith.constant 0 : i32
    return %c0_i32, %c0_i32_0 : i32, i32
  }
  func.func @transform_8(%arg0: i32) -> (i32, i32) {
    %c0_i32 = arith.constant 0 : i32
    %c0_i32_0 = arith.constant 0 : i32
    %c0_i32_1 = arith.constant 0 : i32
    return %c0_i32, %c0_i32_0 : i32, i32
  }
  func.func @transform_9(%arg0: i32) -> (i32, i32) {
    %c0_i32 = arith.constant 0 : i32
    %c0_i32_0 = arith.constant 0 : i32
    %c0_i32_1 = arith.constant 0 : i32
    return %c0_i32, %c0_i32_0 : i32, i32
  }
  func.func @transform_10(%arg0: i32) -> (i32, i32) {
    %c0_i32 = arith.constant 0 : i32
    %c0_i32_0 = arith.constant 0 : i32
    %c0_i32_1 = arith.constant 0 : i32
    return %c0_i32, %c0_i32_0 : i32, i32
  }
  func.func @transform_11(%arg0: i32) -> (i32, i32, i32) {
    %c0_i32 = arith.constant 0 : i32
    %c0_i32_0 = arith.constant 0 : i32
    %c0_i32_1 = arith.constant 0 : i32
    %c0_i32_2 = arith.constant 0 : i32
    return %c0_i32, %c0_i32_0, %c0_i32_1 : i32, i32, i32
  }
  func.func @transform_12(%arg0: i32) -> (i32, i32) {
    %c0_i32 = arith.constant 0 : i32
    %c0_i32_0 = arith.constant 0 : i32
    %c0_i32_1 = arith.constant 0 : i32
    return %c0_i32, %c0_i32_0 : i32, i32
  }
  func.func @transform_13(%arg0: i32) -> (i32, i32, i32) {
    %c0_i32 = arith.constant 0 : i32
    %c0_i32_0 = arith.constant 0 : i32
    %c0_i32_1 = arith.constant 0 : i32
    %c0_i32_2 = arith.constant 0 : i32
    return %c0_i32, %c0_i32_0, %c0_i32_1 : i32, i32, i32
  }
  func.func @transform_14(%arg0: i32) -> (i32, i32) {
    %c0_i32 = arith.constant 0 : i32
    %c0_i32_0 = arith.constant 0 : i32
    %c0_i32_1 = arith.constant 0 : i32
    return %c0_i32, %c0_i32_0 : i32, i32
  }
  func.func @transform_15(%arg0: i32) -> (i32, i32) {
    %c0_i32 = arith.constant 0 : i32
    %c0_i32_0 = arith.constant 0 : i32
    %c0_i32_1 = arith.constant 0 : i32
    return %c0_i32, %c0_i32_0 : i32, i32
  }
  func.func @transform_16(%arg0: i32) -> (i32, i32) {
    %c0_i32 = arith.constant 0 : i32
    %c0_i32_0 = arith.constant 0 : i32
    %c0_i32_1 = arith.constant 0 : i32
    return %c0_i32, %c0_i32_0 : i32, i32
  }
  func.func @transform_17(%arg0: i32) -> (i32, i32) {
    %c0_i32 = arith.constant 0 : i32
    %c0_i32_0 = arith.constant 0 : i32
    %c0_i32_1 = arith.constant 0 : i32
    return %c0_i32, %c0_i32_0 : i32, i32
  }
  func.func @transform_18(%arg0: i32) -> (i32, i32) {
    %c0_i32 = arith.constant 0 : i32
    %c0_i32_0 = arith.constant 0 : i32
    %c0_i32_1 = arith.constant 0 : i32
    return %c0_i32, %c0_i32_0 : i32, i32
  }
  func.func @transform_19(%arg0: i32) -> (i32, i32) {
    %c0_i32 = arith.constant 0 : i32
    %c0_i32_0 = arith.constant 0 : i32
    %c0_i32_1 = arith.constant 0 : i32
    return %c0_i32, %c0_i32_0 : i32, i32
  }
  func.func @transform_20(%arg0: i32) -> (i32, i32, i32) {
    %c0_i32 = arith.constant 0 : i32
    %c0_i32_0 = arith.constant 0 : i32
    %c0_i32_1 = arith.constant 0 : i32
    return %arg0, %c0_i32, %c0_i32_0 : i32, i32, i32
  }
}

</mosaic_0001>

<llo_original>
// kernel: sa_model_forward.1
$region0: #{sa_model_forward.1}
  #allocation0 [shape = 'u32[]', space=smem, size = 0x4, offset = 0x4, fixed_abs, tag = 'smem constant byte address 0x4 - core index']
  #allocation1 [shape = 'u32[72,128]{1,0:T(1,128)}', space=vmem, size = 0x9000, scoped, tag = 'internal scratch']
  #allocation2 [shape = 'f32[130,8]{1,0:T(8,128)}', space=vmem, size = 0x11000, scoped, tag = 'scratch operand']
  #allocation3 [shape = 'f32[124,32]{1,0:T(8,128)}', space=vmem, size = 0x10000, scoped, tag = 'scratch operand']
  #allocation4 [shape = 'f32[64,32]{1,0:T(8,128)}', space=vmem, size = 0x8000, scoped, tag = 'scratch operand']
  #allocation5 [shape = 'f32[52,32]{1,0:T(8,128)}', space=vmem, size = 0x7000, scoped, tag = 'scratch operand']
  #allocation6 [shape = 'f32[28,32]{1,0:T(8,128)}', space=vmem, size = 0x4000, scoped, tag = 'scratch operand']
  #allocation7 [shape = 'f32[20,32]{1,0:T(8,128)}', space=vmem, size = 0x3000, scoped, tag = 'scratch operand']
  #allocation8 [shape = 'f32[1,1]{1,0:T(1,128)S(1)}', space=vmem, size = 0x200, scoped, tag = 'scoped memory for sa_model_forward.1']
  %s0 = inlined_call_operand.vmem [shape: f32[2,128,8], index: 0, kind: input, shape index: {}]
  %s1 = inlined_call_operand.hbm [shape: f32[7,8,32], index: 1, kind: input, shape index: {}]
  %s2 = inlined_call_operand.vmem [shape: f32[1,32], index: 2, kind: input, shape index: {}]
  %s3 = inlined_call_operand.vmem [shape: f32[7,32,32], index: 3, kind: input, shape index: {}]
  %s4 = inlined_call_operand.vmem [shape: f32[1,32], index: 4, kind: input, shape index: {}]
  %s5 = inlined_call_operand.vmem [shape: f32[3,32,32], index: 5, kind: input, shape index: {}]
  %s6 = inlined_call_operand.hbm [shape: f32[1,32], index: 6, kind: input, shape index: {}]
  %s7 = inlined_call_operand.vmem [shape: f32[32,48], index: 7, kind: input, shape index: {}]
  %s8 = inlined_call_operand.vmem [shape: f32[1,48], index: 8, kind: input, shape index: {}]
  %s9 = inlined_call_operand.hbm [shape: f32[16,32], index: 9, kind: input, shape index: {}]
  %s10 = inlined_call_operand.vmem [shape: f32[1,32], index: 10, kind: input, shape index: {}]
  %s11 = inlined_call_operand.hbm [shape: f32[3,64,64], index: 11, kind: input, shape index: {}]
  %s12 = inlined_call_operand.vmem [shape: f32[3,64], index: 12, kind: input, shape index: {}]
  %s13 = inlined_call_operand.hbm [shape: f32[3,64,64], index: 13, kind: input, shape index: {}]
  %s14 = inlined_call_operand.vmem [shape: f32[3,64], index: 14, kind: input, shape index: {}]
  %s15 = inlined_call_operand.vmem [shape: f32[64,32], index: 15, kind: input, shape index: {}]
  %s16 = inlined_call_operand.hbm [shape: f32[1,32], index: 16, kind: input, shape index: {}]
  %s17 = inlined_call_operand.vmem [shape: f32[32,4], index: 17, kind: input, shape index: {}]
  %s18 = inlined_call_operand.hbm [shape: f32[1,4], index: 18, kind: input, shape index: {}]
  %s19 = inlined_call_operand.<no memory space> [shape: f32[1,1], index: 19, kind: input, shape index: {}]
  %s20 = inlined_call_operand.hbm [shape: f32[2,1,4], index: 20, kind: output, shape index: {}]
  %s21 = sld [smem:[#allocation0]]
  $region141: #{sa_model_forward.1} parent=0
    _
  %s23 = ssub.s32 1, %s21
  %s24 = scalar_select 0, %s23, %s21
  %v25 = vstv %s19
  %26 = vst [vmem:[#allocation8] sm:$0x1] %v25
  $region1: #{sa_model_forward.1} parent=0
    #allocation9 [shape = 'u8[28672]{0}', space=vmem, size = 0x7000, scoped, tag = 'input window, operand 1, single buffered']
    #allocation10 [shape = 's32[2]{0}', space=sflag, size = 0x8, scoped, tag = 'scoped memory for sa_model_forward.1']
    #allocation11 [shape = 's32[2]{0}', space=sflag, size = 0x8, scoped, tag = 'scoped memory for sa_model_forward.1']
    #allocation12 [shape = 'u8[512]{0}', space=vmem, size = 0x400, scoped, tag = 'input window, operand 6, single buffered']
    #allocation13 [shape = 's32[1]{0}', space=sflag, size = 0x4, scoped, tag = 'scoped memory for sa_model_forward.1']
    #allocation14 [shape = 'u8[8192]{0}', space=vmem, size = 0x2000, scoped, tag = 'input window, operand 9, single buffered']
    #allocation15 [shape = 'u8[98304]{0}', space=vmem, size = 0x18000, scoped, tag = 'input window, operand 11, single buffered']
    #allocation16 [shape = 's32[1]{0}', space=sflag, size = 0x4, scoped, tag = 'scoped memory for sa_model_forward.1']
    #allocation17 [shape = 'u8[98304]{0}', space=vmem, size = 0x18000, scoped, tag = 'input window, operand 13, single buffered']
    #allocation18 [shape = 'u8[512]{0}', space=vmem, size = 0x400, scoped, tag = 'input window, operand 16, single buffered']
    #allocation19 [shape = 's32[1]{0}', space=sflag, size = 0x4, scoped, tag = 'scoped memory for sa_model_forward.1']
    #allocation20 [shape = 'u8[512]{0}', space=vmem, size = 0x400, scoped, tag = 'input window, operand 18, single buffered']
    #allocation21 [shape = 'u8[1024]{0}', space=vmem, size = 0x400, scoped, tag = 'output window, operand 0']
    %27 = vsyncpa [#allocation10], 0
    %28 = vsyncpa [#allocation13], 0
    %29 = vsyncpa [#allocation16], 0
    %30 = vsyncpa [#allocation19], 0
    %31 = vsyncpa [#allocation11], 0
    %s32 = scalar_lea.sflag [#allocation11], 1
    %33 = vsyncpa %s32, 0
    loop: start=0, step=1, limit=4
    $region2: #{sa_model_forward.1} parent=1 // loop_pre_header
      _
    $region3: #{sa_model_forward.1} parent=1 // loop_header
      %s35 = sphi 0, %s39
      %p36 = scmp.ge.s32.totalorder %s35, 4
      %s45 = sphi 0, %s47
      %s48 = sphi 0, %s45
      %s49 = sphi 0, %s48
      %s65 = sphi 0, %s49
      %s69 = sphi 0, %s69
      %s71 = sphi 0, %s69
      %s72 = sphi 0, %s71
      %s86 = sphi 0, %s72
      %s90 = sphi 0, %s90
      %s92 = sphi 0, %s90
      %s93 = sphi 0, %s92
      %s107 = sphi 0, %s93
      %s111 = sphi 0, %s111
      %s113 = sphi 0, %s111
      %s114 = sphi 0, %s113
      %s128 = sphi 0, %s114
      %s132 = sphi 0, %s132
      %s134 = sphi 0, %s132
      %s135 = sphi 0, %s134
      %s149 = sphi 0, %s135
      %s153 = sphi 0, %s153
      %s155 = sphi 0, %s153
      %s156 = sphi 0, %s155
      %s170 = sphi 0, %s156
      %s174 = sphi 0, %s174
      %s176 = sphi 0, %s174
      %s177 = sphi 0, %s176
      %s191 = sphi 0, %s177
      %s195 = sphi 0, %s195
      %s197 = sphi 0, %s195
      %s198 = sphi 0, %s197
      %s212 = sphi 0, %s198
      %s216 = sphi 0, %s216
      %s218 = sphi 0, %s216
      %s219 = sphi 0, %s218
      %s233 = sphi 0, %s219
      %s237 = sphi 0, %s237
      %s239 = sphi 0, %s237
      %s240 = sphi 0, %s239
      %s254 = sphi 0, %s240
      %s258 = sphi 0, %s258
      %s260 = sphi 0, %s258
      %s261 = sphi 0, %s260
      %s275 = sphi 0, %s261
      %s279 = sphi 0, %s279
      %s281 = sphi 0, %s279
      %s282 = sphi 0, %s281
      %s296 = sphi 0, %s282
      %s300 = sphi 0, %s300
      %s302 = sphi 0, %s300
      %s303 = sphi 0, %s302
      %s317 = sphi 0, %s303
      %s321 = sphi 0, %s321
      %s323 = sphi 0, %s321
      %s324 = sphi 0, %s323
      %s338 = sphi 0, %s324
      %s342 = sphi 0, %s342
      %s344 = sphi 0, %s342
      %s345 = sphi 0, %s344
      %s359 = sphi 0, %s345
      %s363 = sphi 0, %s363
      %s365 = sphi 0, %s363
      %s366 = sphi 0, %s365
      %s380 = sphi 0, %s366
      %s384 = sphi 0, %s384
      %s386 = sphi 0, %s384
      %s387 = sphi 0, %s386
      %s401 = sphi 0, %s387
      %s405 = sphi 0, %s405
      %s407 = sphi 0, %s405
      %s408 = sphi 0, %s407
      %s422 = sphi 0, %s408
      %s426 = sphi 0, %s426
      %s428 = sphi 0, %s426
      %s429 = sphi 0, %s428
      %s443 = sphi 0, %s429
      %s447 = sphi 0, %s447
      %s449 = sphi 0, %s447
      %s450 = sphi 0, %s449
      %s464 = sphi 0, %s450
      %s470 = sphi 0, %s472
      %s473 = sphi 0, %s470
      %s474 = sphi 0, %s473
      %s490 = sphi 0, %s474
    $region4: #{sa_model_forward.1} parent=1 // loop_header_branch
      %38 = sbr.rel (%p36) target = $region8
    $region5: #{sa_model_forward.1} parent=1 // loop_body
      %s40 = ssub.s32 %s35, 1
      %s41 = ssub.s32 %s35, 2
      %s42 = sadd.s32 %s35, 1
      %s43 = ssub.s32 %s35, %s42
      %p44 = scmp.eq.s32.totalorder %s43, 0
      %s46 = sadd.s32 %s45, 1
      %s47 = scalar_select %p44, %s45, %s46
      %p50 = pneg %p44
      %p51 = scmp.eq.s32.totalorder %s35, 1
      %p52 = por %p50, %p51
      %p53 = scmp.ne.s32.totalorder %s45, %s48
      %p54 = scmp.eq.s32.totalorder %s35, 0
      %p55 = por %p53, %p54
      %p56 = scmp.ne.s32.totalorder %s45, %s48
      %p57 = scmp.eq.s32.totalorder %s40, 1
      %p58 = por %p56, %p57
      %p59 = scmp.ne.s32.totalorder %s48, %s49
      %p60 = scmp.eq.s32.totalorder %s40, 0
      %p61 = por %p59, %p60
      %p62 = scmp.ne.s32.totalorder %s48, %s49
      %p63 = scmp.eq.s32.totalorder %s41, 1
      %p64 = por %p62, %p63
      %p66 = scmp.ne.s32.totalorder %s49, %s65
      %p67 = scmp.eq.s32.totalorder %s41, 0
      %p68 = por %p66, %p67
      %s70 = sadd.s32 %s69, 1
      %p73 = scmp.eq.s32.totalorder %s35, 1
      %p74 = scmp.ne.s32.totalorder %s69, %s71
      %p75 = scmp.eq.s32.totalorder %s35, 0
      %p76 = por %p74, %p75
      %p77 = scmp.ne.s32.totalorder %s69, %s71
      %p78 = scmp.eq.s32.totalorder %s40, 1
      %p79 = por %p77, %p78
      %p80 = scmp.ne.s32.totalorder %s71, %s72
      %p81 = scmp.eq.s32.totalorder %s40, 0
      %p82 = por %p80, %p81
      %p83 = scmp.ne.s32.totalorder %s71, %s72
      %p84 = scmp.eq.s32.totalorder %s41, 1
      %p85 = por %p83, %p84
      %p87 = scmp.ne.s32.totalorder %s72, %s86
      %p88 = scmp.eq.s32.totalorder %s41, 0
      %p89 = por %p87, %p88
      %s91 = sadd.s32 %s90, 1
      %p94 = scmp.eq.s32.totalorder %s35, 1
      %p95 = scmp.ne.s32.totalorder %s90, %s92
      %p96 = scmp.eq.s32.totalorder %s35, 0
      %p97 = por %p95, %p96
      %p98 = scmp.ne.s32.totalorder %s90, %s92
      %p99 = scmp.eq.s32.totalorder %s40, 1
      %p100 = por %p98, %p99
      %p101 = scmp.ne.s32.totalorder %s92, %s93
      %p102 = scmp.eq.s32.totalorder %s40, 0
      %p103 = por %p101, %p102
      %p104 = scmp.ne.s32.totalorder %s92, %s93
      %p105 = scmp.eq.s32.totalorder %s41, 1
      %p106 = por %p104, %p105
      %p108 = scmp.ne.s32.totalorder %s93, %s107
      %p109 = scmp.eq.s32.totalorder %s41, 0
      %p110 = por %p108, %p109
      %s112 = sadd.s32 %s111, 1
      %p115 = scmp.eq.s32.totalorder %s35, 1
      %p116 = scmp.ne.s32.totalorder %s111, %s113
      %p117 = scmp.eq.s32.totalorder %s35, 0
      %p118 = por %p116, %p117
      %p119 = scmp.ne.s32.totalorder %s111, %s113
      %p120 = scmp.eq.s32.totalorder %s40, 1
      %p121 = por %p119, %p120
      %p122 = scmp.ne.s32.totalorder %s113, %s114
      %p123 = scmp.eq.s32.totalorder %s40, 0
      %p124 = por %p122, %p123
      %p125 = scmp.ne.s32.totalorder %s113, %s114
      %p126 = scmp.eq.s32.totalorder %s41, 1
      %p127 = por %p125, %p126
      %p129 = scmp.ne.s32.totalorder %s114, %s128
      %p130 = scmp.eq.s32.totalorder %s41, 0
      %p131 = por %p129, %p130
      %s133 = sadd.s32 %s132, 1
      %p136 = scmp.eq.s32.totalorder %s35, 1
      %p137 = scmp.ne.s32.totalorder %s132, %s134
      %p138 = scmp.eq.s32.totalorder %s35, 0
      %p139 = por %p137, %p138
      %p140 = scmp.ne.s32.totalorder %s132, %s134
      %p141 = scmp.eq.s32.totalorder %s40, 1
      %p142 = por %p140, %p141
      %p143 = scmp.ne.s32.totalorder %s134, %s135
      %p144 = scmp.eq.s32.totalorder %s40, 0
      %p145 = por %p143, %p144
      %p146 = scmp.ne.s32.totalorder %s134, %s135
      %p147 = scmp.eq.s32.totalorder %s41, 1
      %p148 = por %p146, %p147
      %p150 = scmp.ne.s32.totalorder %s135, %s149
      %p151 = scmp.eq.s32.totalorder %s41, 0
      %p152 = por %p150, %p151
      %s154 = sadd.s32 %s153, 1
      %p157 = scmp.eq.s32.totalorder %s35, 1
      %p158 = scmp.ne.s32.totalorder %s153, %s155
      %p159 = scmp.eq.s32.totalorder %s35, 0
      %p160 = por %p158, %p159
      %p161 = scmp.ne.s32.totalorder %s153, %s155
      %p162 = scmp.eq.s32.totalorder %s40, 1
      %p163 = por %p161, %p162
      %p164 = scmp.ne.s32.totalorder %s155, %s156
      %p165 = scmp.eq.s32.totalorder %s40, 0
      %p166 = por %p164, %p165
      %p167 = scmp.ne.s32.totalorder %s155, %s156
      %p168 = scmp.eq.s32.totalorder %s41, 1
      %p169 = por %p167, %p168
      %p171 = scmp.ne.s32.totalorder %s156, %s170
      %p172 = scmp.eq.s32.totalorder %s41, 0
      %p173 = por %p171, %p172
      %s175 = sadd.s32 %s174, 1
      %p178 = scmp.eq.s32.totalorder %s35, 1
      %p179 = scmp.ne.s32.totalorder %s174, %s176
      %p180 = scmp.eq.s32.totalorder %s35, 0
      %p181 = por %p179, %p180
      %p182 = scmp.ne.s32.totalorder %s174, %s176
      %p183 = scmp.eq.s32.totalorder %s40, 1
      %p184 = por %p182, %p183
      %p185 = scmp.ne.s32.totalorder %s176, %s177
      %p186 = scmp.eq.s32.totalorder %s40, 0
      %p187 = por %p185, %p186
      %p188 = scmp.ne.s32.totalorder %s176, %s177
      %p189 = scmp.eq.s32.totalorder %s41, 1
      %p190 = por %p188, %p189
      %p192 = scmp.ne.s32.totalorder %s177, %s191
      %p193 = scmp.eq.s32.totalorder %s41, 0
      %p194 = por %p192, %p193
      %s196 = sadd.s32 %s195, 1
      %p199 = scmp.eq.s32.totalorder %s35, 1
      %p200 = scmp.ne.s32.totalorder %s195, %s197
      %p201 = scmp.eq.s32.totalorder %s35, 0
      %p202 = por %p200, %p201
      %p203 = scmp.ne.s32.totalorder %s195, %s197
      %p204 = scmp.eq.s32.totalorder %s40, 1
      %p205 = por %p203, %p204
      %p206 = scmp.ne.s32.totalorder %s197, %s198
      %p207 = scmp.eq.s32.totalorder %s40, 0
      %p208 = por %p206, %p207
      %p209 = scmp.ne.s32.totalorder %s197, %s198
      %p210 = scmp.eq.s32.totalorder %s41, 1
      %p211 = por %p209, %p210
      %p213 = scmp.ne.s32.totalorder %s198, %s212
      %p214 = scmp.eq.s32.totalorder %s41, 0
      %p215 = por %p213, %p214
      %s217 = sadd.s32 %s216, 1
      %p220 = scmp.eq.s32.totalorder %s35, 1
      %p221 = scmp.ne.s32.totalorder %s216, %s218
      %p222 = scmp.eq.s32.totalorder %s35, 0
      %p223 = por %p221, %p222
      %p224 = scmp.ne.s32.totalorder %s216, %s218
      %p225 = scmp.eq.s32.totalorder %s40, 1
      %p226 = por %p224, %p225
      %p227 = scmp.ne.s32.totalorder %s218, %s219
      %p228 = scmp.eq.s32.totalorder %s40, 0
      %p229 = por %p227, %p228
      %p230 = scmp.ne.s32.totalorder %s218, %s219
      %p231 = scmp.eq.s32.totalorder %s41, 1
      %p232 = por %p230, %p231
      %p234 = scmp.ne.s32.totalorder %s219, %s233
      %p235 = scmp.eq.s32.totalorder %s41, 0
      %p236 = por %p234, %p235
      %s238 = sadd.s32 %s237, 1
      %p241 = scmp.eq.s32.totalorder %s35, 1
      %p242 = scmp.ne.s32.totalorder %s237, %s239
      %p243 = scmp.eq.s32.totalorder %s35, 0
      %p244 = por %p242, %p243
      %p245 = scmp.ne.s32.totalorder %s237, %s239
      %p246 = scmp.eq.s32.totalorder %s40, 1
      %p247 = por %p245, %p246
      %p248 = scmp.ne.s32.totalorder %s239, %s240
      %p249 = scmp.eq.s32.totalorder %s40, 0
      %p250 = por %p248, %p249
      %p251 = scmp.ne.s32.totalorder %s239, %s240
      %p252 = scmp.eq.s32.totalorder %s41, 1
      %p253 = por %p251, %p252
      %p255 = scmp.ne.s32.totalorder %s240, %s254
      %p256 = scmp.eq.s32.totalorder %s41, 0
      %p257 = por %p255, %p256
      %s259 = sadd.s32 %s258, 1
      %p262 = scmp.eq.s32.totalorder %s35, 1
      %p263 = scmp.ne.s32.totalorder %s258, %s260
      %p264 = scmp.eq.s32.totalorder %s35, 0
      %p265 = por %p263, %p264
      %p266 = scmp.ne.s32.totalorder %s258, %s260
      %p267 = scmp.eq.s32.totalorder %s40, 1
      %p268 = por %p266, %p267
      %p269 = scmp.ne.s32.totalorder %s260, %s261
      %p270 = scmp.eq.s32.totalorder %s40, 0
      %p271 = por %p269, %p270
      %p272 = scmp.ne.s32.totalorder %s260, %s261
      %p273 = scmp.eq.s32.totalorder %s41, 1
      %p274 = por %p272, %p273
      %p276 = scmp.ne.s32.totalorder %s261, %s275
      %p277 = scmp.eq.s32.totalorder %s41, 0
      %p278 = por %p276, %p277
      %s280 = sadd.s32 %s279, 1
      %p283 = scmp.eq.s32.totalorder %s35, 1
      %p284 = scmp.ne.s32.totalorder %s279, %s281
      %p285 = scmp.eq.s32.totalorder %s35, 0
      %p286 = por %p284, %p285
      %p287 = scmp.ne.s32.totalorder %s279, %s281
      %p288 = scmp.eq.s32.totalorder %s40, 1
      %p289 = por %p287, %p288
      %p290 = scmp.ne.s32.totalorder %s281, %s282
      %p291 = scmp.eq.s32.totalorder %s40, 0
      %p292 = por %p290, %p291
      %p293 = scmp.ne.s32.totalorder %s281, %s282
      %p294 = scmp.eq.s32.totalorder %s41, 1
      %p295 = por %p293, %p294
      %p297 = scmp.ne.s32.totalorder %s282, %s296
      %p298 = scmp.eq.s32.totalorder %s41, 0
      %p299 = por %p297, %p298
      %s301 = sadd.s32 %s300, 1
      %p304 = scmp.eq.s32.totalorder %s35, 1
      %p305 = scmp.ne.s32.totalorder %s300, %s302
      %p306 = scmp.eq.s32.totalorder %s35, 0
      %p307 = por %p305, %p306
      %p308 = scmp.ne.s32.totalorder %s300, %s302
      %p309 = scmp.eq.s32.totalorder %s40, 1
      %p310 = por %p308, %p309
      %p311 = scmp.ne.s32.totalorder %s302, %s303
      %p312 = scmp.eq.s32.totalorder %s40, 0
      %p313 = por %p311, %p312
      %p314 = scmp.ne.s32.totalorder %s302, %s303
      %p315 = scmp.eq.s32.totalorder %s41, 1
      %p316 = por %p314, %p315
      %p318 = scmp.ne.s32.totalorder %s303, %s317
      %p319 = scmp.eq.s32.totalorder %s41, 0
      %p320 = por %p318, %p319
      %s322 = sadd.s32 %s321, 1
      %p325 = scmp.eq.s32.totalorder %s35, 1
      %p326 = scmp.ne.s32.totalorder %s321, %s323
      %p327 = scmp.eq.s32.totalorder %s35, 0
      %p328 = por %p326, %p327
      %p329 = scmp.ne.s32.totalorder %s321, %s323
      %p330 = scmp.eq.s32.totalorder %s40, 1
      %p331 = por %p329, %p330
      %p332 = scmp.ne.s32.totalorder %s323, %s324
      %p333 = scmp.eq.s32.totalorder %s40, 0
      %p334 = por %p332, %p333
      %p335 = scmp.ne.s32.totalorder %s323, %s324
      %p336 = scmp.eq.s32.totalorder %s41, 1
      %p337 = por %p335, %p336
      %p339 = scmp.ne.s32.totalorder %s324, %s338
      %p340 = scmp.eq.s32.totalorder %s41, 0
      %p341 = por %p339, %p340
      %s343 = sadd.s32 %s342, 1
      %p346 = scmp.eq.s32.totalorder %s35, 1
      %p347 = scmp.ne.s32.totalorder %s342, %s344
      %p348 = scmp.eq.s32.totalorder %s35, 0
      %p349 = por %p347, %p348
      %p350 = scmp.ne.s32.totalorder %s342, %s344
      %p351 = scmp.eq.s32.totalorder %s40, 1
      %p352 = por %p350, %p351
      %p353 = scmp.ne.s32.totalorder %s344, %s345
      %p354 = scmp.eq.s32.totalorder %s40, 0
      %p355 = por %p353, %p354
      %p356 = scmp.ne.s32.totalorder %s344, %s345
      %p357 = scmp.eq.s32.totalorder %s41, 1
      %p358 = por %p356, %p357
      %p360 = scmp.ne.s32.totalorder %s345, %s359
      %p361 = scmp.eq.s32.totalorder %s41, 0
      %p362 = por %p360, %p361
      %s364 = sadd.s32 %s363, 1
      %p367 = scmp.eq.s32.totalorder %s35, 1
      %p368 = scmp.ne.s32.totalorder %s363, %s365
      %p369 = scmp.eq.s32.totalorder %s35, 0
      %p370 = por %p368, %p369
      %p371 = scmp.ne.s32.totalorder %s363, %s365
      %p372 = scmp.eq.s32.totalorder %s40, 1
      %p373 = por %p371, %p372
      %p374 = scmp.ne.s32.totalorder %s365, %s366
      %p375 = scmp.eq.s32.totalorder %s40, 0
      %p376 = por %p374, %p375
      %p377 = scmp.ne.s32.totalorder %s365, %s366
      %p378 = scmp.eq.s32.totalorder %s41, 1
      %p379 = por %p377, %p378
      %p381 = scmp.ne.s32.totalorder %s366, %s380
      %p382 = scmp.eq.s32.totalorder %s41, 0
      %p383 = por %p381, %p382
      %s385 = sadd.s32 %s384, 1
      %p388 = scmp.eq.s32.totalorder %s35, 1
      %p389 = scmp.ne.s32.totalorder %s384, %s386
      %p390 = scmp.eq.s32.totalorder %s35, 0
      %p391 = por %p389, %p390
      %p392 = scmp.ne.s32.totalorder %s384, %s386
      %p393 = scmp.eq.s32.totalorder %s40, 1
      %p394 = por %p392, %p393
      %p395 = scmp.ne.s32.totalorder %s386, %s387
      %p396 = scmp.eq.s32.totalorder %s40, 0
      %p397 = por %p395, %p396
      %p398 = scmp.ne.s32.totalorder %s386, %s387
      %p399 = scmp.eq.s32.totalorder %s41, 1
      %p400 = por %p398, %p399
      %p402 = scmp.ne.s32.totalorder %s387, %s401
      %p403 = scmp.eq.s32.totalorder %s41, 0
      %p404 = por %p402, %p403
      %s406 = sadd.s32 %s405, 1
      %p409 = scmp.eq.s32.totalorder %s35, 1
      %p410 = scmp.ne.s32.totalorder %s405, %s407
      %p411 = scmp.eq.s32.totalorder %s35, 0
      %p412 = por %p410, %p411
      %p413 = scmp.ne.s32.totalorder %s405, %s407
      %p414 = scmp.eq.s32.totalorder %s40, 1
      %p415 = por %p413, %p414
      %p416 = scmp.ne.s32.totalorder %s407, %s408
      %p417 = scmp.eq.s32.totalorder %s40, 0
      %p418 = por %p416, %p417
      %p419 = scmp.ne.s32.totalorder %s407, %s408
      %p420 = scmp.eq.s32.totalorder %s41, 1
      %p421 = por %p419, %p420
      %p423 = scmp.ne.s32.totalorder %s408, %s422
      %p424 = scmp.eq.s32.totalorder %s41, 0
      %p425 = por %p423, %p424
      %s427 = sadd.s32 %s426, 1
      %p430 = scmp.eq.s32.totalorder %s35, 1
      %p431 = scmp.ne.s32.totalorder %s426, %s428
      %p432 = scmp.eq.s32.totalorder %s35, 0
      %p433 = por %p431, %p432
      %p434 = scmp.ne.s32.totalorder %s426, %s428
      %p435 = scmp.eq.s32.totalorder %s40, 1
      %p436 = por %p434, %p435
      %p437 = scmp.ne.s32.totalorder %s428, %s429
      %p438 = scmp.eq.s32.totalorder %s40, 0
      %p439 = por %p437, %p438
      %p440 = scmp.ne.s32.totalorder %s428, %s429
      %p441 = scmp.eq.s32.totalorder %s41, 1
      %p442 = por %p440, %p441
      %p444 = scmp.ne.s32.totalorder %s429, %s443
      %p445 = scmp.eq.s32.totalorder %s41, 0
      %p446 = por %p444, %p445
      %s448 = sadd.s32 %s447, 1
      %p451 = scmp.eq.s32.totalorder %s35, 1
      %p452 = scmp.ne.s32.totalorder %s447, %s449
      %p453 = scmp.eq.s32.totalorder %s35, 0
      %p454 = por %p452, %p453
      %p455 = scmp.ne.s32.totalorder %s447, %s449
      %p456 = scmp.eq.s32.totalorder %s40, 1
      %p457 = por %p455, %p456
      %p458 = scmp.ne.s32.totalorder %s449, %s450
      %p459 = scmp.eq.s32.totalorder %s40, 0
      %p460 = por %p458, %p459
      %p461 = scmp.ne.s32.totalorder %s449, %s450
      %p462 = scmp.eq.s32.totalorder %s41, 1
      %p463 = por %p461, %p462
      %p465 = scmp.ne.s32.totalorder %s450, %s464
      %p466 = scmp.eq.s32.totalorder %s41, 0
      %p467 = por %p465, %p466
      %s468 = ssub.s32 %s35, %s42
      %p469 = scmp.eq.s32.totalorder %s468, 0
      %s471 = sadd.s32 %s470, 1
      %s472 = scalar_select %p469, %s470, %s471
      %p475 = pneg %p469
      %p476 = scmp.eq.s32.totalorder %s35, 1
      %p477 = por %p475, %p476
      %p478 = scmp.ne.s32.totalorder %s470, %s473
      %p479 = scmp.eq.s32.totalorder %s35, 0
      %p480 = por %p478, %p479
      %p481 = scmp.ne.s32.totalorder %s470, %s473
      %p482 = scmp.eq.s32.totalorder %s40, 1
      %p483 = por %p481, %p482
      %p484 = scmp.ne.s32.totalorder %s473, %s474
      %p485 = scmp.eq.s32.totalorder %s40, 0
      %p486 = por %p484, %p485
      %p487 = scmp.ne.s32.totalorder %s473, %s474
      %p488 = scmp.eq.s32.totalorder %s41, 1
      %p489 = por %p487, %p488
      %p491 = scmp.ne.s32.totalorder %s474, %s490
      %p492 = scmp.eq.s32.totalorder %s41, 0
      %p493 = por %p491, %p492
      %p494 = scmp.le.s32.totalorder 1, %s35
      %p495 = scmp.lt.s32.totalorder %s35, 3
      %p496 = pnand %p494, %p495
      %p497 = pneg %p496
      // Predicated region
      $region9: #{sa_model_forward.1} parent=5 // pred_check
        _
      $region10: #{sa_model_forward.1} parent=5 // pred_check_branch
        %499 = sbr.rel (%p496) target = $region12
      $region11: #{sa_model_forward.1} parent=5 // pred_region
        %s500 = ssub.s32 %s35, 1
        // Predicated region
        $region13: #{sa_model_forward.1} parent=11 // pred_check
          %p501 = pneg %p82
        $region14: #{sa_model_forward.1} parent=11 // pred_check_branch
          %503 = sbr.rel (%p501) target = $region16
        $region15: #{sa_model_forward.1} parent=11 // pred_region
          %505 = vsyncadd [#allocation10], 0
          %s506 = sshll.u32 %s1, 4
          %s507 = int_to_ptr.hbm [resolvable:$true] %s506
          %s508 = sshll.u32 [#allocation9], 4
          %s509 = int_to_ptr.vmem [resolvable:$true] %s508
          %514 = dma.hbm_to_vmem [thread:$0]  %s507, 896, %s509, [#allocation10], 128, 128, 8
        $region16: #{sa_model_forward.1} parent=11 // pred_fallthru
          _
        // Predicated region
        $region17: #{sa_model_forward.1} parent=11 // pred_check
          %p515 = pneg %p103
        $region18: #{sa_model_forward.1} parent=11 // pred_check_branch
          %517 = sbr.rel (%p515) target = $region20
        $region19: #{sa_model_forward.1} parent=11 // pred_region
          _
        $region20: #{sa_model_forward.1} parent=11 // pred_fallthru
          _
        // Predicated region
        $region21: #{sa_model_forward.1} parent=11 // pred_check
          %p518 = pneg %p124
        $region22: #{sa_model_forward.1} parent=11 // pred_check_branch
          %520 = sbr.rel (%p518) target = $region24
        $region23: #{sa_model_forward.1} parent=11 // pred_region
          _
        $region24: #{sa_model_forward.1} parent=11 // pred_fallthru
          _
        // Predicated region
        $region25: #{sa_model_forward.1} parent=11 // pred_check
          %p521 = pneg %p145
        $region26: #{sa_model_forward.1} parent=11 // pred_check_branch
          %523 = sbr.rel (%p521) target = $region28
        $region27: #{sa_model_forward.1} parent=11 // pred_region
          _
        $region28: #{sa_model_forward.1} parent=11 // pred_fallthru
          _
        // Predicated region
        $region29: #{sa_model_forward.1} parent=11 // pred_check
          %p524 = pneg %p166
        $region30: #{sa_model_forward.1} parent=11 // pred_check_branch
          %526 = sbr.rel (%p524) target = $region32
        $region31: #{sa_model_forward.1} parent=11 // pred_region
          _
        $region32: #{sa_model_forward.1} parent=11 // pred_fallthru
          _
        // Predicated region
        $region33: #{sa_model_forward.1} parent=11 // pred_check
          %p527 = pneg %p187
        $region34: #{sa_model_forward.1} parent=11 // pred_check_branch
          %529 = sbr.rel (%p527) target = $region36
        $region35: #{sa_model_forward.1} parent=11 // pred_region
          %531 = vsyncadd [#allocation13], 0
          %s533 = sshll.u32 %s6, 4
          %s534 = int_to_ptr.hbm [resolvable:$true] %s533
          %s535 = sshll.u32 [#allocation12], 4
          %s536 = int_to_ptr.vmem [resolvable:$true] %s535
          %538 = dma.hbm_to_vmem [thread:$0]  %s534, 16, %s536, [#allocation13]
        $region36: #{sa_model_forward.1} parent=11 // pred_fallthru
          _
        // Predicated region
        $region37: #{sa_model_forward.1} parent=11 // pred_check
          %p539 = pneg %p208
        $region38: #{sa_model_forward.1} parent=11 // pred_check_branch
          %541 = sbr.rel (%p539) target = $region40
        $region39: #{sa_model_forward.1} parent=11 // pred_region
          _
        $region40: #{sa_model_forward.1} parent=11 // pred_fallthru
          _
        // Predicated region
        $region41: #{sa_model_forward.1} parent=11 // pred_check
          %p542 = pneg %p229
        $region42: #{sa_model_forward.1} parent=11 // pred_check_branch
          %544 = sbr.rel (%p542) target = $region44
        $region43: #{sa_model_forward.1} parent=11 // pred_region
          _
        $region44: #{sa_model_forward.1} parent=11 // pred_fallthru
          _
        // Predicated region
        $region45: #{sa_model_forward.1} parent=11 // pred_check
          %p545 = pneg %p250
        $region46: #{sa_model_forward.1} parent=11 // pred_check_branch
          %547 = sbr.rel (%p545) target = $region48
        $region47: #{sa_model_forward.1} parent=11 // pred_region
          %549 = vsyncadd [#allocation13], 0
          %s550 = sshll.u32 %s9, 4
          %s551 = int_to_ptr.hbm [resolvable:$true] %s550
          %s552 = sshll.u32 [#allocation14], 4
          %s553 = int_to_ptr.vmem [resolvable:$true] %s552
          %558 = dma.hbm_to_vmem [thread:$0]  %s551, 256, %s553, [#allocation13], 128, 128, 8
        $region48: #{sa_model_forward.1} parent=11 // pred_fallthru
          _
        // Predicated region
        $region49: #{sa_model_forward.1} parent=11 // pred_check
          %p559 = pneg %p271
        $region50: #{sa_model_forward.1} parent=11 // pred_check_branch
          %561 = sbr.rel (%p559) target = $region52
        $region51: #{sa_model_forward.1} parent=11 // pred_region
          _
        $region52: #{sa_model_forward.1} parent=11 // pred_fallthru
          _
        // Predicated region
        $region53: #{sa_model_forward.1} parent=11 // pred_check
          %p562 = pneg %p292
        $region54: #{sa_model_forward.1} parent=11 // pred_check_branch
          %564 = sbr.rel (%p562) target = $region56
        $region55: #{sa_model_forward.1} parent=11 // pred_region
          %566 = vsyncadd [#allocation16], 0
          %s567 = sshll.u32 %s11, 4
          %s568 = int_to_ptr.hbm [resolvable:$true] %s567
          %s569 = sshll.u32 [#allocation15], 4
          %s570 = int_to_ptr.vmem [resolvable:$true] %s569
          %575 = dma.hbm_to_vmem [thread:$0]  %s568, 3072, %s570, [#allocation16], 128, 128, 8
        $region56: #{sa_model_forward.1} parent=11 // pred_fallthru
          _
        // Predicated region
        $region57: #{sa_model_forward.1} parent=11 // pred_check
          %p576 = pneg %p313
        $region58: #{sa_model_forward.1} parent=11 // pred_check_branch
          %578 = sbr.rel (%p576) target = $region60
        $region59: #{sa_model_forward.1} parent=11 // pred_region
          _
        $region60: #{sa_model_forward.1} parent=11 // pred_fallthru
          _
        // Predicated region
        $region61: #{sa_model_forward.1} parent=11 // pred_check
          %p579 = pneg %p334
        $region62: #{sa_model_forward.1} parent=11 // pred_check_branch
          %581 = sbr.rel (%p579) target = $region64
        $region63: #{sa_model_forward.1} parent=11 // pred_region
          %583 = vsyncadd [#allocation16], 0
          %s584 = sshll.u32 %s13, 4
          %s585 = int_to_ptr.hbm [resolvable:$true] %s584
          %s586 = sshll.u32 [#allocation17], 4
          %s587 = int_to_ptr.vmem [resolvable:$true] %s586
          %592 = dma.hbm_to_vmem [thread:$0]  %s585, 3072, %s587, [#allocation16], 128, 128, 8
        $region64: #{sa_model_forward.1} parent=11 // pred_fallthru
          _
        // Predicated region
        $region65: #{sa_model_forward.1} parent=11 // pred_check
          %p593 = pneg %p355
        $region66: #{sa_model_forward.1} parent=11 // pred_check_branch
          %595 = sbr.rel (%p593) target = $region68
        $region67: #{sa_model_forward.1} parent=11 // pred_region
          _
        $region68: #{sa_model_forward.1} parent=11 // pred_fallthru
          _
        // Predicated region
        $region69: #{sa_model_forward.1} parent=11 // pred_check
          %p596 = pneg %p376
        $region70: #{sa_model_forward.1} parent=11 // pred_check_branch
          %598 = sbr.rel (%p596) target = $region72
        $region71: #{sa_model_forward.1} parent=11 // pred_region
          _
        $region72: #{sa_model_forward.1} parent=11 // pred_fallthru
          _
        // Predicated region
        $region73: #{sa_model_forward.1} parent=11 // pred_check
          %p599 = pneg %p397
        $region74: #{sa_model_forward.1} parent=11 // pred_check_branch
          %601 = sbr.rel (%p599) target = $region76
        $region75: #{sa_model_forward.1} parent=11 // pred_region
          %603 = vsyncadd [#allocation19], 0
          %s605 = sshll.u32 %s16, 4
          %s606 = int_to_ptr.hbm [resolvable:$true] %s605
          %s607 = sshll.u32 [#allocation18], 4
          %s608 = int_to_ptr.vmem [resolvable:$true] %s607
          %610 = dma.hbm_to_vmem [thread:$0]  %s606, 16, %s608, [#allocation19]
        $region76: #{sa_model_forward.1} parent=11 // pred_fallthru
          _
        // Predicated region
        $region77: #{sa_model_forward.1} parent=11 // pred_check
          %p611 = pneg %p418
        $region78: #{sa_model_forward.1} parent=11 // pred_check_branch
          %613 = sbr.rel (%p611) target = $region80
        $region79: #{sa_model_forward.1} parent=11 // pred_region
          _
        $region80: #{sa_model_forward.1} parent=11 // pred_fallthru
          _
        // Predicated region
        $region81: #{sa_model_forward.1} parent=11 // pred_check
          %p614 = pneg %p439
        $region82: #{sa_model_forward.1} parent=11 // pred_check_branch
          %616 = sbr.rel (%p614) target = $region84
        $region83: #{sa_model_forward.1} parent=11 // pred_region
          %618 = vsyncadd [#allocation19], 0
          %s620 = sshll.u32 %s18, 4
          %s621 = int_to_ptr.hbm [resolvable:$true] %s620
          %s622 = sshll.u32 [#allocation20], 4
          %s623 = int_to_ptr.vmem [resolvable:$true] %s622
          %625 = dma.hbm_to_vmem [thread:$0]  %s621, 16, %s623, [#allocation19]
        $region84: #{sa_model_forward.1} parent=11 // pred_fallthru
          _
        // Predicated region
        $region85: #{sa_model_forward.1} parent=11 // pred_check
          %p626 = pneg %p460
        $region86: #{sa_model_forward.1} parent=11 // pred_check_branch
          %628 = sbr.rel (%p626) target = $region88
        $region87: #{sa_model_forward.1} parent=11 // pred_region
          _
        $region88: #{sa_model_forward.1} parent=11 // pred_fallthru
          _
      $region12: #{sa_model_forward.1} parent=5 // pred_fallthru
        _
      %p629 = scmp.lt.s32.totalorder %s35, 2
      // Predicated region
      $region89: #{sa_model_forward.1} parent=5 // pred_check
        %p630 = pneg %p629
      $region90: #{sa_model_forward.1} parent=5 // pred_check_branch
        %632 = sbr.rel (%p630) target = $region92
      $region91: #{sa_model_forward.1} parent=5 // pred_region
        // Predicated region
        $region93: #{sa_model_forward.1} parent=91 // pred_check
          %p633 = pneg %p55
        $region94: #{sa_model_forward.1} parent=91 // pred_check_branch
          %635 = sbr.rel (%p633) target = $region96
        $region95: #{sa_model_forward.1} parent=91 // pred_region
          %p636 = scmp.lt.s32.totalorder %s35, 1
          %s637 = scalar_select %p636, %s35, 1
          %s638 = smul.addr %s637, 16
          %s639 = smul.addr %s638, 8
          %s640 = scalar_lea.vmem %s0, %s639
        $region96: #{sa_model_forward.1} parent=91 // pred_fallthru
          _
      $region92: #{sa_model_forward.1} parent=5 // pred_fallthru
        _
      %p641 = scmp.le.s32.totalorder 1, %s35
      %p642 = scmp.lt.s32.totalorder %s35, 3
      %p643 = pnand %p641, %p642
      %p644 = pneg %p643
      // Predicated region
      $region97: #{sa_model_forward.1} parent=5 // pred_check
        _
      $region98: #{sa_model_forward.1} parent=5 // pred_check_branch
        %646 = sbr.rel (%p643) target = $region100
      $region99: #{sa_model_forward.1} parent=5 // pred_region
        %s647 = ssub.s32 %s35, 1
        // Predicated region
        $region101: #{sa_model_forward.1} parent=99 // pred_check
          %p648 = pneg %p82
        $region102: #{sa_model_forward.1} parent=99 // pred_check_branch
          %650 = sbr.rel (%p648) target = $region104
        $region103: #{sa_model_forward.1} parent=99 // pred_region
          %652 = dma.done [#allocation10], 896
        $region104: #{sa_model_forward.1} parent=99 // pred_fallthru
          _
        // Predicated region
        $region105: #{sa_model_forward.1} parent=99 // pred_check
          %p653 = pneg %p187
        $region106: #{sa_model_forward.1} parent=99 // pred_check_branch
          %655 = sbr.rel (%p653) target = $region108
        $region107: #{sa_model_forward.1} parent=99 // pred_region
          %657 = dma.done [#allocation13], 16
        $region108: #{sa_model_forward.1} parent=99 // pred_fallthru
          _
        // Predicated region
        $region109: #{sa_model_forward.1} parent=99 // pred_check
          %p658 = pneg %p250
        $region110: #{sa_model_forward.1} parent=99 // pred_check_branch
          %660 = sbr.rel (%p658) target = $region112
        $region111: #{sa_model_forward.1} parent=99 // pred_region
          %662 = dma.done [#allocation13], 256
        $region112: #{sa_model_forward.1} parent=99 // pred_fallthru
          _
        // Predicated region
        $region113: #{sa_model_forward.1} parent=99 // pred_check
          %p663 = pneg %p292
        $region114: #{sa_model_forward.1} parent=99 // pred_check_branch
          %665 = sbr.rel (%p663) target = $region116
        $region115: #{sa_model_forward.1} parent=99 // pred_region
          %667 = dma.done [#allocation16], 3072
        $region116: #{sa_model_forward.1} parent=99 // pred_fallthru
          _
        // Predicated region
        $region117: #{sa_model_forward.1} parent=99 // pred_check
          %p668 = pneg %p334
        $region118: #{sa_model_forward.1} parent=99 // pred_check_branch
          %670 = sbr.rel (%p668) target = $region120
        $region119: #{sa_model_forward.1} parent=99 // pred_region
          %672 = dma.done [#allocation16], 3072
        $region120: #{sa_model_forward.1} parent=99 // pred_fallthru
          _
        // Predicated region
        $region121: #{sa_model_forward.1} parent=99 // pred_check
          %p673 = pneg %p397
        $region122: #{sa_model_forward.1} parent=99 // pred_check_branch
          %675 = sbr.rel (%p673) target = $region124
        $region123: #{sa_model_forward.1} parent=99 // pred_region
          %677 = dma.done [#allocation19], 16
        $region124: #{sa_model_forward.1} parent=99 // pred_fallthru
          _
        // Predicated region
        $region125: #{sa_model_forward.1} parent=99 // pred_check
          %p678 = pneg %p439
        $region126: #{sa_model_forward.1} parent=99 // pred_check_branch
          %680 = sbr.rel (%p678) target = $region128
        $region127: #{sa_model_forward.1} parent=99 // pred_region
          %682 = dma.done [#allocation19], 16
        $region128: #{sa_model_forward.1} parent=99 // pred_fallthru
          _
        %p683 = scmp.lt.s32.totalorder %s40, 1
        %s684 = scalar_select %p683, %s40, 1
        %s685 = smul.addr %s684, 16
        %s686 = smul.addr %s685, 8
        %s687 = scalar_lea.vmem %s0, %s686
        %p688 = pneg %p61
        %p689 = pneg %p58
        %p690 = pneg %p82
        %p691 = pneg %p79
        %p692 = pneg %p103
        %p693 = pneg %p100
        %p694 = pneg %p124
        %p695 = pneg %p121
        %p696 = pneg %p145
        %p697 = pneg %p142
        %p698 = pneg %p166
        %p699 = pneg %p163
        %p700 = pneg %p187
        %p701 = pneg %p184
        %p702 = pneg %p208
        %p703 = pneg %p205
        %p704 = pneg %p229
        %p705 = pneg %p226
        %p706 = pneg %p250
        %p707 = pneg %p247
        %p708 = pneg %p271
        %p709 = pneg %p268
        %p710 = pneg %p292
        %p711 = pneg %p289
        %p712 = pneg %p313
        %p713 = pneg %p310
        %p714 = pneg %p334
        %p715 = pneg %p331
        %p716 = pneg %p355
        %p717 = pneg %p352
        %p718 = pneg %p376
        %p719 = pneg %p373
        %p720 = pneg %p397
        %p721 = pneg %p394
        %p722 = pneg %p418
        %p723 = pneg %p415
        %p724 = pneg %p439
        %p725 = pneg %p436
        %p726 = pneg %p460
        %p727 = pneg %p457
        %p728 = pneg %p486
        %p729 = pneg %p483
        %s730 = sand.u32 %s473, 1
        %s731 = scalar_lea.sflag [#allocation11], %s730
        %s732 = sand.u32 %s473, 1
        %s733 = scalar_lea.vmem [#allocation21], %s732
        %p734 = scmp.lt.s32.totalorder %s40, 1
        %s735 = scalar_select %p734, %s40, 1
        %s736 = smul.addr %s735, 16
        %s737 = smul.addr %s736, 8
        %s738 = scalar_lea.vmem %s0, %s737
        %v739 = vld [vmem:[%s738] sm:$0xff]
        %v740 = vld [vmem:[%s738 + $0x8] sm:$0xff]
        %v741 = vld [vmem:[%s738 + $0x10] sm:$0xff]
        %v742 = vld [vmem:[%s738 + $0x18] sm:$0xff]
        %v743 = vld [vmem:[%s738 + $0x20] sm:$0xff]
        %v744 = vld [vmem:[%s738 + $0x28] sm:$0xff]
        %v745 = vld [vmem:[%s738 + $0x30] sm:$0xff]
        %v746 = vld [vmem:[%s738 + $0x38] sm:$0xff]
        %v747 = vld [vmem:[%s738 + $0x40] sm:$0xff]
        %v748 = vld [vmem:[%s738 + $0x48] sm:$0xff]
        %v749 = vld [vmem:[%s738 + $0x50] sm:$0xff]
        %v750 = vld [vmem:[%s738 + $0x58] sm:$0xff]
        %v751 = vld [vmem:[%s738 + $0x60] sm:$0xff]
        %v752 = vld [vmem:[%s738 + $0x68] sm:$0xff]
        %v753 = vld [vmem:[%s738 + $0x70] sm:$0xff]
        %v754 = vld [vmem:[%s738 + $0x78] sm:$0xff]
        %vm755 = vcmask 57344
        %756 = vst.msk [vmem:[#allocation2] sm:$0x1] %vm755, 0.0
        %757 = vst.msk [vmem:[#allocation2 + $0x81] sm:$0x1] %vm755, 0.0
        %vm758 = vcmask 64512
        %759 = vst.msk [vmem:[#allocation2 + $0x1] sm:$0xff] %vm758, %v739
        %760 = vst.msk [vmem:[#allocation2 + $0x9] sm:$0xff] %vm758, %v740
        %761 = vst.msk [vmem:[#allocation2 + $0x11] sm:$0xff] %vm758, %v741
        %762 = vst.msk [vmem:[#allocation2 + $0x19] sm:$0xff] %vm758, %v742
        %763 = vst.msk [vmem:[#allocation2 + $0x21] sm:$0xff] %vm758, %v743
        %764 = vst.msk [vmem:[#allocation2 + $0x29] sm:$0xff] %vm758, %v744
        %765 = vst.msk [vmem:[#allocation2 + $0x31] sm:$0xff] %vm758, %v745
        %766 = vst.msk [vmem:[#allocation2 + $0x39] sm:$0xff] %vm758, %v746
        %767 = vst.msk [vmem:[#allocation2 + $0x41] sm:$0xff] %vm758, %v747
        %768 = vst.msk [vmem:[#allocation2 + $0x49] sm:$0xff] %vm758, %v748
        %769 = vst.msk [vmem:[#allocation2 + $0x51] sm:$0xff] %vm758, %v749
        %770 = vst.msk [vmem:[#allocation2 + $0x59] sm:$0xff] %vm758, %v750
        %771 = vst.msk [vmem:[#allocation2 + $0x61] sm:$0xff] %vm758, %v751
        %772 = vst.msk [vmem:[#allocation2 + $0x69] sm:$0xff] %vm758, %v752
        %773 = vst.msk [vmem:[#allocation2 + $0x71] sm:$0xff] %vm758, %v753
        %774 = vst.msk [vmem:[#allocation2 + $0x79] sm:$0xff] %vm758, %v754
        %v775 = vld [vmem:[#allocation2] sm:$0xff]
        %v776 = vld [vmem:[#allocation2 + $0x8] sm:$0xff]
        %v777 = vld [vmem:[#allocation2 + $0x10] sm:$0xff]
        %v778 = vld [vmem:[#allocation2 + $0x18] sm:$0xff]
        %v779 = vld [vmem:[#allocation2 + $0x20] sm:$0xff]
        %v780 = vld [vmem:[#allocation2 + $0x28] sm:$0xff]
        %v781 = vld [vmem:[#allocation2 + $0x30] sm:$0xff]
        %v782 = vld [vmem:[#allocation2 + $0x38] sm:$0xff]
        %v783 = vld [vmem:[#allocation2 + $0x40] sm:$0xff]
        %v784 = vld [vmem:[#allocation2 + $0x48] sm:$0xff]
        %v785 = vld [vmem:[#allocation2 + $0x50] sm:$0xff]
        %v786 = vld [vmem:[#allocation2 + $0x58] sm:$0xff]
        %v787 = vld [vmem:[#allocation2 + $0x60] sm:$0xff]
        %v788 = vld [vmem:[#allocation2 + $0x68] sm:$0xff]
        %v789 = vld [vmem:[#allocation2 + $0x70] sm:$0xff]
        %v790 = vld [vmem:[#allocation2 + $0x78] sm:$0xf]
        %v791 = vld [vmem:[#allocation9] sm:$0xff]
        %v792 = vld [vmem:[#allocation2 + $0x1] sm:$0xff]
        %v793 = vld [vmem:[#allocation2 + $0x9] sm:$0xff]
        %v794 = vld [vmem:[#allocation2 + $0x11] sm:$0xff]
        %v795 = vld [vmem:[#allocation2 + $0x19] sm:$0xff]
        %v796 = vld [vmem:[#allocation2 + $0x21] sm:$0xff]
        %v797 = vld [vmem:[#allocation2 + $0x29] sm:$0xff]
        %v798 = vld [vmem:[#allocation2 + $0x31] sm:$0xff]
        %v799 = vld [vmem:[#allocation2 + $0x39] sm:$0xff]
        %v800 = vld [vmem:[#allocation2 + $0x41] sm:$0xff]
        %v801 = vld [vmem:[#allocation2 + $0x49] sm:$0xff]
        %v802 = vld [vmem:[#allocation2 + $0x51] sm:$0xff]
        %v803 = vld [vmem:[#allocation2 + $0x59] sm:$0xff]
        %v804 = vld [vmem:[#allocation2 + $0x61] sm:$0xff]
        %v805 = vld [vmem:[#allocation2 + $0x69] sm:$0xff]
        %v806 = vld [vmem:[#allocation2 + $0x71] sm:$0xff]
        %v807 = vld [vmem:[#allocation2 + $0x79] sm:$0xf]
        %s808 = scalar_lea.vmem [#allocation9], 8
        %v809 = vld [vmem:[%s808] sm:$0xff]
        %v811 = vsel %vm758, %v792, 0
        %v814 = vsel %vm758, %v793, 0
        %v817 = vsel %vm758, %v794, 0
        %v820 = vsel %vm758, %v795, 0
        %v823 = vsel %vm758, %v796, 0
        %v826 = vsel %vm758, %v797, 0
        %v829 = vsel %vm758, %v798, 0
        %v832 = vsel %vm758, %v799, 0
        %v835 = vsel %vm758, %v800, 0
        %v838 = vsel %vm758, %v801, 0
        %v841 = vsel %vm758, %v802, 0
        %v844 = vsel %vm758, %v803, 0
        %v847 = vsel %vm758, %v804, 0
        %v850 = vsel %vm758, %v805, 0
        %v853 = vsel %vm758, %v806, 0
        %v856 = vsel %vm758, %v807, 0
        %858 = vmatpush.msra.mxu0 0.0
        %859 = vmatpush.msra.mxu0 0.0
        %860 = vmatpush.msra.mxu0 0.0
        %861 = vmatpush.msra.mxu0 0.0
        %862 = vmatpush.msra.mxu0 0.0
        %863 = vmatpush.msra.mxu0 0.0
        %864 = vmatpush.msra.mxu0 0.0
        %865 = vmatpush.msra.mxu0 0.0
        %866 = vmatpush.msra.mxu0 0.0
        %867 = vmatpush.msra.mxu0 0.0
        %868 = vmatpush.msra.mxu0 0.0
        %869 = vmatpush.msra.mxu0 0.0
        %870 = vmatpush.msra.mxu0 0.0
        %871 = vmatpush.msra.mxu0 0.0
        %872 = vmatpush.msra.mxu0 0.0
        %873 = vmatpush.msra.mxu0 %v809
        %874 = vmatmul.f32.gmra.mxu0 %v811
        %v875 = vpop.f32.mrf.mxu0
        %v876 = vadd.f32 0.0, %v875
        %877 = vmatmul.f32.gmra.mxu0 %v814
        %v878 = vpop.f32.mrf.mxu0
        %v879 = vadd.f32 0.0, %v878
        %880 = vmatmul.f32.gmra.mxu0 %v817
        %v881 = vpop.f32.mrf.mxu0
        %v882 = vadd.f32 0.0, %v881
        %883 = vmatmul.f32.gmra.mxu0 %v820
        %v884 = vpop.f32.mrf.mxu0
        %v885 = vadd.f32 0.0, %v884
        %886 = vmatmul.f32.gmra.mxu0 %v823
        %v887 = vpop.f32.mrf.mxu0
        %v888 = vadd.f32 0.0, %v887
        %889 = vmatmul.f32.gmra.mxu0 %v826
        %v890 = vpop.f32.mrf.mxu0
        %v891 = vadd.f32 0.0, %v890
        %892 = vmatmul.f32.gmra.mxu0 %v829
        %v893 = vpop.f32.mrf.mxu0
        %v894 = vadd.f32 0.0, %v893
        %895 = vmatmul.f32.gmra.mxu0 %v832
        %v896 = vpop.f32.mrf.mxu0
        %v897 = vadd.f32 0.0, %v896
        %898 = vmatmul.f32.gmra.mxu0 %v835
        %v899 = vpop.f32.mrf.mxu0
        %v900 = vadd.f32 0.0, %v899
        %901 = vmatmul.f32.gmra.mxu0 %v838
        %v902 = vpop.f32.mrf.mxu0
        %v903 = vadd.f32 0.0, %v902
        %904 = vmatmul.f32.gmra.mxu0 %v841
        %v905 = vpop.f32.mrf.mxu0
        %v906 = vadd.f32 0.0, %v905
        %907 = vmatmul.f32.gmra.mxu0 %v844
        %v908 = vpop.f32.mrf.mxu0
        %v909 = vadd.f32 0.0, %v908
        %910 = vmatmul.f32.gmra.mxu0 %v847
        %v911 = vpop.f32.mrf.mxu0
        %v912 = vadd.f32 0.0, %v911
        %913 = vmatmul.f32.gmra.mxu0 %v850
        %v914 = vpop.f32.mrf.mxu0
        %v915 = vadd.f32 0.0, %v914
        %916 = vmatmul.f32.gmra.mxu0 %v853
        %v917 = vpop.f32.mrf.mxu0
        %v918 = vadd.f32 0.0, %v917
        %919 = vmatmul.f32.gmra.mxu0 %v856
        %v920 = vpop.f32.mrf.mxu0
        %v921 = vadd.f32 0.0, %v920
        %922 = vdwg.mxu0
        %v924 = vsel %vm758, %v775, 0
        %v927 = vsel %vm758, %v776, 0
        %v930 = vsel %vm758, %v777, 0
        %v933 = vsel %vm758, %v778, 0
        %v936 = vsel %vm758, %v779, 0
        %v939 = vsel %vm758, %v780, 0
        %v942 = vsel %vm758, %v781, 0
        %v945 = vsel %vm758, %v782, 0
        %v948 = vsel %vm758, %v783, 0
        %v951 = vsel %vm758, %v784, 0
        %v954 = vsel %vm758, %v785, 0
        %v957 = vsel %vm758, %v786, 0
        %v960 = vsel %vm758, %v787, 0
        %v963 = vsel %vm758, %v788, 0
        %v966 = vsel %vm758, %v789, 0
        %v969 = vsel %vm758, %v790, 0
        %971 = vmatpush.msra.mxu0 0.0
        %972 = vmatpush.msra.mxu0 0.0
        %973 = vmatpush.msra.mxu0 0.0
        %974 = vmatpush.msra.mxu0 0.0
        %975 = vmatpush.msra.mxu0 0.0
        %976 = vmatpush.msra.mxu0 0.0
        %977 = vmatpush.msra.mxu0 0.0
        %978 = vmatpush.msra.mxu0 0.0
        %979 = vmatpush.msra.mxu0 0.0
        %980 = vmatpush.msra.mxu0 0.0
        %981 = vmatpush.msra.mxu0 0.0
        %982 = vmatpush.msra.mxu0 0.0
        %983 = vmatpush.msra.mxu0 0.0
        %984 = vmatpush.msra.mxu0 0.0
        %985 = vmatpush.msra.mxu0 0.0
        %986 = vmatpush.msra.mxu0 %v791
        %987 = vmatmul.f32.gmra.mxu0 %v924
        %v988 = vpop.f32.mrf.mxu0
        %v989 = vadd.f32 %v876, %v988
        %990 = vmatmul.f32.gmra.mxu0 %v927
        %v991 = vpop.f32.mrf.mxu0
        %v992 = vadd.f32 %v879, %v991
        %993 = vmatmul.f32.gmra.mxu0 %v930
        %v994 = vpop.f32.mrf.mxu0
        %v995 = vadd.f32 %v882, %v994
        %996 = vmatmul.f32.gmra.mxu0 %v933
        %v997 = vpop.f32.mrf.mxu0
        %v998 = vadd.f32 %v885, %v997
        %999 = vmatmul.f32.gmra.mxu0 %v936
        %v1000 = vpop.f32.mrf.mxu0
        %v1001 = vadd.f32 %v888, %v1000
        %1002 = vmatmul.f32.gmra.mxu0 %v939
        %v1003 = vpop.f32.mrf.mxu0
        %v1004 = vadd.f32 %v891, %v1003
        %1005 = vmatmul.f32.gmra.mxu0 %v942
        %v1006 = vpop.f32.mrf.mxu0
        %v1007 = vadd.f32 %v894, %v1006
        %1008 = vmatmul.f32.gmra.mxu0 %v945
        %v1009 = vpop.f32.mrf.mxu0
        %v1010 = vadd.f32 %v897, %v1009
        %1011 = vmatmul.f32.gmra.mxu0 %v948
        %v1012 = vpop.f32.mrf.mxu0
        %v1013 = vadd.f32 %v900, %v1012
        %1014 = vmatmul.f32.gmra.mxu0 %v951
        %v1015 = vpop.f32.mrf.mxu0
        %v1016 = vadd.f32 %v903, %v1015
        %1017 = vmatmul.f32.gmra.mxu0 %v954
        %v1018 = vpop.f32.mrf.mxu0
        %v1019 = vadd.f32 %v906, %v1018
        %1020 = vmatmul.f32.gmra.mxu0 %v957
        %v1021 = vpop.f32.mrf.mxu0
        %v1022 = vadd.f32 %v909, %v1021
        %1023 = vmatmul.f32.gmra.mxu0 %v960
        %v1024 = vpop.f32.mrf.mxu0
        %v1025 = vadd.f32 %v912, %v1024
        %1026 = vmatmul.f32.gmra.mxu0 %v963
        %v1027 = vpop.f32.mrf.mxu0
        %v1028 = vadd.f32 %v915, %v1027
        %1029 = vmatmul.f32.gmra.mxu0 %v966
        %v1030 = vpop.f32.mrf.mxu0
        %v1031 = vadd.f32 %v918, %v1030
        %1032 = vmatmul.f32.gmra.mxu0 %v969
        %v1033 = vpop.f32.mrf.mxu0
        %v1034 = vadd.f32 %v921, %v1033
        %1035 = vdwg.mxu0
        %v1036 = vld [vmem:[#allocation2 + $0x2] sm:$0xff]
        %v1037 = vld [vmem:[#allocation2 + $0xa] sm:$0xff]
        %v1038 = vld [vmem:[#allocation2 + $0x12] sm:$0xff]
        %v1039 = vld [vmem:[#allocation2 + $0x1a] sm:$0xff]
        %v1040 = vld [vmem:[#allocation2 + $0x22] sm:$0xff]
        %v1041 = vld [vmem:[#allocation2 + $0x2a] sm:$0xff]
        %v1042 = vld [vmem:[#allocation2 + $0x32] sm:$0xff]
        %v1043 = vld [vmem:[#allocation2 + $0x3a] sm:$0xff]
        %v1044 = vld [vmem:[#allocation2 + $0x42] sm:$0xff]
        %v1045 = vld [vmem:[#allocation2 + $0x4a] sm:$0xff]
        %v1046 = vld [vmem:[#allocation2 + $0x52] sm:$0xff]
        %v1047 = vld [vmem:[#allocation2 + $0x5a] sm:$0xff]
        %v1048 = vld [vmem:[#allocation2 + $0x62] sm:$0xff]
        %v1049 = vld [vmem:[#allocation2 + $0x6a] sm:$0xff]
        %v1050 = vld [vmem:[#allocation2 + $0x72] sm:$0xff]
        %v1051 = vld [vmem:[#allocation2 + $0x7a] sm:$0xf]
        %s1052 = scalar_lea.vmem [#allocation9], 16
        %v1053 = vld [vmem:[%s1052] sm:$0xff]
        %v1055 = vsel %vm758, %v1036, 0
        %v1058 = vsel %vm758, %v1037, 0
        %v1061 = vsel %vm758, %v1038, 0
        %v1064 = vsel %vm758, %v1039, 0
        %v1067 = vsel %vm758, %v1040, 0
        %v1070 = vsel %vm758, %v1041, 0
        %v1073 = vsel %vm758, %v1042, 0
        %v1076 = vsel %vm758, %v1043, 0
        %v1079 = vsel %vm758, %v1044, 0
        %v1082 = vsel %vm758, %v1045, 0
        %v1085 = vsel %vm758, %v1046, 0
        %v1088 = vsel %vm758, %v1047, 0
        %v1091 = vsel %vm758, %v1048, 0
        %v1094 = vsel %vm758, %v1049, 0
        %v1097 = vsel %vm758, %v1050, 0
        %v1100 = vsel %vm758, %v1051, 0
        %1102 = vmatpush.msra.mxu0 0.0
        %1103 = vmatpush.msra.mxu0 0.0
        %1104 = vmatpush.msra.mxu0 0.0
        %1105 = vmatpush.msra.mxu0 0.0
        %1106 = vmatpush.msra.mxu0 0.0
        %1107 = vmatpush.msra.mxu0 0.0
        %1108 = vmatpush.msra.mxu0 0.0
        %1109 = vmatpush.msra.mxu0 0.0
        %1110 = vmatpush.msra.mxu0 0.0
        %1111 = vmatpush.msra.mxu0 0.0
        %1112 = vmatpush.msra.mxu0 0.0
        %1113 = vmatpush.msra.mxu0 0.0
        %1114 = vmatpush.msra.mxu0 0.0
        %1115 = vmatpush.msra.mxu0 0.0
        %1116 = vmatpush.msra.mxu0 0.0
        %1117 = vmatpush.msra.mxu0 %v1053
        %1118 = vmatmul.f32.gmra.mxu0 %v1055
        %v1119 = vpop.f32.mrf.mxu0
        %v1120 = vadd.f32 0.0, %v1119
        %1121 = vmatmul.f32.gmra.mxu0 %v1058
        %v1122 = vpop.f32.mrf.mxu0
        %v1123 = vadd.f32 0.0, %v1122
        %1124 = vmatmul.f32.gmra.mxu0 %v1061
        %v1125 = vpop.f32.mrf.mxu0
        %v1126 = vadd.f32 0.0, %v1125
        %1127 = vmatmul.f32.gmra.mxu0 %v1064
        %v1128 = vpop.f32.mrf.mxu0
        %v1129 = vadd.f32 0.0, %v1128
        %1130 = vmatmul.f32.gmra.mxu0 %v1067
        %v1131 = vpop.f32.mrf.mxu0
        %v1132 = vadd.f32 0.0, %v1131
        %1133 = vmatmul.f32.gmra.mxu0 %v1070
        %v1134 = vpop.f32.mrf.mxu0
        %v1135 = vadd.f32 0.0, %v1134
        %1136 = vmatmul.f32.gmra.mxu0 %v1073
        %v1137 = vpop.f32.mrf.mxu0
        %v1138 = vadd.f32 0.0, %v1137
        %1139 = vmatmul.f32.gmra.mxu0 %v1076
        %v1140 = vpop.f32.mrf.mxu0
        %v1141 = vadd.f32 0.0, %v1140
        %1142 = vmatmul.f32.gmra.mxu0 %v1079
        %v1143 = vpop.f32.mrf.mxu0
        %v1144 = vadd.f32 0.0, %v1143
        %1145 = vmatmul.f32.gmra.mxu0 %v1082
        %v1146 = vpop.f32.mrf.mxu0
        %v1147 = vadd.f32 0.0, %v1146
        %1148 = vmatmul.f32.gmra.mxu0 %v1085
        %v1149 = vpop.f32.mrf.mxu0
        %v1150 = vadd.f32 0.0, %v1149
        %1151 = vmatmul.f32.gmra.mxu0 %v1088
        %v1152 = vpop.f32.mrf.mxu0
        %v1153 = vadd.f32 0.0, %v1152
        %1154 = vmatmul.f32.gmra.mxu0 %v1091
        %v1155 = vpop.f32.mrf.mxu0
        %v1156 = vadd.f32 0.0, %v1155
        %1157 = vmatmul.f32.gmra.mxu0 %v1094
        %v1158 = vpop.f32.mrf.mxu0
        %v1159 = vadd.f32 0.0, %v1158
        %1160 = vmatmul.f32.gmra.mxu0 %v1097
        %v1161 = vpop.f32.mrf.mxu0
        %v1162 = vadd.f32 0.0, %v1161
        %1163 = vmatmul.f32.gmra.mxu0 %v1100
        %v1164 = vpop.f32.mrf.mxu0
        %v1165 = vadd.f32 0.0, %v1164
        %1166 = vdwg.mxu0
        %v1167 = vadd.f32 %v989, %v1120
        %v1168 = vadd.f32 %v992, %v1123
        %v1169 = vadd.f32 %v995, %v1126
        %v1170 = vadd.f32 %v998, %v1129
        %v1171 = vadd.f32 %v1001, %v1132
        %v1172 = vadd.f32 %v1004, %v1135
        %v1173 = vadd.f32 %v1007, %v1138
        %v1174 = vadd.f32 %v1010, %v1141
        %v1175 = vadd.f32 %v1013, %v1144
        %v1176 = vadd.f32 %v1016, %v1147
        %v1177 = vadd.f32 %v1019, %v1150
        %v1178 = vadd.f32 %v1022, %v1153
        %v1179 = vadd.f32 %v1025, %v1156
        %v1180 = vadd.f32 %v1028, %v1159
        %v1181 = vadd.f32 %v1031, %v1162
        %v1182 = vadd.f32 %v1034, %v1165
        %v1183 = vld [vmem:[#allocation2 + $0x3] sm:$0xff]
        %v1184 = vld [vmem:[#allocation2 + $0xb] sm:$0xff]
        %v1185 = vld [vmem:[#allocation2 + $0x13] sm:$0xff]
        %v1186 = vld [vmem:[#allocation2 + $0x1b] sm:$0xff]
        %v1187 = vld [vmem:[#allocation2 + $0x23] sm:$0xff]
        %v1188 = vld [vmem:[#allocation2 + $0x2b] sm:$0xff]
        %v1189 = vld [vmem:[#allocation2 + $0x33] sm:$0xff]
        %v1190 = vld [vmem:[#allocation2 + $0x3b] sm:$0xff]
        %v1191 = vld [vmem:[#allocation2 + $0x43] sm:$0xff]
        %v1192 = vld [vmem:[#allocation2 + $0x4b] sm:$0xff]
        %v1193 = vld [vmem:[#allocation2 + $0x53] sm:$0xff]
        %v1194 = vld [vmem:[#allocation2 + $0x5b] sm:$0xff]
        %v1195 = vld [vmem:[#allocation2 + $0x63] sm:$0xff]
        %v1196 = vld [vmem:[#allocation2 + $0x6b] sm:$0xff]
        %v1197 = vld [vmem:[#allocation2 + $0x73] sm:$0xff]
        %v1198 = vld [vmem:[#allocation2 + $0x7b] sm:$0xf]
        %s1199 = scalar_lea.vmem [#allocation9], 24
        %v1200 = vld [vmem:[%s1199] sm:$0xff]
        %v1202 = vsel %vm758, %v1183, 0
        %v1205 = vsel %vm758, %v1184, 0
        %v1208 = vsel %vm758, %v1185, 0
        %v1211 = vsel %vm758, %v1186, 0
        %v1214 = vsel %vm758, %v1187, 0
        %v1217 = vsel %vm758, %v1188, 0
        %v1220 = vsel %vm758, %v1189, 0
        %v1223 = vsel %vm758, %v1190, 0
        %v1226 = vsel %vm758, %v1191, 0
        %v1229 = vsel %vm758, %v1192, 0
        %v1232 = vsel %vm758, %v1193, 0
        %v1235 = vsel %vm758, %v1194, 0
        %v1238 = vsel %vm758, %v1195, 0
        %v1241 = vsel %vm758, %v1196, 0
        %v1244 = vsel %vm758, %v1197, 0
        %v1247 = vsel %vm758, %v1198, 0
        %1249 = vmatpush.msra.mxu0 0.0
        %1250 = vmatpush.msra.mxu0 0.0
        %1251 = vmatpush.msra.mxu0 0.0
        %1252 = vmatpush.msra.mxu0 0.0
        %1253 = vmatpush.msra.mxu0 0.0
        %1254 = vmatpush.msra.mxu0 0.0
        %1255 = vmatpush.msra.mxu0 0.0
        %1256 = vmatpush.msra.mxu0 0.0
        %1257 = vmatpush.msra.mxu0 0.0
        %1258 = vmatpush.msra.mxu0 0.0
        %1259 = vmatpush.msra.mxu0 0.0
        %1260 = vmatpush.msra.mxu0 0.0
        %1261 = vmatpush.msra.mxu0 0.0
        %1262 = vmatpush.msra.mxu0 0.0
        %1263 = vmatpush.msra.mxu0 0.0
        %1264 = vmatpush.msra.mxu0 %v1200
        %1265 = vmatmul.f32.gmra.mxu0 %v1202
        %v1266 = vpop.f32.mrf.mxu0
        %v1267 = vadd.f32 0.0, %v1266
        %1268 = vmatmul.f32.gmra.mxu0 %v1205
        %v1269 = vpop.f32.mrf.mxu0
        %v1270 = vadd.f32 0.0, %v1269
        %1271 = vmatmul.f32.gmra.mxu0 %v1208
        %v1272 = vpop.f32.mrf.mxu0
        %v1273 = vadd.f32 0.0, %v1272
        %1274 = vmatmul.f32.gmra.mxu0 %v1211
        %v1275 = vpop.f32.mrf.mxu0
        %v1276 = vadd.f32 0.0, %v1275
        %1277 = vmatmul.f32.gmra.mxu0 %v1214
        %v1278 = vpop.f32.mrf.mxu0
        %v1279 = vadd.f32 0.0, %v1278
        %1280 = vmatmul.f32.gmra.mxu0 %v1217
        %v1281 = vpop.f32.mrf.mxu0
        %v1282 = vadd.f32 0.0, %v1281
        %1283 = vmatmul.f32.gmra.mxu0 %v1220
        %v1284 = vpop.f32.mrf.mxu0
        %v1285 = vadd.f32 0.0, %v1284
        %1286 = vmatmul.f32.gmra.mxu0 %v1223
        %v1287 = vpop.f32.mrf.mxu0
        %v1288 = vadd.f32 0.0, %v1287
        %1289 = vmatmul.f32.gmra.mxu0 %v1226
        %v1290 = vpop.f32.mrf.mxu0
        %v1291 = vadd.f32 0.0, %v1290
        %1292 = vmatmul.f32.gmra.mxu0 %v1229
        %v1293 = vpop.f32.mrf.mxu0
        %v1294 = vadd.f32 0.0, %v1293
        %1295 = vmatmul.f32.gmra.mxu0 %v1232
        %v1296 = vpop.f32.mrf.mxu0
        %v1297 = vadd.f32 0.0, %v1296
        %1298 = vmatmul.f32.gmra.mxu0 %v1235
        %v1299 = vpop.f32.mrf.mxu0
        %v1300 = vadd.f32 0.0, %v1299
        %1301 = vmatmul.f32.gmra.mxu0 %v1238
        %v1302 = vpop.f32.mrf.mxu0
        %v1303 = vadd.f32 0.0, %v1302
        %1304 = vmatmul.f32.gmra.mxu0 %v1241
        %v1305 = vpop.f32.mrf.mxu0
        %v1306 = vadd.f32 0.0, %v1305
        %1307 = vmatmul.f32.gmra.mxu0 %v1244
        %v1308 = vpop.f32.mrf.mxu0
        %v1309 = vadd.f32 0.0, %v1308
        %1310 = vmatmul.f32.gmra.mxu0 %v1247
        %v1311 = vpop.f32.mrf.mxu0
        %v1312 = vadd.f32 0.0, %v1311
        %1313 = vdwg.mxu0
        %v1314 = vadd.f32 %v1167, %v1267
        %v1315 = vadd.f32 %v1168, %v1270
        %v1316 = vadd.f32 %v1169, %v1273
        %v1317 = vadd.f32 %v1170, %v1276
        %v1318 = vadd.f32 %v1171, %v1279
        %v1319 = vadd.f32 %v1172, %v1282
        %v1320 = vadd.f32 %v1173, %v1285
        %v1321 = vadd.f32 %v1174, %v1288
        %v1322 = vadd.f32 %v1175, %v1291
        %v1323 = vadd.f32 %v1176, %v1294
        %v1324 = vadd.f32 %v1177, %v1297
        %v1325 = vadd.f32 %v1178, %v1300
        %v1326 = vadd.f32 %v1179, %v1303
        %v1327 = vadd.f32 %v1180, %v1306
        %v1328 = vadd.f32 %v1181, %v1309
        %v1329 = vadd.f32 %v1182, %v1312
        %v1330 = vld [vmem:[#allocation2 + $0x4] sm:$0xff]
        %v1331 = vld [vmem:[#allocation2 + $0xc] sm:$0xff]
        %v1332 = vld [vmem:[#allocation2 + $0x14] sm:$0xff]
        %v1333 = vld [vmem:[#allocation2 + $0x1c] sm:$0xff]
        %v1334 = vld [vmem:[#allocation2 + $0x24] sm:$0xff]
        %v1335 = vld [vmem:[#allocation2 + $0x2c] sm:$0xff]
        %v1336 = vld [vmem:[#allocation2 + $0x34] sm:$0xff]
        %v1337 = vld [vmem:[#allocation2 + $0x3c] sm:$0xff]
        %v1338 = vld [vmem:[#allocation2 + $0x44] sm:$0xff]
        %v1339 = vld [vmem:[#allocation2 + $0x4c] sm:$0xff]
        %v1340 = vld [vmem:[#allocation2 + $0x54] sm:$0xff]
        %v1341 = vld [vmem:[#allocation2 + $0x5c] sm:$0xff]
        %v1342 = vld [vmem:[#allocation2 + $0x64] sm:$0xff]
        %v1343 = vld [vmem:[#allocation2 + $0x6c] sm:$0xff]
        %v1344 = vld [vmem:[#allocation2 + $0x74] sm:$0xff]
        %v1345 = vld [vmem:[#allocation2 + $0x7c] sm:$0xf]
        %s1346 = scalar_lea.vmem [#allocation9], 32
        %v1347 = vld [vmem:[%s1346] sm:$0xff]
        %v1349 = vsel %vm758, %v1330, 0
        %v1352 = vsel %vm758, %v1331, 0
        %v1355 = vsel %vm758, %v1332, 0
        %v1358 = vsel %vm758, %v1333, 0
        %v1361 = vsel %vm758, %v1334, 0
        %v1364 = vsel %vm758, %v1335, 0
        %v1367 = vsel %vm758, %v1336, 0
        %v1370 = vsel %vm758, %v1337, 0
        %v1373 = vsel %vm758, %v1338, 0
        %v1376 = vsel %vm758, %v1339, 0
        %v1379 = vsel %vm758, %v1340, 0
        %v1382 = vsel %vm758, %v1341, 0
        %v1385 = vsel %vm758, %v1342, 0
        %v1388 = vsel %vm758, %v1343, 0
        %v1391 = vsel %vm758, %v1344, 0
        %v1394 = vsel %vm758, %v1345, 0
        %1396 = vmatpush.msra.mxu0 0.0
        %1397 = vmatpush.msra.mxu0 0.0
        %1398 = vmatpush.msra.mxu0 0.0
        %1399 = vmatpush.msra.mxu0 0.0
        %1400 = vmatpush.msra.mxu0 0.0
        %1401 = vmatpush.msra.mxu0 0.0
        %1402 = vmatpush.msra.mxu0 0.0
        %1403 = vmatpush.msra.mxu0 0.0
        %1404 = vmatpush.msra.mxu0 0.0
        %1405 = vmatpush.msra.mxu0 0.0
        %1406 = vmatpush.msra.mxu0 0.0
        %1407 = vmatpush.msra.mxu0 0.0
        %1408 = vmatpush.msra.mxu0 0.0
        %1409 = vmatpush.msra.mxu0 0.0
        %1410 = vmatpush.msra.mxu0 0.0
        %1411 = vmatpush.msra.mxu0 %v1347
        %1412 = vmatmul.f32.gmra.mxu0 %v1349
        %v1413 = vpop.f32.mrf.mxu0
        %v1414 = vadd.f32 0.0, %v1413
        %1415 = vmatmul.f32.gmra.mxu0 %v1352
        %v1416 = vpop.f32.mrf.mxu0
        %v1417 = vadd.f32 0.0, %v1416
        %1418 = vmatmul.f32.gmra.mxu0 %v1355
        %v1419 = vpop.f32.mrf.mxu0
        %v1420 = vadd.f32 0.0, %v1419
        %1421 = vmatmul.f32.gmra.mxu0 %v1358
        %v1422 = vpop.f32.mrf.mxu0
        %v1423 = vadd.f32 0.0, %v1422
        %1424 = vmatmul.f32.gmra.mxu0 %v1361
        %v1425 = vpop.f32.mrf.mxu0
        %v1426 = vadd.f32 0.0, %v1425
        %1427 = vmatmul.f32.gmra.mxu0 %v1364
        %v1428 = vpop.f32.mrf.mxu0
        %v1429 = vadd.f32 0.0, %v1428
        %1430 = vmatmul.f32.gmra.mxu0 %v1367
        %v1431 = vpop.f32.mrf.mxu0
        %v1432 = vadd.f32 0.0, %v1431
        %1433 = vmatmul.f32.gmra.mxu0 %v1370
        %v1434 = vpop.f32.mrf.mxu0
        %v1435 = vadd.f32 0.0, %v1434
        %1436 = vmatmul.f32.gmra.mxu0 %v1373
        %v1437 = vpop.f32.mrf.mxu0
        %v1438 = vadd.f32 0.0, %v1437
        %1439 = vmatmul.f32.gmra.mxu0 %v1376
        %v1440 = vpop.f32.mrf.mxu0
        %v1441 = vadd.f32 0.0, %v1440
        %1442 = vmatmul.f32.gmra.mxu0 %v1379
        %v1443 = vpop.f32.mrf.mxu0
        %v1444 = vadd.f32 0.0, %v1443
        %1445 = vmatmul.f32.gmra.mxu0 %v1382
        %v1446 = vpop.f32.mrf.mxu0
        %v1447 = vadd.f32 0.0, %v1446
        %1448 = vmatmul.f32.gmra.mxu0 %v1385
        %v1449 = vpop.f32.mrf.mxu0
        %v1450 = vadd.f32 0.0, %v1449
        %1451 = vmatmul.f32.gmra.mxu0 %v1388
        %v1452 = vpop.f32.mrf.mxu0
        %v1453 = vadd.f32 0.0, %v1452
        %1454 = vmatmul.f32.gmra.mxu0 %v1391
        %v1455 = vpop.f32.mrf.mxu0
        %v1456 = vadd.f32 0.0, %v1455
        %1457 = vmatmul.f32.gmra.mxu0 %v1394
        %v1458 = vpop.f32.mrf.mxu0
        %v1459 = vadd.f32 0.0, %v1458
        %1460 = vdwg.mxu0
        %v1461 = vadd.f32 %v1314, %v1414
        %v1462 = vadd.f32 %v1315, %v1417
        %v1463 = vadd.f32 %v1316, %v1420
        %v1464 = vadd.f32 %v1317, %v1423
        %v1465 = vadd.f32 %v1318, %v1426
        %v1466 = vadd.f32 %v1319, %v1429
        %v1467 = vadd.f32 %v1320, %v1432
        %v1468 = vadd.f32 %v1321, %v1435
        %v1469 = vadd.f32 %v1322, %v1438
        %v1470 = vadd.f32 %v1323, %v1441
        %v1471 = vadd.f32 %v1324, %v1444
        %v1472 = vadd.f32 %v1325, %v1447
        %v1473 = vadd.f32 %v1326, %v1450
        %v1474 = vadd.f32 %v1327, %v1453
        %v1475 = vadd.f32 %v1328, %v1456
        %v1476 = vadd.f32 %v1329, %v1459
        %v1477 = vld [vmem:[#allocation2 + $0x5] sm:$0xff]
        %v1478 = vld [vmem:[#allocation2 + $0xd] sm:$0xff]
        %v1479 = vld [vmem:[#allocation2 + $0x15] sm:$0xff]
        %v1480 = vld [vmem:[#allocation2 + $0x1d] sm:$0xff]
        %v1481 = vld [vmem:[#allocation2 + $0x25] sm:$0xff]
        %v1482 = vld [vmem:[#allocation2 + $0x2d] sm:$0xff]
        %v1483 = vld [vmem:[#allocation2 + $0x35] sm:$0xff]
        %v1484 = vld [vmem:[#allocation2 + $0x3d] sm:$0xff]
        %v1485 = vld [vmem:[#allocation2 + $0x45] sm:$0xff]
        %v1486 = vld [vmem:[#allocation2 + $0x4d] sm:$0xff]
        %v1487 = vld [vmem:[#allocation2 + $0x55] sm:$0xff]
        %v1488 = vld [vmem:[#allocation2 + $0x5d] sm:$0xff]
        %v1489 = vld [vmem:[#allocation2 + $0x65] sm:$0xff]
        %v1490 = vld [vmem:[#allocation2 + $0x6d] sm:$0xff]
        %v1491 = vld [vmem:[#allocation2 + $0x75] sm:$0xff]
        %v1492 = vld [vmem:[#allocation2 + $0x7d] sm:$0xf]
        %s1493 = scalar_lea.vmem [#allocation9], 40
        %v1494 = vld [vmem:[%s1493] sm:$0xff]
        %v1496 = vsel %vm758, %v1477, 0
        %v1499 = vsel %vm758, %v1478, 0
        %v1502 = vsel %vm758, %v1479, 0
        %v1505 = vsel %vm758, %v1480, 0
        %v1508 = vsel %vm758, %v1481, 0
        %v1511 = vsel %vm758, %v1482, 0
        %v1514 = vsel %vm758, %v1483, 0
        %v1517 = vsel %vm758, %v1484, 0
        %v1520 = vsel %vm758, %v1485, 0
        %v1523 = vsel %vm758, %v1486, 0
        %v1526 = vsel %vm758, %v1487, 0
        %v1529 = vsel %vm758, %v1488, 0
        %v1532 = vsel %vm758, %v1489, 0
        %v1535 = vsel %vm758, %v1490, 0
        %v1538 = vsel %vm758, %v1491, 0
        %v1541 = vsel %vm758, %v1492, 0
        %1543 = vmatpush.msra.mxu0 0.0
        %1544 = vmatpush.msra.mxu0 0.0
        %1545 = vmatpush.msra.mxu0 0.0
        %1546 = vmatpush.msra.mxu0 0.0
        %1547 = vmatpush.msra.mxu0 0.0
        %1548 = vmatpush.msra.mxu0 0.0
        %1549 = vmatpush.msra.mxu0 0.0
        %1550 = vmatpush.msra.mxu0 0.0
        %1551 = vmatpush.msra.mxu0 0.0
        %1552 = vmatpush.msra.mxu0 0.0
        %1553 = vmatpush.msra.mxu0 0.0
        %1554 = vmatpush.msra.mxu0 0.0
        %1555 = vmatpush.msra.mxu0 0.0
        %1556 = vmatpush.msra.mxu0 0.0
        %1557 = vmatpush.msra.mxu0 0.0
        %1558 = vmatpush.msra.mxu0 %v1494
        %1559 = vmatmul.f32.gmra.mxu0 %v1496
        %v1560 = vpop.f32.mrf.mxu0
        %v1561 = vadd.f32 0.0, %v1560
        %1562 = vmatmul.f32.gmra.mxu0 %v1499
        %v1563 = vpop.f32.mrf.mxu0
        %v1564 = vadd.f32 0.0, %v1563
        %1565 = vmatmul.f32.gmra.mxu0 %v1502
        %v1566 = vpop.f32.mrf.mxu0
        %v1567 = vadd.f32 0.0, %v1566
        %1568 = vmatmul.f32.gmra.mxu0 %v1505
        %v1569 = vpop.f32.mrf.mxu0
        %v1570 = vadd.f32 0.0, %v1569
        %1571 = vmatmul.f32.gmra.mxu0 %v1508
        %v1572 = vpop.f32.mrf.mxu0
        %v1573 = vadd.f32 0.0, %v1572
        %1574 = vmatmul.f32.gmra.mxu0 %v1511
        %v1575 = vpop.f32.mrf.mxu0
        %v1576 = vadd.f32 0.0, %v1575
        %1577 = vmatmul.f32.gmra.mxu0 %v1514
        %v1578 = vpop.f32.mrf.mxu0
        %v1579 = vadd.f32 0.0, %v1578
        %1580 = vmatmul.f32.gmra.mxu0 %v1517
        %v1581 = vpop.f32.mrf.mxu0
        %v1582 = vadd.f32 0.0, %v1581
        %1583 = vmatmul.f32.gmra.mxu0 %v1520
        %v1584 = vpop.f32.mrf.mxu0
        %v1585 = vadd.f32 0.0, %v1584
        %1586 = vmatmul.f32.gmra.mxu0 %v1523
        %v1587 = vpop.f32.mrf.mxu0
        %v1588 = vadd.f32 0.0, %v1587
        %1589 = vmatmul.f32.gmra.mxu0 %v1526
        %v1590 = vpop.f32.mrf.mxu0
        %v1591 = vadd.f32 0.0, %v1590
        %1592 = vmatmul.f32.gmra.mxu0 %v1529
        %v1593 = vpop.f32.mrf.mxu0
        %v1594 = vadd.f32 0.0, %v1593
        %1595 = vmatmul.f32.gmra.mxu0 %v1532
        %v1596 = vpop.f32.mrf.mxu0
        %v1597 = vadd.f32 0.0, %v1596
        %1598 = vmatmul.f32.gmra.mxu0 %v1535
        %v1599 = vpop.f32.mrf.mxu0
        %v1600 = vadd.f32 0.0, %v1599
        %1601 = vmatmul.f32.gmra.mxu0 %v1538
        %v1602 = vpop.f32.mrf.mxu0
        %v1603 = vadd.f32 0.0, %v1602
        %1604 = vmatmul.f32.gmra.mxu0 %v1541
        %v1605 = vpop.f32.mrf.mxu0
        %v1606 = vadd.f32 0.0, %v1605
        %1607 = vdwg.mxu0
        %v1608 = vadd.f32 %v1461, %v1561
        %v1609 = vadd.f32 %v1462, %v1564
        %v1610 = vadd.f32 %v1463, %v1567
        %v1611 = vadd.f32 %v1464, %v1570
        %v1612 = vadd.f32 %v1465, %v1573
        %v1613 = vadd.f32 %v1466, %v1576
        %v1614 = vadd.f32 %v1467, %v1579
        %v1615 = vadd.f32 %v1468, %v1582
        %v1616 = vadd.f32 %v1469, %v1585
        %v1617 = vadd.f32 %v1470, %v1588
        %v1618 = vadd.f32 %v1471, %v1591
        %v1619 = vadd.f32 %v1472, %v1594
        %v1620 = vadd.f32 %v1473, %v1597
        %v1621 = vadd.f32 %v1474, %v1600
        %v1622 = vadd.f32 %v1475, %v1603
        %v1623 = vadd.f32 %v1476, %v1606
        %v1624 = vld [vmem:[#allocation2 + $0x6] sm:$0xff]
        %v1625 = vld [vmem:[#allocation2 + $0xe] sm:$0xff]
        %v1626 = vld [vmem:[#allocation2 + $0x16] sm:$0xff]
        %v1627 = vld [vmem:[#allocation2 + $0x1e] sm:$0xff]
        %v1628 = vld [vmem:[#allocation2 + $0x26] sm:$0xff]
        %v1629 = vld [vmem:[#allocation2 + $0x2e] sm:$0xff]
        %v1630 = vld [vmem:[#allocation2 + $0x36] sm:$0xff]
        %v1631 = vld [vmem:[#allocation2 + $0x3e] sm:$0xff]
        %v1632 = vld [vmem:[#allocation2 + $0x46] sm:$0xff]
        %v1633 = vld [vmem:[#allocation2 + $0x4e] sm:$0xff]
        %v1634 = vld [vmem:[#allocation2 + $0x56] sm:$0xff]
        %v1635 = vld [vmem:[#allocation2 + $0x5e] sm:$0xff]
        %v1636 = vld [vmem:[#allocation2 + $0x66] sm:$0xff]
        %v1637 = vld [vmem:[#allocation2 + $0x6e] sm:$0xff]
        %v1638 = vld [vmem:[#allocation2 + $0x76] sm:$0xff]
        %v1639 = vld [vmem:[#allocation2 + $0x7e] sm:$0xf]
        %s1640 = scalar_lea.vmem [#allocation9], 48
        %v1641 = vld [vmem:[%s1640] sm:$0xff]
        %v1643 = vsel %vm758, %v1624, 0
        %v1646 = vsel %vm758, %v1625, 0
        %v1649 = vsel %vm758, %v1626, 0
        %v1652 = vsel %vm758, %v1627, 0
        %v1655 = vsel %vm758, %v1628, 0
        %v1658 = vsel %vm758, %v1629, 0
        %v1661 = vsel %vm758, %v1630, 0
        %v1664 = vsel %vm758, %v1631, 0
        %v1667 = vsel %vm758, %v1632, 0
        %v1670 = vsel %vm758, %v1633, 0
        %v1673 = vsel %vm758, %v1634, 0
        %v1676 = vsel %vm758, %v1635, 0
        %v1679 = vsel %vm758, %v1636, 0
        %v1682 = vsel %vm758, %v1637, 0
        %v1685 = vsel %vm758, %v1638, 0
        %v1688 = vsel %vm758, %v1639, 0
        %1690 = vmatpush.msra.mxu0 0.0
        %1691 = vmatpush.msra.mxu0 0.0
        %1692 = vmatpush.msra.mxu0 0.0
        %1693 = vmatpush.msra.mxu0 0.0
        %1694 = vmatpush.msra.mxu0 0.0
        %1695 = vmatpush.msra.mxu0 0.0
        %1696 = vmatpush.msra.mxu0 0.0
        %1697 = vmatpush.msra.mxu0 0.0
        %1698 = vmatpush.msra.mxu0 0.0
        %1699 = vmatpush.msra.mxu0 0.0
        %1700 = vmatpush.msra.mxu0 0.0
        %1701 = vmatpush.msra.mxu0 0.0
        %1702 = vmatpush.msra.mxu0 0.0
        %1703 = vmatpush.msra.mxu0 0.0
        %1704 = vmatpush.msra.mxu0 0.0
        %1705 = vmatpush.msra.mxu0 %v1641
        %1706 = vmatmul.f32.gmra.mxu0 %v1643
        %v1707 = vpop.f32.mrf.mxu0
        %v1708 = vadd.f32 0.0, %v1707
        %1709 = vmatmul.f32.gmra.mxu0 %v1646
        %v1710 = vpop.f32.mrf.mxu0
        %v1711 = vadd.f32 0.0, %v1710
        %1712 = vmatmul.f32.gmra.mxu0 %v1649
        %v1713 = vpop.f32.mrf.mxu0
        %v1714 = vadd.f32 0.0, %v1713
        %1715 = vmatmul.f32.gmra.mxu0 %v1652
        %v1716 = vpop.f32.mrf.mxu0
        %v1717 = vadd.f32 0.0, %v1716
        %1718 = vmatmul.f32.gmra.mxu0 %v1655
        %v1719 = vpop.f32.mrf.mxu0
        %v1720 = vadd.f32 0.0, %v1719
        %1721 = vmatmul.f32.gmra.mxu0 %v1658
        %v1722 = vpop.f32.mrf.mxu0
        %v1723 = vadd.f32 0.0, %v1722
        %1724 = vmatmul.f32.gmra.mxu0 %v1661
        %v1725 = vpop.f32.mrf.mxu0
        %v1726 = vadd.f32 0.0, %v1725
        %1727 = vmatmul.f32.gmra.mxu0 %v1664
        %v1728 = vpop.f32.mrf.mxu0
        %v1729 = vadd.f32 0.0, %v1728
        %1730 = vmatmul.f32.gmra.mxu0 %v1667
        %v1731 = vpop.f32.mrf.mxu0
        %v1732 = vadd.f32 0.0, %v1731
        %1733 = vmatmul.f32.gmra.mxu0 %v1670
        %v1734 = vpop.f32.mrf.mxu0
        %v1735 = vadd.f32 0.0, %v1734
        %1736 = vmatmul.f32.gmra.mxu0 %v1673
        %v1737 = vpop.f32.mrf.mxu0
        %v1738 = vadd.f32 0.0, %v1737
        %1739 = vmatmul.f32.gmra.mxu0 %v1676
        %v1740 = vpop.f32.mrf.mxu0
        %v1741 = vadd.f32 0.0, %v1740
        %1742 = vmatmul.f32.gmra.mxu0 %v1679
        %v1743 = vpop.f32.mrf.mxu0
        %v1744 = vadd.f32 0.0, %v1743
        %1745 = vmatmul.f32.gmra.mxu0 %v1682
        %v1746 = vpop.f32.mrf.mxu0
        %v1747 = vadd.f32 0.0, %v1746
        %1748 = vmatmul.f32.gmra.mxu0 %v1685
        %v1749 = vpop.f32.mrf.mxu0
        %v1750 = vadd.f32 0.0, %v1749
        %1751 = vmatmul.f32.gmra.mxu0 %v1688
        %v1752 = vpop.f32.mrf.mxu0
        %v1753 = vadd.f32 0.0, %v1752
        %1754 = vdwg.mxu0
        %v1755 = vadd.f32 %v1608, %v1708
        %v1756 = vadd.f32 %v1609, %v1711
        %v1757 = vadd.f32 %v1610, %v1714
        %v1758 = vadd.f32 %v1611, %v1717
        %v1759 = vadd.f32 %v1612, %v1720
        %v1760 = vadd.f32 %v1613, %v1723
        %v1761 = vadd.f32 %v1614, %v1726
        %v1762 = vadd.f32 %v1615, %v1729
        %v1763 = vadd.f32 %v1616, %v1732
        %v1764 = vadd.f32 %v1617, %v1735
        %v1765 = vadd.f32 %v1618, %v1738
        %v1766 = vadd.f32 %v1619, %v1741
        %v1767 = vadd.f32 %v1620, %v1744
        %v1768 = vadd.f32 %v1621, %v1747
        %v1769 = vadd.f32 %v1622, %v1750
        %v1770 = vadd.f32 %v1623, %v1753
        %v1771 = vld [vmem:[%s2] sm:$0x1]
        %v1773 = vperm.slane %v1771, 0
        %v1775 = vadd.f32 %v1755, %v1773
        %v1776 = vadd.f32 %v1756, %v1773
        %v1777 = vadd.f32 %v1757, %v1773
        %v1778 = vadd.f32 %v1758, %v1773
        %v1779 = vadd.f32 %v1759, %v1773
        %v1780 = vadd.f32 %v1760, %v1773
        %v1781 = vadd.f32 %v1761, %v1773
        %v1782 = vadd.f32 %v1762, %v1773
        %v1783 = vadd.f32 %v1763, %v1773
        %v1784 = vadd.f32 %v1764, %v1773
        %v1785 = vadd.f32 %v1765, %v1773
        %v1786 = vadd.f32 %v1766, %v1773
        %v1787 = vadd.f32 %v1767, %v1773
        %v1788 = vadd.f32 %v1768, %v1773
        %v1789 = vadd.f32 %v1769, %v1773
        %v1790 = vadd.f32 %v1770, %v1773
        %v1791 = vmax.f32 %v1775, 0.0
        %v1792 = vmax.f32 %v1776, 0.0
        %v1793 = vmax.f32 %v1777, 0.0
        %v1794 = vmax.f32 %v1778, 0.0
        %v1795 = vmax.f32 %v1779, 0.0
        %v1796 = vmax.f32 %v1780, 0.0
        %v1797 = vmax.f32 %v1781, 0.0
        %v1798 = vmax.f32 %v1782, 0.0
        %v1799 = vmax.f32 %v1783, 0.0
        %v1800 = vmax.f32 %v1784, 0.0
        %v1801 = vmax.f32 %v1785, 0.0
        %v1802 = vmax.f32 %v1786, 0.0
        %v1803 = vmax.f32 %v1787, 0.0
        %v1804 = vmax.f32 %v1788, 0.0
        %v1805 = vmax.f32 %v1789, 0.0
        %v1806 = vmax.f32 %v1790, 0.0
        %vm1807 = vcmask 261120
        %1808 = vst.msk [vmem:[#allocation3] sm:$0xff] %vm1807, %v1791
        %1809 = vst.msk [vmem:[#allocation3 + $0x8] sm:$0xff] %vm1807, %v1792
        %1810 = vst.msk [vmem:[#allocation3 + $0x10] sm:$0xff] %vm1807, %v1793
        %1811 = vst.msk [vmem:[#allocation3 + $0x18] sm:$0xff] %vm1807, %v1794
        %1812 = vst.msk [vmem:[#allocation3 + $0x20] sm:$0xff] %vm1807, %v1795
        %1813 = vst.msk [vmem:[#allocation3 + $0x28] sm:$0xff] %vm1807, %v1796
        %1814 = vst.msk [vmem:[#allocation3 + $0x30] sm:$0xff] %vm1807, %v1797
        %1815 = vst.msk [vmem:[#allocation3 + $0x38] sm:$0xff] %vm1807, %v1798
        %1816 = vst.msk [vmem:[#allocation3 + $0x40] sm:$0xff] %vm1807, %v1799
        %1817 = vst.msk [vmem:[#allocation3 + $0x48] sm:$0xff] %vm1807, %v1800
        %1818 = vst.msk [vmem:[#allocation3 + $0x50] sm:$0xff] %vm1807, %v1801
        %1819 = vst.msk [vmem:[#allocation3 + $0x58] sm:$0xff] %vm1807, %v1802
        %1820 = vst.msk [vmem:[#allocation3 + $0x60] sm:$0xff] %vm1807, %v1803
        %1821 = vst.msk [vmem:[#allocation3 + $0x68] sm:$0xff] %vm1807, %v1804
        %1822 = vst.msk [vmem:[#allocation3 + $0x70] sm:$0xff] %vm1807, %v1805
        %vm1823 = vcmask 257024
        %1824 = vst.msk [vmem:[#allocation3 + $0x78] sm:$0xf] %vm1823, %v1806
        %v1825 = vld [vmem:[#allocation3] ss:$2 sm:$0xff]
        %s1826 = scalar_lea.vmem [#allocation3], 16
        %v1827 = vld [vmem:[%s1826] ss:$2 sm:$0xff]
        %s1828 = scalar_lea.vmem [#allocation3], 32
        %v1829 = vld [vmem:[%s1828] ss:$2 sm:$0xff]
        %s1830 = scalar_lea.vmem [#allocation3], 48
        %v1831 = vld [vmem:[%s1830] ss:$2 sm:$0xff]
        %s1832 = scalar_lea.vmem [#allocation3], 64
        %v1833 = vld [vmem:[%s1832] ss:$2 sm:$0xff]
        %s1834 = scalar_lea.vmem [#allocation3], 80
        %v1835 = vld [vmem:[%s1834] ss:$2 sm:$0xff]
        %s1836 = scalar_lea.vmem [#allocation3], 96
        %v1837 = vld [vmem:[%s1836] ss:$2 sm:$0xff]
        %s1838 = scalar_lea.vmem [#allocation3], 112
        %v1839 = vld [vmem:[%s1838] ss:$2 sm:$0x3f]
        %s1840 = scalar_lea.vmem [#allocation3], 1
        %v1841 = vld [vmem:[%s1840] ss:$2 sm:$0xff]
        %s1842 = scalar_lea.vmem [#allocation3], 17
        %v1843 = vld [vmem:[%s1842] ss:$2 sm:$0xff]
        %s1844 = scalar_lea.vmem [#allocation3], 33
        %v1845 = vld [vmem:[%s1844] ss:$2 sm:$0xff]
        %s1846 = scalar_lea.vmem [#allocation3], 49
        %v1847 = vld [vmem:[%s1846] ss:$2 sm:$0xff]
        %s1848 = scalar_lea.vmem [#allocation3], 65
        %v1849 = vld [vmem:[%s1848] ss:$2 sm:$0xff]
        %s1850 = scalar_lea.vmem [#allocation3], 81
        %v1851 = vld [vmem:[%s1850] ss:$2 sm:$0xff]
        %s1852 = scalar_lea.vmem [#allocation3], 97
        %v1853 = vld [vmem:[%s1852] ss:$2 sm:$0xff]
        %s1854 = scalar_lea.vmem [#allocation3], 113
        %v1855 = vld [vmem:[%s1854] ss:$2 sm:$0x3f]
        %v1856 = vmax.f32 %v1825, %v1841
        %v1857 = vmax.f32 %v1827, %v1843
        %v1858 = vmax.f32 %v1829, %v1845
        %v1859 = vmax.f32 %v1831, %v1847
        %v1860 = vmax.f32 %v1833, %v1849
        %v1861 = vmax.f32 %v1835, %v1851
        %v1862 = vmax.f32 %v1837, %v1853
        %v1863 = vmax.f32 %v1839, %v1855
        %vm1864 = vcmask 253952
        %1865 = vst.msk [vmem:[#allocation4] sm:$0x1] %vm1864, 0.0
        %1866 = vst.msk [vmem:[#allocation4 + $0x3f] sm:$0x1] %vm1864, 0.0
        %1867 = vst.msk [vmem:[#allocation4 + $0x1] sm:$0xff] %vm1807, %v1856
        %1868 = vst.msk [vmem:[#allocation4 + $0x9] sm:$0xff] %vm1807, %v1857
        %1869 = vst.msk [vmem:[#allocation4 + $0x11] sm:$0xff] %vm1807, %v1858
        %1870 = vst.msk [vmem:[#allocation4 + $0x19] sm:$0xff] %vm1807, %v1859
        %1871 = vst.msk [vmem:[#allocation4 + $0x21] sm:$0xff] %vm1807, %v1860
        %1872 = vst.msk [vmem:[#allocation4 + $0x29] sm:$0xff] %vm1807, %v1861
        %1873 = vst.msk [vmem:[#allocation4 + $0x31] sm:$0xff] %vm1807, %v1862
        %vm1874 = vcmask 259072
        %1875 = vst.msk [vmem:[#allocation4 + $0x39] sm:$0x3f] %vm1874, %v1863
        %v1876 = vld [vmem:[#allocation4] sm:$0xff]
        %v1877 = vld [vmem:[#allocation4 + $0x8] sm:$0xff]
        %v1878 = vld [vmem:[#allocation4 + $0x10] sm:$0xff]
        %v1879 = vld [vmem:[#allocation4 + $0x18] sm:$0xff]
        %v1880 = vld [vmem:[#allocation4 + $0x20] sm:$0xff]
        %v1881 = vld [vmem:[#allocation4 + $0x28] sm:$0xff]
        %v1882 = vld [vmem:[#allocation4 + $0x30] sm:$0xf]
        %v1883 = vld [vmem:[%s3] sm:$0xff]
        %v1884 = vld [vmem:[%s3 + $0x8] sm:$0xff]
        %v1885 = vld [vmem:[%s3 + $0x10] sm:$0xff]
        %v1886 = vld [vmem:[%s3 + $0x18] sm:$0xff]
        %v1887 = vld [vmem:[#allocation4 + $0x2] sm:$0xff]
        %v1888 = vld [vmem:[#allocation4 + $0xa] sm:$0xff]
        %v1889 = vld [vmem:[#allocation4 + $0x12] sm:$0xff]
        %v1890 = vld [vmem:[#allocation4 + $0x1a] sm:$0xff]
        %v1891 = vld [vmem:[#allocation4 + $0x22] sm:$0xff]
        %v1892 = vld [vmem:[#allocation4 + $0x2a] sm:$0xff]
        %v1893 = vld [vmem:[#allocation4 + $0x32] sm:$0xf]
        %s1894 = scalar_lea.vmem %s3, 32
        %v1895 = vld [vmem:[%s1894] sm:$0xff]
        %v1896 = vld [vmem:[%s1894 + $0x8] sm:$0xff]
        %v1897 = vld [vmem:[%s1894 + $0x10] sm:$0xff]
        %v1898 = vld [vmem:[%s1894 + $0x18] sm:$0xff]
        %v1900 = vsel %vm1807, %v1887, 0
        %v1903 = vsel %vm1807, %v1888, 0
        %v1906 = vsel %vm1807, %v1889, 0
        %v1909 = vsel %vm1807, %v1890, 0
        %v1912 = vsel %vm1807, %v1891, 0
        %v1915 = vsel %vm1807, %v1892, 0
        %v1918 = vsel %vm1807, %v1893, 0
        %1920 = vmatpush.msra.mxu0 0.0
        %1921 = vmatpush.msra.mxu0 0.0
        %1922 = vmatpush.msra.mxu0 0.0
        %1923 = vmatpush.msra.mxu0 0.0
        %1924 = vmatpush.msra.mxu0 0.0
        %1925 = vmatpush.msra.mxu0 0.0
        %1926 = vmatpush.msra.mxu0 0.0
        %1927 = vmatpush.msra.mxu0 0.0
        %1928 = vmatpush.msra.mxu0 0.0
        %1929 = vmatpush.msra.mxu0 0.0
        %1930 = vmatpush.msra.mxu0 0.0
        %1931 = vmatpush.msra.mxu0 0.0
        %1932 = vmatpush.msra.mxu0 %v1898
        %1933 = vmatpush.msra.mxu0 %v1897
        %1934 = vmatpush.msra.mxu0 %v1896
        %1935 = vmatpush.msra.mxu0 %v1895
        %1936 = vmatmul.f32.gmra.mxu0 %v1900
        %v1937 = vpop.f32.mrf.mxu0
        %v1938 = vadd.f32 0.0, %v1937
        %1939 = vmatmul.f32.gmra.mxu0 %v1903
        %v1940 = vpop.f32.mrf.mxu0
        %v1941 = vadd.f32 0.0, %v1940
        %1942 = vmatmul.f32.gmra.mxu0 %v1906
        %v1943 = vpop.f32.mrf.mxu0
        %v1944 = vadd.f32 0.0, %v1943
        %1945 = vmatmul.f32.gmra.mxu0 %v1909
        %v1946 = vpop.f32.mrf.mxu0
        %v1947 = vadd.f32 0.0, %v1946
        %1948 = vmatmul.f32.gmra.mxu0 %v1912
        %v1949 = vpop.f32.mrf.mxu0
        %v1950 = vadd.f32 0.0, %v1949
        %1951 = vmatmul.f32.gmra.mxu0 %v1915
        %v1952 = vpop.f32.mrf.mxu0
        %v1953 = vadd.f32 0.0, %v1952
        %1954 = vmatmul.f32.gmra.mxu0 %v1918
        %v1955 = vpop.f32.mrf.mxu0
        %v1956 = vadd.f32 0.0, %v1955
        %1957 = vdwg.mxu0
        %v1959 = vsel %vm1807, %v1876, 0
        %v1962 = vsel %vm1807, %v1877, 0
        %v1965 = vsel %vm1807, %v1878, 0
        %v1968 = vsel %vm1807, %v1879, 0
        %v1971 = vsel %vm1807, %v1880, 0
        %v1974 = vsel %vm1807, %v1881, 0
        %v1977 = vsel %vm1807, %v1882, 0
        %1979 = vmatpush.msra.mxu0 0.0
        %1980 = vmatpush.msra.mxu0 0.0
        %1981 = vmatpush.msra.mxu0 0.0
        %1982 = vmatpush.msra.mxu0 0.0
        %1983 = vmatpush.msra.mxu0 0.0
        %1984 = vmatpush.msra.mxu0 0.0
        %1985 = vmatpush.msra.mxu0 0.0
        %1986 = vmatpush.msra.mxu0 0.0
        %1987 = vmatpush.msra.mxu0 0.0
        %1988 = vmatpush.msra.mxu0 0.0
        %1989 = vmatpush.msra.mxu0 0.0
        %1990 = vmatpush.msra.mxu0 0.0
        %1991 = vmatpush.msra.mxu0 %v1886
        %1992 = vmatpush.msra.mxu0 %v1885
        %1993 = vmatpush.msra.mxu0 %v1884
        %1994 = vmatpush.msra.mxu0 %v1883
        %1995 = vmatmul.f32.gmra.mxu0 %v1959
        %v1996 = vpop.f32.mrf.mxu0
        %v1997 = vadd.f32 %v1938, %v1996
        %1998 = vmatmul.f32.gmra.mxu0 %v1962
        %v1999 = vpop.f32.mrf.mxu0
        %v2000 = vadd.f32 %v1941, %v1999
        %2001 = vmatmul.f32.gmra.mxu0 %v1965
        %v2002 = vpop.f32.mrf.mxu0
        %v2003 = vadd.f32 %v1944, %v2002
        %2004 = vmatmul.f32.gmra.mxu0 %v1968
        %v2005 = vpop.f32.mrf.mxu0
        %v2006 = vadd.f32 %v1947, %v2005
        %2007 = vmatmul.f32.gmra.mxu0 %v1971
        %v2008 = vpop.f32.mrf.mxu0
        %v2009 = vadd.f32 %v1950, %v2008
        %2010 = vmatmul.f32.gmra.mxu0 %v1974
        %v2011 = vpop.f32.mrf.mxu0
        %v2012 = vadd.f32 %v1953, %v2011
        %2013 = vmatmul.f32.gmra.mxu0 %v1977
        %v2014 = vpop.f32.mrf.mxu0
        %v2015 = vadd.f32 %v1956, %v2014
        %2016 = vdwg.mxu0
        %v2017 = vld [vmem:[#allocation4 + $0x4] sm:$0xff]
        %v2018 = vld [vmem:[#allocation4 + $0xc] sm:$0xff]
        %v2019 = vld [vmem:[#allocation4 + $0x14] sm:$0xff]
        %v2020 = vld [vmem:[#allocation4 + $0x1c] sm:$0xff]
        %v2021 = vld [vmem:[#allocation4 + $0x24] sm:$0xff]
        %v2022 = vld [vmem:[#allocation4 + $0x2c] sm:$0xff]
        %v2023 = vld [vmem:[#allocation4 + $0x34] sm:$0xf]
        %s2024 = scalar_lea.vmem %s3, 64
        %v2025 = vld [vmem:[%s2024] sm:$0xff]
        %v2026 = vld [vmem:[%s2024 + $0x8] sm:$0xff]
        %v2027 = vld [vmem:[%s2024 + $0x10] sm:$0xff]
        %v2028 = vld [vmem:[%s2024 + $0x18] sm:$0xff]
        %v2030 = vsel %vm1807, %v2017, 0
        %v2033 = vsel %vm1807, %v2018, 0
        %v2036 = vsel %vm1807, %v2019, 0
        %v2039 = vsel %vm1807, %v2020, 0
        %v2042 = vsel %vm1807, %v2021, 0
        %v2045 = vsel %vm1807, %v2022, 0
        %v2048 = vsel %vm1807, %v2023, 0
        %2050 = vmatpush.msra.mxu0 0.0
        %2051 = vmatpush.msra.mxu0 0.0
        %2052 = vmatpush.msra.mxu0 0.0
        %2053 = vmatpush.msra.mxu0 0.0
        %2054 = vmatpush.msra.mxu0 0.0
        %2055 = vmatpush.msra.mxu0 0.0
        %2056 = vmatpush.msra.mxu0 0.0
        %2057 = vmatpush.msra.mxu0 0.0
        %2058 = vmatpush.msra.mxu0 0.0
        %2059 = vmatpush.msra.mxu0 0.0
        %2060 = vmatpush.msra.mxu0 0.0
        %2061 = vmatpush.msra.mxu0 0.0
        %2062 = vmatpush.msra.mxu0 %v2028
        %2063 = vmatpush.msra.mxu0 %v2027
        %2064 = vmatpush.msra.mxu0 %v2026
        %2065 = vmatpush.msra.mxu0 %v2025
        %2066 = vmatmul.f32.gmra.mxu0 %v2030
        %v2067 = vpop.f32.mrf.mxu0
        %v2068 = vadd.f32 0.0, %v2067
        %2069 = vmatmul.f32.gmra.mxu0 %v2033
        %v2070 = vpop.f32.mrf.mxu0
        %v2071 = vadd.f32 0.0, %v2070
        %2072 = vmatmul.f32.gmra.mxu0 %v2036
        %v2073 = vpop.f32.mrf.mxu0
        %v2074 = vadd.f32 0.0, %v2073
        %2075 = vmatmul.f32.gmra.mxu0 %v2039
        %v2076 = vpop.f32.mrf.mxu0
        %v2077 = vadd.f32 0.0, %v2076
        %2078 = vmatmul.f32.gmra.mxu0 %v2042
        %v2079 = vpop.f32.mrf.mxu0
        %v2080 = vadd.f32 0.0, %v2079
        %2081 = vmatmul.f32.gmra.mxu0 %v2045
        %v2082 = vpop.f32.mrf.mxu0
        %v2083 = vadd.f32 0.0, %v2082
        %2084 = vmatmul.f32.gmra.mxu0 %v2048
        %v2085 = vpop.f32.mrf.mxu0
        %v2086 = vadd.f32 0.0, %v2085
        %2087 = vdwg.mxu0
        %v2088 = vadd.f32 %v1997, %v2068
        %v2089 = vadd.f32 %v2000, %v2071
        %v2090 = vadd.f32 %v2003, %v2074
        %v2091 = vadd.f32 %v2006, %v2077
        %v2092 = vadd.f32 %v2009, %v2080
        %v2093 = vadd.f32 %v2012, %v2083
        %v2094 = vadd.f32 %v2015, %v2086
        %v2095 = vld [vmem:[#allocation4 + $0x6] sm:$0xff]
        %v2096 = vld [vmem:[#allocation4 + $0xe] sm:$0xff]
        %v2097 = vld [vmem:[#allocation4 + $0x16] sm:$0xff]
        %v2098 = vld [vmem:[#allocation4 + $0x1e] sm:$0xff]
        %v2099 = vld [vmem:[#allocation4 + $0x26] sm:$0xff]
        %v2100 = vld [vmem:[#allocation4 + $0x2e] sm:$0xff]
        %v2101 = vld [vmem:[#allocation4 + $0x36] sm:$0xf]
        %s2102 = scalar_lea.vmem %s3, 96
        %v2103 = vld [vmem:[%s2102] sm:$0xff]
        %v2104 = vld [vmem:[%s2102 + $0x8] sm:$0xff]
        %v2105 = vld [vmem:[%s2102 + $0x10] sm:$0xff]
        %v2106 = vld [vmem:[%s2102 + $0x18] sm:$0xff]
        %v2108 = vsel %vm1807, %v2095, 0
        %v2111 = vsel %vm1807, %v2096, 0
        %v2114 = vsel %vm1807, %v2097, 0
        %v2117 = vsel %vm1807, %v2098, 0
        %v2120 = vsel %vm1807, %v2099, 0
        %v2123 = vsel %vm1807, %v2100, 0
        %v2126 = vsel %vm1807, %v2101, 0
        %2128 = vmatpush.msra.mxu0 0.0
        %2129 = vmatpush.msra.mxu0 0.0
        %2130 = vmatpush.msra.mxu0 0.0
        %2131 = vmatpush.msra.mxu0 0.0
        %2132 = vmatpush.msra.mxu0 0.0
        %2133 = vmatpush.msra.mxu0 0.0
        %2134 = vmatpush.msra.mxu0 0.0
        %2135 = vmatpush.msra.mxu0 0.0
        %2136 = vmatpush.msra.mxu0 0.0
        %2137 = vmatpush.msra.mxu0 0.0
        %2138 = vmatpush.msra.mxu0 0.0
        %2139 = vmatpush.msra.mxu0 0.0
        %2140 = vmatpush.msra.mxu0 %v2106
        %2141 = vmatpush.msra.mxu0 %v2105
        %2142 = vmatpush.msra.mxu0 %v2104
        %2143 = vmatpush.msra.mxu0 %v2103
        %2144 = vmatmul.f32.gmra.mxu0 %v2108
        %v2145 = vpop.f32.mrf.mxu0
        %v2146 = vadd.f32 0.0, %v2145
        %2147 = vmatmul.f32.gmra.mxu0 %v2111
        %v2148 = vpop.f32.mrf.mxu0
        %v2149 = vadd.f32 0.0, %v2148
        %2150 = vmatmul.f32.gmra.mxu0 %v2114
        %v2151 = vpop.f32.mrf.mxu0
        %v2152 = vadd.f32 0.0, %v2151
        %2153 = vmatmul.f32.gmra.mxu0 %v2117
        %v2154 = vpop.f32.mrf.mxu0
        %v2155 = vadd.f32 0.0, %v2154
        %2156 = vmatmul.f32.gmra.mxu0 %v2120
        %v2157 = vpop.f32.mrf.mxu0
        %v2158 = vadd.f32 0.0, %v2157
        %2159 = vmatmul.f32.gmra.mxu0 %v2123
        %v2160 = vpop.f32.mrf.mxu0
        %v2161 = vadd.f32 0.0, %v2160
        %2162 = vmatmul.f32.gmra.mxu0 %v2126
        %v2163 = vpop.f32.mrf.mxu0
        %v2164 = vadd.f32 0.0, %v2163
        %2165 = vdwg.mxu0
        %v2166 = vadd.f32 %v2088, %v2146
        %v2167 = vadd.f32 %v2089, %v2149
        %v2168 = vadd.f32 %v2090, %v2152
        %v2169 = vadd.f32 %v2091, %v2155
        %v2170 = vadd.f32 %v2092, %v2158
        %v2171 = vadd.f32 %v2093, %v2161
        %v2172 = vadd.f32 %v2094, %v2164
        %v2173 = vld [vmem:[#allocation4 + $0x8] sm:$0xff]
        %v2174 = vld [vmem:[#allocation4 + $0x10] sm:$0xff]
        %v2175 = vld [vmem:[#allocation4 + $0x18] sm:$0xff]
        %v2176 = vld [vmem:[#allocation4 + $0x20] sm:$0xff]
        %v2177 = vld [vmem:[#allocation4 + $0x28] sm:$0xff]
        %v2178 = vld [vmem:[#allocation4 + $0x30] sm:$0xff]
        %v2179 = vld [vmem:[#allocation4 + $0x38] sm:$0xf]
        %s2180 = scalar_lea.vmem %s3, 128
        %v2181 = vld [vmem:[%s2180] sm:$0xff]
        %v2182 = vld [vmem:[%s2180 + $0x8] sm:$0xff]
        %v2183 = vld [vmem:[%s2180 + $0x10] sm:$0xff]
        %v2184 = vld [vmem:[%s2180 + $0x18] sm:$0xff]
        %v2186 = vsel %vm1807, %v2173, 0
        %v2189 = vsel %vm1807, %v2174, 0
        %v2192 = vsel %vm1807, %v2175, 0
        %v2195 = vsel %vm1807, %v2176, 0
        %v2198 = vsel %vm1807, %v2177, 0
        %v2201 = vsel %vm1807, %v2178, 0
        %v2204 = vsel %vm1807, %v2179, 0
        %2206 = vmatpush.msra.mxu0 0.0
        %2207 = vmatpush.msra.mxu0 0.0
        %2208 = vmatpush.msra.mxu0 0.0
        %2209 = vmatpush.msra.mxu0 0.0
        %2210 = vmatpush.msra.mxu0 0.0
        %2211 = vmatpush.msra.mxu0 0.0
        %2212 = vmatpush.msra.mxu0 0.0
        %2213 = vmatpush.msra.mxu0 0.0
        %2214 = vmatpush.msra.mxu0 0.0
        %2215 = vmatpush.msra.mxu0 0.0
        %2216 = vmatpush.msra.mxu0 0.0
        %2217 = vmatpush.msra.mxu0 0.0
        %2218 = vmatpush.msra.mxu0 %v2184
        %2219 = vmatpush.msra.mxu0 %v2183
        %2220 = vmatpush.msra.mxu0 %v2182
        %2221 = vmatpush.msra.mxu0 %v2181
        %2222 = vmatmul.f32.gmra.mxu0 %v2186
        %v2223 = vpop.f32.mrf.mxu0
        %v2224 = vadd.f32 0.0, %v2223
        %2225 = vmatmul.f32.gmra.mxu0 %v2189
        %v2226 = vpop.f32.mrf.mxu0
        %v2227 = vadd.f32 0.0, %v2226
        %2228 = vmatmul.f32.gmra.mxu0 %v2192
        %v2229 = vpop.f32.mrf.mxu0
        %v2230 = vadd.f32 0.0, %v2229
        %2231 = vmatmul.f32.gmra.mxu0 %v2195
        %v2232 = vpop.f32.mrf.mxu0
        %v2233 = vadd.f32 0.0, %v2232
        %2234 = vmatmul.f32.gmra.mxu0 %v2198
        %v2235 = vpop.f32.mrf.mxu0
        %v2236 = vadd.f32 0.0, %v2235
        %2237 = vmatmul.f32.gmra.mxu0 %v2201
        %v2238 = vpop.f32.mrf.mxu0
        %v2239 = vadd.f32 0.0, %v2238
        %2240 = vmatmul.f32.gmra.mxu0 %v2204
        %v2241 = vpop.f32.mrf.mxu0
        %v2242 = vadd.f32 0.0, %v2241
        %2243 = vdwg.mxu0
        %v2244 = vadd.f32 %v2166, %v2224
        %v2245 = vadd.f32 %v2167, %v2227
        %v2246 = vadd.f32 %v2168, %v2230
        %v2247 = vadd.f32 %v2169, %v2233
        %v2248 = vadd.f32 %v2170, %v2236
        %v2249 = vadd.f32 %v2171, %v2239
        %v2250 = vadd.f32 %v2172, %v2242
        %v2251 = vld [vmem:[#allocation4 + $0xa] sm:$0xff]
        %v2252 = vld [vmem:[#allocation4 + $0x12] sm:$0xff]
        %v2253 = vld [vmem:[#allocation4 + $0x1a] sm:$0xff]
        %v2254 = vld [vmem:[#allocation4 + $0x22] sm:$0xff]
        %v2255 = vld [vmem:[#allocation4 + $0x2a] sm:$0xff]
        %v2256 = vld [vmem:[#allocation4 + $0x32] sm:$0xff]
        %v2257 = vld [vmem:[#allocation4 + $0x3a] sm:$0xf]
        %s2258 = scalar_lea.vmem %s3, 160
        %v2259 = vld [vmem:[%s2258] sm:$0xff]
        %v2260 = vld [vmem:[%s2258 + $0x8] sm:$0xff]
        %v2261 = vld [vmem:[%s2258 + $0x10] sm:$0xff]
        %v2262 = vld [vmem:[%s2258 + $0x18] sm:$0xff]
        %v2264 = vsel %vm1807, %v2251, 0
        %v2267 = vsel %vm1807, %v2252, 0
        %v2270 = vsel %vm1807, %v2253, 0
        %v2273 = vsel %vm1807, %v2254, 0
        %v2276 = vsel %vm1807, %v2255, 0
        %v2279 = vsel %vm1807, %v2256, 0
        %v2282 = vsel %vm1807, %v2257, 0
        %2284 = vmatpush.msra.mxu0 0.0
        %2285 = vmatpush.msra.mxu0 0.0
        %2286 = vmatpush.msra.mxu0 0.0
        %2287 = vmatpush.msra.mxu0 0.0
        %2288 = vmatpush.msra.mxu0 0.0
        %2289 = vmatpush.msra.mxu0 0.0
        %2290 = vmatpush.msra.mxu0 0.0
        %2291 = vmatpush.msra.mxu0 0.0
        %2292 = vmatpush.msra.mxu0 0.0
        %2293 = vmatpush.msra.mxu0 0.0
        %2294 = vmatpush.msra.mxu0 0.0
        %2295 = vmatpush.msra.mxu0 0.0
        %2296 = vmatpush.msra.mxu0 %v2262
        %2297 = vmatpush.msra.mxu0 %v2261
        %2298 = vmatpush.msra.mxu0 %v2260
        %2299 = vmatpush.msra.mxu0 %v2259
        %2300 = vmatmul.f32.gmra.mxu0 %v2264
        %v2301 = vpop.f32.mrf.mxu0
        %v2302 = vadd.f32 0.0, %v2301
        %2303 = vmatmul.f32.gmra.mxu0 %v2267
        %v2304 = vpop.f32.mrf.mxu0
        %v2305 = vadd.f32 0.0, %v2304
        %2306 = vmatmul.f32.gmra.mxu0 %v2270
        %v2307 = vpop.f32.mrf.mxu0
        %v2308 = vadd.f32 0.0, %v2307
        %2309 = vmatmul.f32.gmra.mxu0 %v2273
        %v2310 = vpop.f32.mrf.mxu0
        %v2311 = vadd.f32 0.0, %v2310
        %2312 = vmatmul.f32.gmra.mxu0 %v2276
        %v2313 = vpop.f32.mrf.mxu0
        %v2314 = vadd.f32 0.0, %v2313
        %2315 = vmatmul.f32.gmra.mxu0 %v2279
        %v2316 = vpop.f32.mrf.mxu0
        %v2317 = vadd.f32 0.0, %v2316
        %2318 = vmatmul.f32.gmra.mxu0 %v2282
        %v2319 = vpop.f32.mrf.mxu0
        %v2320 = vadd.f32 0.0, %v2319
        %2321 = vdwg.mxu0
        %v2322 = vadd.f32 %v2244, %v2302
        %v2323 = vadd.f32 %v2245, %v2305
        %v2324 = vadd.f32 %v2246, %v2308
        %v2325 = vadd.f32 %v2247, %v2311
        %v2326 = vadd.f32 %v2248, %v2314
        %v2327 = vadd.f32 %v2249, %v2317
        %v2328 = vadd.f32 %v2250, %v2320
        %v2329 = vld [vmem:[#allocation4 + $0xc] sm:$0xff]
        %v2330 = vld [vmem:[#allocation4 + $0x14] sm:$0xff]
        %v2331 = vld [vmem:[#allocation4 + $0x1c] sm:$0xff]
        %v2332 = vld [vmem:[#allocation4 + $0x24] sm:$0xff]
        %v2333 = vld [vmem:[#allocation4 + $0x2c] sm:$0xff]
        %v2334 = vld [vmem:[#allocation4 + $0x34] sm:$0xff]
        %v2335 = vld [vmem:[#allocation4 + $0x3c] sm:$0xf]
        %s2336 = scalar_lea.vmem %s3, 192
        %v2337 = vld [vmem:[%s2336] sm:$0xff]
        %v2338 = vld [vmem:[%s2336 + $0x8] sm:$0xff]
        %v2339 = vld [vmem:[%s2336 + $0x10] sm:$0xff]
        %v2340 = vld [vmem:[%s2336 + $0x18] sm:$0xff]
        %v2342 = vsel %vm1807, %v2329, 0
        %v2345 = vsel %vm1807, %v2330, 0
        %v2348 = vsel %vm1807, %v2331, 0
        %v2351 = vsel %vm1807, %v2332, 0
        %v2354 = vsel %vm1807, %v2333, 0
        %v2357 = vsel %vm1807, %v2334, 0
        %v2360 = vsel %vm1807, %v2335, 0
        %2362 = vmatpush.msra.mxu0 0.0
        %2363 = vmatpush.msra.mxu0 0.0
        %2364 = vmatpush.msra.mxu0 0.0
        %2365 = vmatpush.msra.mxu0 0.0
        %2366 = vmatpush.msra.mxu0 0.0
        %2367 = vmatpush.msra.mxu0 0.0
        %2368 = vmatpush.msra.mxu0 0.0
        %2369 = vmatpush.msra.mxu0 0.0
        %2370 = vmatpush.msra.mxu0 0.0
        %2371 = vmatpush.msra.mxu0 0.0
        %2372 = vmatpush.msra.mxu0 0.0
        %2373 = vmatpush.msra.mxu0 0.0
        %2374 = vmatpush.msra.mxu0 %v2340
        %2375 = vmatpush.msra.mxu0 %v2339
        %2376 = vmatpush.msra.mxu0 %v2338
        %2377 = vmatpush.msra.mxu0 %v2337
        %2378 = vmatmul.f32.gmra.mxu0 %v2342
        %v2379 = vpop.f32.mrf.mxu0
        %v2380 = vadd.f32 0.0, %v2379
        %2381 = vmatmul.f32.gmra.mxu0 %v2345
        %v2382 = vpop.f32.mrf.mxu0
        %v2383 = vadd.f32 0.0, %v2382
        %2384 = vmatmul.f32.gmra.mxu0 %v2348
        %v2385 = vpop.f32.mrf.mxu0
        %v2386 = vadd.f32 0.0, %v2385
        %2387 = vmatmul.f32.gmra.mxu0 %v2351
        %v2388 = vpop.f32.mrf.mxu0
        %v2389 = vadd.f32 0.0, %v2388
        %2390 = vmatmul.f32.gmra.mxu0 %v2354
        %v2391 = vpop.f32.mrf.mxu0
        %v2392 = vadd.f32 0.0, %v2391
        %2393 = vmatmul.f32.gmra.mxu0 %v2357
        %v2394 = vpop.f32.mrf.mxu0
        %v2395 = vadd.f32 0.0, %v2394
        %2396 = vmatmul.f32.gmra.mxu0 %v2360
        %v2397 = vpop.f32.mrf.mxu0
        %v2398 = vadd.f32 0.0, %v2397
        %2399 = vdwg.mxu0
        %v2400 = vadd.f32 %v2322, %v2380
        %v2401 = vadd.f32 %v2323, %v2383
        %v2402 = vadd.f32 %v2324, %v2386
        %v2403 = vadd.f32 %v2325, %v2389
        %v2404 = vadd.f32 %v2326, %v2392
        %v2405 = vadd.f32 %v2327, %v2395
        %v2406 = vadd.f32 %v2328, %v2398
        %v2407 = vld [vmem:[%s4] sm:$0x1]
        %v2409 = vperm.slane %v2407, 0
        %v2411 = vadd.f32 %v2400, %v2409
        %v2412 = vadd.f32 %v2401, %v2409
        %v2413 = vadd.f32 %v2402, %v2409
        %v2414 = vadd.f32 %v2403, %v2409
        %v2415 = vadd.f32 %v2404, %v2409
        %v2416 = vadd.f32 %v2405, %v2409
        %v2417 = vadd.f32 %v2406, %v2409
        %v2418 = vmax.f32 %v2411, 0.0
        %v2419 = vmax.f32 %v2412, 0.0
        %v2420 = vmax.f32 %v2413, 0.0
        %v2421 = vmax.f32 %v2414, 0.0
        %v2422 = vmax.f32 %v2415, 0.0
        %v2423 = vmax.f32 %v2416, 0.0
        %v2424 = vmax.f32 %v2417, 0.0
        %2425 = vst.msk [vmem:[#allocation5] sm:$0xff] %vm1807, %v2418
        %2426 = vst.msk [vmem:[#allocation5 + $0x8] sm:$0xff] %vm1807, %v2419
        %2427 = vst.msk [vmem:[#allocation5 + $0x10] sm:$0xff] %vm1807, %v2420
        %2428 = vst.msk [vmem:[#allocation5 + $0x18] sm:$0xff] %vm1807, %v2421
        %2429 = vst.msk [vmem:[#allocation5 + $0x20] sm:$0xff] %vm1807, %v2422
        %2430 = vst.msk [vmem:[#allocation5 + $0x28] sm:$0xff] %vm1807, %v2423
        %2431 = vst.msk [vmem:[#allocation5 + $0x30] sm:$0xf] %vm1823, %v2424
        %v2432 = vld [vmem:[#allocation5] ss:$2 sm:$0xff]
        %s2433 = scalar_lea.vmem [#allocation5], 16
        %v2434 = vld [vmem:[%s2433] ss:$2 sm:$0xff]
        %s2435 = scalar_lea.vmem [#allocation5], 32
        %v2436 = vld [vmem:[%s2435] ss:$2 sm:$0xff]
        %s2437 = scalar_lea.vmem [#allocation5], 48
        %v2438 = vld [vmem:[%s2437] ss:$2 sm:$0x3]
        %s2439 = scalar_lea.vmem [#allocation5], 1
        %v2440 = vld [vmem:[%s2439] ss:$2 sm:$0xff]
        %s2441 = scalar_lea.vmem [#allocation5], 17
        %v2442 = vld [vmem:[%s2441] ss:$2 sm:$0xff]
        %s2443 = scalar_lea.vmem [#allocation5], 33
        %v2444 = vld [vmem:[%s2443] ss:$2 sm:$0xff]
        %s2445 = scalar_lea.vmem [#allocation5], 49
        %v2446 = vld [vmem:[%s2445] ss:$2 sm:$0x3]
        %v2447 = vmax.f32 %v2432, %v2440
        %v2448 = vmax.f32 %v2434, %v2442
        %v2449 = vmax.f32 %v2436, %v2444
        %v2450 = vmax.f32 %v2438, %v2446
        %2451 = vst.msk [vmem:[#allocation6] sm:$0x1] %vm1864, 0.0
        %2452 = vst.msk [vmem:[#allocation6 + $0x1b] sm:$0x1] %vm1864, 0.0
        %2453 = vst.msk [vmem:[#allocation6 + $0x1] sm:$0xff] %vm1807, %v2447
        %2454 = vst.msk [vmem:[#allocation6 + $0x9] sm:$0xff] %vm1807, %v2448
        %2455 = vst.msk [vmem:[#allocation6 + $0x11] sm:$0xff] %vm1807, %v2449
        %vm2456 = vcmask 254976
        %2457 = vst.msk [vmem:[#allocation6 + $0x19] sm:$0x3] %vm2456, %v2450
        %v2458 = vld [vmem:[#allocation6] sm:$0xff]
        %v2459 = vld [vmem:[#allocation6 + $0x8] sm:$0xff]
        %v2460 = vld [vmem:[#allocation6 + $0x10] sm:$0xf]
        %v2461 = vld [vmem:[%s5] sm:$0xff]
        %v2462 = vld [vmem:[%s5 + $0x8] sm:$0xff]
        %v2463 = vld [vmem:[%s5 + $0x10] sm:$0xff]
        %v2464 = vld [vmem:[%s5 + $0x18] sm:$0xff]
        %v2465 = vld [vmem:[#allocation6 + $0x4] sm:$0xff]
        %v2466 = vld [vmem:[#allocation6 + $0xc] sm:$0xff]
        %v2467 = vld [vmem:[#allocation6 + $0x14] sm:$0xf]
        %s2468 = scalar_lea.vmem %s5, 32
        %v2469 = vld [vmem:[%s2468] sm:$0xff]
        %v2470 = vld [vmem:[%s2468 + $0x8] sm:$0xff]
        %v2471 = vld [vmem:[%s2468 + $0x10] sm:$0xff]
        %v2472 = vld [vmem:[%s2468 + $0x18] sm:$0xff]
        %v2474 = vsel %vm1807, %v2465, 0
        %v2477 = vsel %vm1807, %v2466, 0
        %v2480 = vsel %vm1807, %v2467, 0
        %2482 = vmatpush.msra.mxu0 0.0
        %2483 = vmatpush.msra.mxu0 0.0
        %2484 = vmatpush.msra.mxu0 0.0
        %2485 = vmatpush.msra.mxu0 0.0
        %2486 = vmatpush.msra.mxu0 0.0
        %2487 = vmatpush.msra.mxu0 0.0
        %2488 = vmatpush.msra.mxu0 0.0
        %2489 = vmatpush.msra.mxu0 0.0
        %2490 = vmatpush.msra.mxu0 0.0
        %2491 = vmatpush.msra.mxu0 0.0
        %2492 = vmatpush.msra.mxu0 0.0
        %2493 = vmatpush.msra.mxu0 0.0
        %2494 = vmatpush.msra.mxu0 %v2472
        %2495 = vmatpush.msra.mxu0 %v2471
        %2496 = vmatpush.msra.mxu0 %v2470
        %2497 = vmatpush.msra.mxu0 %v2469
        %2498 = vmatmul.f32.gmra.mxu0 %v2474
        %v2499 = vpop.f32.mrf.mxu0
        %v2500 = vadd.f32 0.0, %v2499
        %2501 = vmatmul.f32.gmra.mxu0 %v2477
        %v2502 = vpop.f32.mrf.mxu0
        %v2503 = vadd.f32 0.0, %v2502
        %2504 = vmatmul.f32.gmra.mxu0 %v2480
        %v2505 = vpop.f32.mrf.mxu0
        %v2506 = vadd.f32 0.0, %v2505
        %2507 = vdwg.mxu0
        %v2509 = vsel %vm1807, %v2458, 0
        %v2512 = vsel %vm1807, %v2459, 0
        %v2515 = vsel %vm1807, %v2460, 0
        %2517 = vmatpush.msra.mxu0 0.0
        %2518 = vmatpush.msra.mxu0 0.0
        %2519 = vmatpush.msra.mxu0 0.0
        %2520 = vmatpush.msra.mxu0 0.0
        %2521 = vmatpush.msra.mxu0 0.0
        %2522 = vmatpush.msra.mxu0 0.0
        %2523 = vmatpush.msra.mxu0 0.0
        %2524 = vmatpush.msra.mxu0 0.0
        %2525 = vmatpush.msra.mxu0 0.0
        %2526 = vmatpush.msra.mxu0 0.0
        %2527 = vmatpush.msra.mxu0 0.0
        %2528 = vmatpush.msra.mxu0 0.0
        %2529 = vmatpush.msra.mxu0 %v2464
        %2530 = vmatpush.msra.mxu0 %v2463
        %2531 = vmatpush.msra.mxu0 %v2462
        %2532 = vmatpush.msra.mxu0 %v2461
        %2533 = vmatmul.f32.gmra.mxu0 %v2509
        %v2534 = vpop.f32.mrf.mxu0
        %v2535 = vadd.f32 %v2500, %v2534
        %2536 = vmatmul.f32.gmra.mxu0 %v2512
        %v2537 = vpop.f32.mrf.mxu0
        %v2538 = vadd.f32 %v2503, %v2537
        %2539 = vmatmul.f32.gmra.mxu0 %v2515
        %v2540 = vpop.f32.mrf.mxu0
        %v2541 = vadd.f32 %v2506, %v2540
        %2542 = vdwg.mxu0
        %v2543 = vld [vmem:[#allocation6 + $0x8] sm:$0xff]
        %v2544 = vld [vmem:[#allocation6 + $0x10] sm:$0xff]
        %v2545 = vld [vmem:[#allocation6 + $0x18] sm:$0xf]
        %s2546 = scalar_lea.vmem %s5, 64
        %v2547 = vld [vmem:[%s2546] sm:$0xff]
        %v2548 = vld [vmem:[%s2546 + $0x8] sm:$0xff]
        %v2549 = vld [vmem:[%s2546 + $0x10] sm:$0xff]
        %v2550 = vld [vmem:[%s2546 + $0x18] sm:$0xff]
        %v2552 = vsel %vm1807, %v2543, 0
        %v2555 = vsel %vm1807, %v2544, 0
        %v2558 = vsel %vm1807, %v2545, 0
        %2560 = vmatpush.msra.mxu0 0.0
        %2561 = vmatpush.msra.mxu0 0.0
        %2562 = vmatpush.msra.mxu0 0.0
        %2563 = vmatpush.msra.mxu0 0.0
        %2564 = vmatpush.msra.mxu0 0.0
        %2565 = vmatpush.msra.mxu0 0.0
        %2566 = vmatpush.msra.mxu0 0.0
        %2567 = vmatpush.msra.mxu0 0.0
        %2568 = vmatpush.msra.mxu0 0.0
        %2569 = vmatpush.msra.mxu0 0.0
        %2570 = vmatpush.msra.mxu0 0.0
        %2571 = vmatpush.msra.mxu0 0.0
        %2572 = vmatpush.msra.mxu0 %v2550
        %2573 = vmatpush.msra.mxu0 %v2549
        %2574 = vmatpush.msra.mxu0 %v2548
        %2575 = vmatpush.msra.mxu0 %v2547
        %2576 = vmatmul.f32.gmra.mxu0 %v2552
        %v2577 = vpop.f32.mrf.mxu0
        %v2578 = vadd.f32 0.0, %v2577
        %2579 = vmatmul.f32.gmra.mxu0 %v2555
        %v2580 = vpop.f32.mrf.mxu0
        %v2581 = vadd.f32 0.0, %v2580
        %2582 = vmatmul.f32.gmra.mxu0 %v2558
        %v2583 = vpop.f32.mrf.mxu0
        %v2584 = vadd.f32 0.0, %v2583
        %2585 = vdwg.mxu0
        %v2586 = vadd.f32 %v2535, %v2578
        %v2587 = vadd.f32 %v2538, %v2581
        %v2588 = vadd.f32 %v2541, %v2584
        %v2589 = vld [vmem:[#allocation12] sm:$0x1]
        %v2591 = vperm.slane %v2589, 0
        %v2593 = vadd.f32 %v2586, %v2591
        %v2594 = vadd.f32 %v2587, %v2591
        %v2595 = vadd.f32 %v2588, %v2591
        %v2596 = vmax.f32 %v2593, 0.0
        %v2597 = vmax.f32 %v2594, 0.0
        %v2598 = vmax.f32 %v2595, 0.0
        %2599 = vst.msk [vmem:[#allocation7] sm:$0xff] %vm1807, %v2596
        %2600 = vst.msk [vmem:[#allocation7 + $0x8] sm:$0xff] %vm1807, %v2597
        %2601 = vst.msk [vmem:[#allocation7 + $0x10] sm:$0xf] %vm1823, %v2598
        %v2602 = vld [vmem:[#allocation7] ss:$2 sm:$0xff]
        %s2603 = scalar_lea.vmem [#allocation7], 16
        %v2604 = vld [vmem:[%s2603] ss:$2 sm:$0x3]
        %s2605 = scalar_lea.vmem [#allocation7], 1
        %v2606 = vld [vmem:[%s2605] ss:$2 sm:$0xff]
        %s2607 = scalar_lea.vmem [#allocation7], 17
        %v2608 = vld [vmem:[%s2607] ss:$2 sm:$0x3]
        %v2609 = vmax.f32 %v2602, %v2606
        %v2610 = vmax.f32 %v2604, %v2608
        %v2611 = vld [vmem:[%s7] sm:$0xff]
        %v2612 = vld [vmem:[%s7 + $0x8] sm:$0xff]
        %v2613 = vld [vmem:[%s7 + $0x10] sm:$0xff]
        %v2614 = vld [vmem:[%s7 + $0x18] sm:$0xff]
        %v2615 = vld [vmem:[%s8] sm:$0x1]
        %v2617 = vperm.slane %v2615, 0
        %v2620 = vsel %vm1807, %v2609, 0
        %v2623 = vsel %vm1807, %v2610, 0
        %2625 = vmatpush.msra.mxu0 0.0
        %2626 = vmatpush.msra.mxu0 0.0
        %2627 = vmatpush.msra.mxu0 0.0
        %2628 = vmatpush.msra.mxu0 0.0
        %2629 = vmatpush.msra.mxu0 0.0
        %2630 = vmatpush.msra.mxu0 0.0
        %2631 = vmatpush.msra.mxu0 0.0
        %2632 = vmatpush.msra.mxu0 0.0
        %2633 = vmatpush.msra.mxu0 0.0
        %2634 = vmatpush.msra.mxu0 0.0
        %2635 = vmatpush.msra.mxu0 0.0
        %2636 = vmatpush.msra.mxu0 0.0
        %2637 = vmatpush.msra.mxu0 %v2614
        %2638 = vmatpush.msra.mxu0 %v2613
        %2639 = vmatpush.msra.mxu0 %v2612
        %2640 = vmatpush.msra.mxu0 %v2611
        %2641 = vmatmul.f32.gmra.mxu0 %v2620
        %v2642 = vpop.f32.mrf.mxu0
        %v2643 = vadd.f32 %v2617, %v2642
        %2644 = vmatmul.f32.gmra.mxu0 %v2623
        %v2645 = vpop.f32.mrf.mxu0
        %v2646 = vadd.f32 %v2617, %v2645
        %2647 = vdwg.mxu0
        %2650 = vrot.lane.b32.xlu0 %v2643, 112
        %v2651 = vpop.permute.xlu0 %2650
        %2652 = vrot.lane.b32.xlu0 %v2646, 112
        %v2653 = vpop.permute.xlu0 %2652
        %vm2654 = vcmask 130048
        %v2655 = vsel %vm2654, %v2643, 0
        %v2657 = vsel %vm2654, %v2646, 0
        %v2659 = vsel %vm2654, %v2651, 0
        %v2661 = vsel %vm2654, %v2653, 0
        %2663 = vmatpush.xpose.msra.mxu0 0.0
        %2664 = vmatpush.xpose.msra.mxu0 0.0
        %2665 = vmatpush.xpose.msra.mxu0 0.0
        %2666 = vmatpush.xpose.msra.mxu0 0.0
        %2667 = vmatpush.xpose.msra.mxu0 0.0
        %2668 = vmatpush.xpose.msra.mxu0 0.0
        %2669 = vmatpush.xpose.msra.mxu0 0.0
        %2670 = vmatpush.xpose.msra.mxu0 0.0
        %2671 = vmatpush.xpose.msra.mxu0 0.0
        %2672 = vmatpush.xpose.msra.mxu0 0.0
        %2673 = vmatpush.xpose.msra.mxu0 0.0
        %2674 = vmatpush.xpose.msra.mxu0 0.0
        %2675 = vmatpush.xpose.msra.mxu0 0.0
        %2676 = vmatpush.xpose.msra.mxu0 0.0
        %2677 = vmatpush.xpose.msra.mxu0 %v2661
        %2678 = vmatpush.xpose.msra.mxu0 %v2659
        %2679 = vmatmul.f32.gmra.mxu0 %v2655
        %v2680 = vpop.f32.mrf.mxu0
        %v2681 = vadd.f32 0.0, %v2680
        %2682 = vmatmul.f32.gmra.mxu0 %v2657
        %v2683 = vpop.f32.mrf.mxu0
        %v2684 = vadd.f32 0.0, %v2683
        %2685 = vdwg.mxu0
        %vm2686 = vcmask 80896
        %v2687 = vsel %vm2686, %v2681, -inf
        %2688 = vmax.xlane.f32.xlu0 %v2687
        %v2689 = vpop.xlane.xlu0 %2688
        %vm2690 = vcmask 74752
        %v2691 = vsel %vm2690, %v2684, -inf
        %2692 = vmax.xlane.f32.xlu0 %v2691
        %v2693 = vpop.xlane.xlu0 %2692
        %v2694 = vsub.f32 %v2681, %v2689
        %v2695 = vsub.f32 %v2684, %v2693
        %v2696 = vmul.f32 %v2694, 1.442695
        %v2697 = vpow.pop %v2696
        %v2698 = vmul.f32 %v2695, 1.442695
        %v2699 = vpow.pop %v2698
        %v2700 = vsel %vm2686, %v2697, 0.0
        %2701 = vadd.xlane.f32.xlu0 %v2700
        %v2702 = vpop.xlane.xlu0 %2701
        %v2703 = vsel %vm2690, %v2699, 0.0
        %2704 = vadd.xlane.f32.xlu0 %v2703
        %v2705 = vpop.xlane.xlu0 %2704
        %v2706 = vrcp.pop %v2702
        %v2707 = vrcp.pop %v2705
        %v2708 = vmul.f32 %v2697, %v2706
        %v2709 = vmul.f32 %v2699, %v2707
        %2710 = vrot.lane.b32.xlu0 %v2643, 96
        %v2711 = vpop.permute.xlu0 %2710
        %2712 = vrot.lane.b32.xlu0 %v2646, 96
        %v2713 = vpop.permute.xlu0 %2712
        %v2716 = vsel %vm2686, %v2708, 0
        %v2719 = vsel %vm2686, %v2709, 0
        %vm2721 = vcmask 1041408
        %v2722 = vsel %vm2721, %v2713, 0
        %2724 = vmatpush.msra.mxu0 0.0
        %2725 = vmatpush.msra.mxu0 0.0
        %2726 = vmatpush.msra.mxu0 0.0
        %2727 = vmatpush.msra.mxu0 0.0
        %2728 = vmatpush.msra.mxu0 0.0
        %2729 = vmatpush.msra.mxu0 0.0
        %2730 = vmatpush.msra.mxu0 0.0
        %2731 = vmatpush.msra.mxu0 0.0
        %2732 = vmatpush.msra.mxu0 0.0
        %2733 = vmatpush.msra.mxu0 0.0
        %2734 = vmatpush.msra.mxu0 0.0
        %2735 = vmatpush.msra.mxu0 0.0
        %2736 = vmatpush.msra.mxu0 0.0
        %2737 = vmatpush.msra.mxu0 0.0
        %2738 = vmatpush.msra.mxu0 %v2722
        %2739 = vmatpush.msra.mxu0 %v2711
        %2740 = vmatmul.f32.gmra.mxu0 %v2716
        %v2741 = vpop.f32.mrf.mxu0
        %v2742 = vadd.f32 0.0, %v2741
        %2743 = vmatmul.f32.gmra.mxu0 %v2719
        %v2744 = vpop.f32.mrf.mxu0
        %v2745 = vadd.f32 0.0, %v2744
        %2746 = vdwg.mxu0
        %v2747 = vld [vmem:[#allocation14] sm:$0xff]
        %v2748 = vld [vmem:[#allocation14 + $0x8] sm:$0xff]
        %v2749 = vld [vmem:[%s10] sm:$0x1]
        %v2751 = vperm.slane %v2749, 0
        %v2754 = vsel %vm2654, %v2742, 0
        %v2757 = vsel %vm2654, %v2745, 0
        %2759 = vmatpush.msra.mxu0 0.0
        %2760 = vmatpush.msra.mxu0 0.0
        %2761 = vmatpush.msra.mxu0 0.0
        %2762 = vmatpush.msra.mxu0 0.0
        %2763 = vmatpush.msra.mxu0 0.0
        %2764 = vmatpush.msra.mxu0 0.0
        %2765 = vmatpush.msra.mxu0 0.0
        %2766 = vmatpush.msra.mxu0 0.0
        %2767 = vmatpush.msra.mxu0 0.0
        %2768 = vmatpush.msra.mxu0 0.0
        %2769 = vmatpush.msra.mxu0 0.0
        %2770 = vmatpush.msra.mxu0 0.0
        %2771 = vmatpush.msra.mxu0 0.0
        %2772 = vmatpush.msra.mxu0 0.0
        %2773 = vmatpush.msra.mxu0 %v2748
        %2774 = vmatpush.msra.mxu0 %v2747
        %2775 = vmatmul.f32.gmra.mxu0 %v2754
        %v2776 = vpop.f32.mrf.mxu0
        %v2777 = vadd.f32 %v2751, %v2776
        %2778 = vmatmul.f32.gmra.mxu0 %v2757
        %v2779 = vpop.f32.mrf.mxu0
        %v2780 = vadd.f32 %v2751, %v2779
        %2781 = vdwg.mxu0
        %v2782 = vadd.f32 %v2777, %v2609
        %v2783 = vadd.f32 %v2780, %v2610
        %v2784 = vlaneseq
        %v2785 = vshrl.u32 %v2784, 7
        %v2786 = vadd.s32 %v2785, 8
        %v2787 = vlaneseq
        %v2788 = vand.u32 %v2787, 127
        %v2789 = vadd.s32 %v2785, %v2788
        %v2790 = vadd.s32 %v2786, %v2788
        %vm2791 = vcmp.eq.s32.totalorder %v2789, 9
        %vm2792 = vcmp.eq.s32.totalorder %v2790, 9
        %v2793 = vsel %vm2791, 1, 0
        %v2794 = vsel %vm2792, 1, 0
        %v2795 = vcvt.s32.f32 %v2793
        %v2796 = vcvt.s32.f32 %v2794
        %v2798 = vsel %vm2686, %v2795, 0
        %v2801 = vsel %vm2686, %v2796, 0
        %v2804 = vsel %vm2721, %v2783, 0
        %2806 = vmatpush.msra.mxu0 0.0
        %2807 = vmatpush.msra.mxu0 0.0
        %2808 = vmatpush.msra.mxu0 0.0
        %2809 = vmatpush.msra.mxu0 0.0
        %2810 = vmatpush.msra.mxu0 0.0
        %2811 = vmatpush.msra.mxu0 0.0
        %2812 = vmatpush.msra.mxu0 0.0
        %2813 = vmatpush.msra.mxu0 0.0
        %2814 = vmatpush.msra.mxu0 0.0
        %2815 = vmatpush.msra.mxu0 0.0
        %2816 = vmatpush.msra.mxu0 0.0
        %2817 = vmatpush.msra.mxu0 0.0
        %2818 = vmatpush.msra.mxu0 0.0
        %2819 = vmatpush.msra.mxu0 0.0
        %2820 = vmatpush.msra.mxu0 %v2804
        %2821 = vmatpush.msra.mxu0 %v2782
        %2822 = vmatmul.f32.gmra.mxu0 %v2798
        %v2823 = vpop.f32.mrf.mxu0
        %v2824 = vadd.f32 0.0, %v2823
        %2825 = vmatmul.f32.gmra.mxu0 %v2801
        %v2826 = vpop.f32.mrf.mxu0
        %v2827 = vadd.f32 0.0, %v2826
        %2828 = vdwg.mxu0
        %2831 = vrot.lane.b32.xlu0 %v2824, 32
        %v2832 = vpop.permute.xlu0 %2831
        %2833 = vrot.lane.b32.xlu0 %v2827, 32
        %v2834 = vpop.permute.xlu0 %2833
        %v2837 = vsel %vm1807, %v2782, %v2832
        %v2838 = vsel %vm1807, %v2783, %v2834
        %v2839 = vld [vmem:[#allocation17] sm:$0xff]
        %v2840 = vld [vmem:[#allocation17 + $0x8] sm:$0xff]
        %v2841 = vld [vmem:[#allocation17 + $0x10] sm:$0xff]
        %v2842 = vld [vmem:[#allocation17 + $0x18] sm:$0xff]
        %v2843 = vld [vmem:[#allocation17 + $0x20] sm:$0xff]
        %v2844 = vld [vmem:[#allocation17 + $0x28] sm:$0xff]
        %v2845 = vld [vmem:[#allocation17 + $0x30] sm:$0xff]
        %v2846 = vld [vmem:[#allocation17 + $0x38] sm:$0xff]
        %s2847 = scalar_lea.vmem [#allocation17], 64
        %v2848 = vld [vmem:[%s2847] sm:$0xff]
        %v2849 = vld [vmem:[%s2847 + $0x8] sm:$0xff]
        %v2850 = vld [vmem:[%s2847 + $0x10] sm:$0xff]
        %v2851 = vld [vmem:[%s2847 + $0x18] sm:$0xff]
        %v2852 = vld [vmem:[%s2847 + $0x20] sm:$0xff]
        %v2853 = vld [vmem:[%s2847 + $0x28] sm:$0xff]
        %v2854 = vld [vmem:[%s2847 + $0x30] sm:$0xff]
        %v2855 = vld [vmem:[%s2847 + $0x38] sm:$0xff]
        %s2856 = scalar_lea.vmem [#allocation17], 128
        %v2857 = vld [vmem:[%s2856] sm:$0xff]
        %v2858 = vld [vmem:[%s2856 + $0x8] sm:$0xff]
        %v2859 = vld [vmem:[%s2856 + $0x10] sm:$0xff]
        %v2860 = vld [vmem:[%s2856 + $0x18] sm:$0xff]
        %v2861 = vld [vmem:[%s2856 + $0x20] sm:$0xff]
        %v2862 = vld [vmem:[%s2856 + $0x28] sm:$0xff]
        %v2863 = vld [vmem:[%s2856 + $0x30] sm:$0xff]
        %v2864 = vld [vmem:[%s2856 + $0x38] sm:$0xff]
        %v2865 = vld [vmem:[%s14] sm:$0x1]
        %v2866 = vld [vmem:[%s14 + $0x1] sm:$0x1]
        %v2867 = vld [vmem:[%s14 + $0x2] sm:$0x1]
        %v2868 = vld [vmem:[#allocation15] sm:$0xff]
        %v2869 = vld [vmem:[#allocation15 + $0x8] sm:$0xff]
        %v2870 = vld [vmem:[#allocation15 + $0x10] sm:$0xff]
        %v2871 = vld [vmem:[#allocation15 + $0x18] sm:$0xff]
        %v2872 = vld [vmem:[#allocation15 + $0x20] sm:$0xff]
        %v2873 = vld [vmem:[#allocation15 + $0x28] sm:$0xff]
        %v2874 = vld [vmem:[#allocation15 + $0x30] sm:$0xff]
        %v2875 = vld [vmem:[#allocation15 + $0x38] sm:$0xff]
        %v2876 = vld [vmem:[%s12] sm:$0x1]
        %v2877 = vperm.slane %v2876, 0
        %vm2878 = vcmask 523264
        %v2880 = vsel %vm2878, %v2837, 0
        %v2883 = vsel %vm2878, %v2838, 0
        %2885 = vmatpush.msra.mxu0 0.0
        %2886 = vmatpush.msra.mxu0 0.0
        %2887 = vmatpush.msra.mxu0 0.0
        %2888 = vmatpush.msra.mxu0 0.0
        %2889 = vmatpush.msra.mxu0 0.0
        %2890 = vmatpush.msra.mxu0 0.0
        %2891 = vmatpush.msra.mxu0 0.0
        %2892 = vmatpush.msra.mxu0 0.0
        %2893 = vmatpush.msra.mxu0 %v2875
        %2894 = vmatpush.msra.mxu0 %v2874
        %2895 = vmatpush.msra.mxu0 %v2873
        %2896 = vmatpush.msra.mxu0 %v2872
        %2897 = vmatpush.msra.mxu0 %v2871
        %2898 = vmatpush.msra.mxu0 %v2870
        %2899 = vmatpush.msra.mxu0 %v2869
        %2900 = vmatpush.msra.mxu0 %v2868
        %2901 = vmatmul.f32.gmra.mxu0 %v2880
        %v2902 = vpop.f32.mrf.mxu0
        %v2903 = vadd.f32 %v2877, %v2902
        %2904 = vmatmul.f32.gmra.mxu0 %v2883
        %v2905 = vpop.f32.mrf.mxu0
        %v2906 = vadd.f32 %v2877, %v2905
        %2907 = vdwg.mxu0
        %s2908 = scalar_lea.vmem [#allocation15], 64
        %v2909 = vld [vmem:[%s2908] sm:$0xff]
        %v2910 = vld [vmem:[%s2908 + $0x8] sm:$0xff]
        %v2911 = vld [vmem:[%s2908 + $0x10] sm:$0xff]
        %v2912 = vld [vmem:[%s2908 + $0x18] sm:$0xff]
        %v2913 = vld [vmem:[%s2908 + $0x20] sm:$0xff]
        %v2914 = vld [vmem:[%s2908 + $0x28] sm:$0xff]
        %v2915 = vld [vmem:[%s2908 + $0x30] sm:$0xff]
        %v2916 = vld [vmem:[%s2908 + $0x38] sm:$0xff]
        %v2917 = vld [vmem:[%s12 + $0x1] sm:$0x1]
        %v2918 = vperm.slane %v2917, 0
        %2919 = vmatpush.msra.mxu0 0.0
        %2920 = vmatpush.msra.mxu0 0.0
        %2921 = vmatpush.msra.mxu0 0.0
        %2922 = vmatpush.msra.mxu0 0.0
        %2923 = vmatpush.msra.mxu0 0.0
        %2924 = vmatpush.msra.mxu0 0.0
        %2925 = vmatpush.msra.mxu0 0.0
        %2926 = vmatpush.msra.mxu0 0.0
        %2927 = vmatpush.msra.mxu0 %v2916
        %2928 = vmatpush.msra.mxu0 %v2915
        %2929 = vmatpush.msra.mxu0 %v2914
        %2930 = vmatpush.msra.mxu0 %v2913
        %2931 = vmatpush.msra.mxu0 %v2912
        %2932 = vmatpush.msra.mxu0 %v2911
        %2933 = vmatpush.msra.mxu0 %v2910
        %2934 = vmatpush.msra.mxu0 %v2909
        %2935 = vmatmul.f32.gmra.mxu0 %v2880
        %v2936 = vpop.f32.mrf.mxu0
        %v2937 = vadd.f32 %v2918, %v2936
        %2938 = vmatmul.f32.gmra.mxu0 %v2883
        %v2939 = vpop.f32.mrf.mxu0
        %v2940 = vadd.f32 %v2918, %v2939
        %2941 = vdwg.mxu0
        %s2942 = scalar_lea.vmem [#allocation15], 128
        %v2943 = vld [vmem:[%s2942] sm:$0xff]
        %v2944 = vld [vmem:[%s2942 + $0x8] sm:$0xff]
        %v2945 = vld [vmem:[%s2942 + $0x10] sm:$0xff]
        %v2946 = vld [vmem:[%s2942 + $0x18] sm:$0xff]
        %v2947 = vld [vmem:[%s2942 + $0x20] sm:$0xff]
        %v2948 = vld [vmem:[%s2942 + $0x28] sm:$0xff]
        %v2949 = vld [vmem:[%s2942 + $0x30] sm:$0xff]
        %v2950 = vld [vmem:[%s2942 + $0x38] sm:$0xff]
        %v2951 = vld [vmem:[%s12 + $0x2] sm:$0x1]
        %v2952 = vperm.slane %v2951, 0
        %2953 = vmatpush.msra.mxu0 0.0
        %2954 = vmatpush.msra.mxu0 0.0
        %2955 = vmatpush.msra.mxu0 0.0
        %2956 = vmatpush.msra.mxu0 0.0
        %2957 = vmatpush.msra.mxu0 0.0
        %2958 = vmatpush.msra.mxu0 0.0
        %2959 = vmatpush.msra.mxu0 0.0
        %2960 = vmatpush.msra.mxu0 0.0
        %2961 = vmatpush.msra.mxu0 %v2950
        %2962 = vmatpush.msra.mxu0 %v2949
        %2963 = vmatpush.msra.mxu0 %v2948
        %2964 = vmatpush.msra.mxu0 %v2947
        %2965 = vmatpush.msra.mxu0 %v2946
        %2966 = vmatpush.msra.mxu0 %v2945
        %2967 = vmatpush.msra.mxu0 %v2944
        %2968 = vmatpush.msra.mxu0 %v2943
        %2969 = vmatmul.f32.gmra.mxu0 %v2880
        %v2970 = vpop.f32.mrf.mxu0
        %v2971 = vadd.f32 %v2952, %v2970
        %2972 = vmatmul.f32.gmra.mxu0 %v2883
        %v2973 = vpop.f32.mrf.mxu0
        %v2974 = vadd.f32 %v2952, %v2973
        %2975 = vdwg.mxu0
        %v2977 = vsel %vm2878, 0.0, 0
        %2979 = vmatpush.msra.mxu0 0.0
        %2980 = vmatpush.msra.mxu0 0.0
        %2981 = vmatpush.msra.mxu0 0.0
        %2982 = vmatpush.msra.mxu0 0.0
        %2983 = vmatpush.msra.mxu0 0.0
        %2984 = vmatpush.msra.mxu0 0.0
        %2985 = vmatpush.msra.mxu0 0.0
        %2986 = vmatpush.msra.mxu0 0.0
        %2987 = vmatpush.msra.mxu0 %v2846
        %2988 = vmatpush.msra.mxu0 %v2845
        %2989 = vmatpush.msra.mxu0 %v2844
        %2990 = vmatpush.msra.mxu0 %v2843
        %2991 = vmatpush.msra.mxu0 %v2842
        %2992 = vmatpush.msra.mxu0 %v2841
        %2993 = vmatpush.msra.mxu0 %v2840
        %2994 = vmatpush.msra.mxu0 %v2839
        %2995 = vmatmul.f32.gmra.mxu0 %v2977
        %v2996 = vpop.f32.mrf.mxu0
        %v2997 = vadd.f32 %v2865, %v2996
        %2998 = vdwg.mxu0
        %2999 = vmatpush.msra.mxu0 0.0
        %3000 = vmatpush.msra.mxu0 0.0
        %3001 = vmatpush.msra.mxu0 0.0
        %3002 = vmatpush.msra.mxu0 0.0
        %3003 = vmatpush.msra.mxu0 0.0
        %3004 = vmatpush.msra.mxu0 0.0
        %3005 = vmatpush.msra.mxu0 0.0
        %3006 = vmatpush.msra.mxu0 0.0
        %3007 = vmatpush.msra.mxu0 %v2855
        %3008 = vmatpush.msra.mxu0 %v2854
        %3009 = vmatpush.msra.mxu0 %v2853
        %3010 = vmatpush.msra.mxu0 %v2852
        %3011 = vmatpush.msra.mxu0 %v2851
        %3012 = vmatpush.msra.mxu0 %v2850
        %3013 = vmatpush.msra.mxu0 %v2849
        %3014 = vmatpush.msra.mxu0 %v2848
        %3015 = vmatmul.f32.gmra.mxu0 %v2977
        %v3016 = vpop.f32.mrf.mxu0
        %v3017 = vadd.f32 %v2866, %v3016
        %3018 = vdwg.mxu0
        %3019 = vmatpush.msra.mxu0 0.0
        %3020 = vmatpush.msra.mxu0 0.0
        %3021 = vmatpush.msra.mxu0 0.0
        %3022 = vmatpush.msra.mxu0 0.0
        %3023 = vmatpush.msra.mxu0 0.0
        %3024 = vmatpush.msra.mxu0 0.0
        %3025 = vmatpush.msra.mxu0 0.0
        %3026 = vmatpush.msra.mxu0 0.0
        %3027 = vmatpush.msra.mxu0 %v2864
        %3028 = vmatpush.msra.mxu0 %v2863
        %3029 = vmatpush.msra.mxu0 %v2862
        %3030 = vmatpush.msra.mxu0 %v2861
        %3031 = vmatpush.msra.mxu0 %v2860
        %3032 = vmatpush.msra.mxu0 %v2859
        %3033 = vmatpush.msra.mxu0 %v2858
        %3034 = vmatpush.msra.mxu0 %v2857
        %3035 = vmatmul.f32.gmra.mxu0 %v2977
        %v3036 = vpop.f32.mrf.mxu0
        %v3037 = vadd.f32 %v2867, %v3036
        %3038 = vdwg.mxu0
        %v3039 = vadd.f32 %v2903, %v2997
        %v3040 = vxor.u32 %v3039, 2147483648
        %v3041 = vmul.f32 %v3040, 1.442695
        %v3042 = vpow.pop %v3041
        %v3043 = vadd.f32 %v3042, 1.0
        %v3044 = vrcp.pop %v3043
        %v3045 = vmul.f32 %v3043, %v3044
        %v3046 = vsub.f32 1.0, %v3045
        %v3047 = vmul.f32 %v3044, %v3046
        %v3048 = vadd.f32 %v3044, %v3047
        %vm3049 = vweird.f32 %v3043
        %vm3050 = vweird.f32 %v3044
        %vm3051 = vmor %vm3049, %vm3050
        %v3052 = vsel %vm3051, %v3044, %v3048
        %v3053 = vand.u32 2147483647, %v3043
        %vm3054 = vcmp.eq.f32.partialorder %v3053, 8.507059e+37
        %v3055 = vand.u32 %v3043, 2147483648
        %v3056 = vor.u32 1.1754944e-38, %v3055
        %v3057 = vsel %vm3054, %v3056, %v3052
        %v3058 = vmul.f32 1.0, %v3057
        %v3059 = vadd.f32 %v2937, %v3017
        %v3060 = vxor.u32 %v3059, 2147483648
        %v3061 = vmul.f32 %v3060, 1.442695
        %v3062 = vpow.pop %v3061
        %v3063 = vadd.f32 %v3062, 1.0
        %v3064 = vrcp.pop %v3063
        %v3065 = vmul.f32 %v3063, %v3064
        %v3066 = vsub.f32 1.0, %v3065
        %v3067 = vmul.f32 %v3064, %v3066
        %v3068 = vadd.f32 %v3064, %v3067
        %vm3069 = vweird.f32 %v3063
        %vm3070 = vweird.f32 %v3064
        %vm3071 = vmor %vm3069, %vm3070
        %v3072 = vsel %vm3071, %v3064, %v3068
        %v3073 = vand.u32 2147483647, %v3063
        %vm3074 = vcmp.eq.f32.partialorder %v3073, 8.507059e+37
        %v3075 = vand.u32 %v3063, 2147483648
        %v3076 = vor.u32 1.1754944e-38, %v3075
        %v3077 = vsel %vm3074, %v3076, %v3072
        %v3078 = vmul.f32 1.0, %v3077
        %v3079 = vmul.f32 %v3058, %v3037
        %v3080 = vadd.f32 %v2971, %v3079
        %v3081 = vtanh.pop %v3080
        %v3082 = vsub.f32 1.0, %v3078
        %v3083 = vmul.f32 %v3082, %v3081
        %v3084 = vmul.f32 %v3078, 0.0
        %v3085 = vadd.f32 %v3083, %v3084
        %v3087 = vsel %vm2878, %v3085, 0
        %3089 = vmatpush.msra.mxu0 0.0
        %3090 = vmatpush.msra.mxu0 0.0
        %3091 = vmatpush.msra.mxu0 0.0
        %3092 = vmatpush.msra.mxu0 0.0
        %3093 = vmatpush.msra.mxu0 0.0
        %3094 = vmatpush.msra.mxu0 0.0
        %3095 = vmatpush.msra.mxu0 0.0
        %3096 = vmatpush.msra.mxu0 0.0
        %3097 = vmatpush.msra.mxu0 %v2846
        %3098 = vmatpush.msra.mxu0 %v2845
        %3099 = vmatpush.msra.mxu0 %v2844
        %3100 = vmatpush.msra.mxu0 %v2843
        %3101 = vmatpush.msra.mxu0 %v2842
        %3102 = vmatpush.msra.mxu0 %v2841
        %3103 = vmatpush.msra.mxu0 %v2840
        %3104 = vmatpush.msra.mxu0 %v2839
        %3105 = vmatmul.f32.gmra.mxu0 %v3087
        %v3106 = vpop.f32.mrf.mxu0
        %v3107 = vadd.f32 %v2865, %v3106
        %3108 = vdwg.mxu0
        %3109 = vmatpush.msra.mxu0 0.0
        %3110 = vmatpush.msra.mxu0 0.0
        %3111 = vmatpush.msra.mxu0 0.0
        %3112 = vmatpush.msra.mxu0 0.0
        %3113 = vmatpush.msra.mxu0 0.0
        %3114 = vmatpush.msra.mxu0 0.0
        %3115 = vmatpush.msra.mxu0 0.0
        %3116 = vmatpush.msra.mxu0 0.0
        %3117 = vmatpush.msra.mxu0 %v2855
        %3118 = vmatpush.msra.mxu0 %v2854
        %3119 = vmatpush.msra.mxu0 %v2853
        %3120 = vmatpush.msra.mxu0 %v2852
        %3121 = vmatpush.msra.mxu0 %v2851
        %3122 = vmatpush.msra.mxu0 %v2850
        %3123 = vmatpush.msra.mxu0 %v2849
        %3124 = vmatpush.msra.mxu0 %v2848
        %3125 = vmatmul.f32.gmra.mxu0 %v3087
        %v3126 = vpop.f32.mrf.mxu0
        %v3127 = vadd.f32 %v2866, %v3126
        %3128 = vdwg.mxu0
        %3129 = vmatpush.msra.mxu0 0.0
        %3130 = vmatpush.msra.mxu0 0.0
        %3131 = vmatpush.msra.mxu0 0.0
        %3132 = vmatpush.msra.mxu0 0.0
        %3133 = vmatpush.msra.mxu0 0.0
        %3134 = vmatpush.msra.mxu0 0.0
        %3135 = vmatpush.msra.mxu0 0.0
        %3136 = vmatpush.msra.mxu0 0.0
        %3137 = vmatpush.msra.mxu0 %v2864
        %3138 = vmatpush.msra.mxu0 %v2863
        %3139 = vmatpush.msra.mxu0 %v2862
        %3140 = vmatpush.msra.mxu0 %v2861
        %3141 = vmatpush.msra.mxu0 %v2860
        %3142 = vmatpush.msra.mxu0 %v2859
        %3143 = vmatpush.msra.mxu0 %v2858
        %3144 = vmatpush.msra.mxu0 %v2857
        %3145 = vmatmul.f32.gmra.mxu0 %v3087
        %v3146 = vpop.f32.mrf.mxu0
        %v3147 = vadd.f32 %v2867, %v3146
        %3148 = vdwg.mxu0
        %v3150 = vrot.slane %v3107, 7
        %v3152 = vadd.f32 %v2903, %v3150
        %v3153 = vxor.u32 %v3152, 2147483648
        %v3154 = vmul.f32 %v3153, 1.442695
        %v3155 = vpow.pop %v3154
        %v3156 = vadd.f32 %v3155, 1.0
        %v3157 = vrcp.pop %v3156
        %v3158 = vmul.f32 %v3156, %v3157
        %v3159 = vsub.f32 1.0, %v3158
        %v3160 = vmul.f32 %v3157, %v3159
        %v3161 = vadd.f32 %v3157, %v3160
        %vm3162 = vweird.f32 %v3156
        %vm3163 = vweird.f32 %v3157
        %vm3164 = vmor %vm3162, %vm3163
        %v3165 = vsel %vm3164, %v3157, %v3161
        %v3166 = vand.u32 2147483647, %v3156
        %vm3167 = vcmp.eq.f32.partialorder %v3166, 8.507059e+37
        %v3168 = vand.u32 %v3156, 2147483648
        %v3169 = vor.u32 1.1754944e-38, %v3168
        %v3170 = vsel %vm3167, %v3169, %v3165
        %v3171 = vmul.f32 1.0, %v3170
        %v3173 = vrot.slane %v3127, 7
        %v3175 = vadd.f32 %v2937, %v3173
        %v3176 = vxor.u32 %v3175, 2147483648
        %v3177 = vmul.f32 %v3176, 1.442695
        %v3178 = vpow.pop %v3177
        %v3179 = vadd.f32 %v3178, 1.0
        %v3180 = vrcp.pop %v3179
        %v3181 = vmul.f32 %v3179, %v3180
        %v3182 = vsub.f32 1.0, %v3181
        %v3183 = vmul.f32 %v3180, %v3182
        %v3184 = vadd.f32 %v3180, %v3183
        %vm3185 = vweird.f32 %v3179
        %vm3186 = vweird.f32 %v3180
        %vm3187 = vmor %vm3185, %vm3186
        %v3188 = vsel %vm3187, %v3180, %v3184
        %v3189 = vand.u32 2147483647, %v3179
        %vm3190 = vcmp.eq.f32.partialorder %v3189, 8.507059e+37
        %v3191 = vand.u32 %v3179, 2147483648
        %v3192 = vor.u32 1.1754944e-38, %v3191
        %v3193 = vsel %vm3190, %v3192, %v3188
        %v3194 = vmul.f32 1.0, %v3193
        %v3196 = vrot.slane %v3147, 7
        %v3198 = vmul.f32 %v3171, %v3196
        %v3199 = vadd.f32 %v2971, %v3198
        %v3200 = vtanh.pop %v3199
        %v3201 = vsub.f32 1.0, %v3194
        %v3202 = vmul.f32 %v3201, %v3200
        %v3203 = vrot.slane %v3085, 7
        %v3205 = vmul.f32 %v3194, %v3203
        %v3206 = vadd.f32 %v3202, %v3205
        %v3208 = vrot.slane %v3206, 1
        %v3209 = vsel %vm2878, %v3208, 0
        %3211 = vmatpush.msra.mxu0 0.0
        %3212 = vmatpush.msra.mxu0 0.0
        %3213 = vmatpush.msra.mxu0 0.0
        %3214 = vmatpush.msra.mxu0 0.0
        %3215 = vmatpush.msra.mxu0 0.0
        %3216 = vmatpush.msra.mxu0 0.0
        %3217 = vmatpush.msra.mxu0 0.0
        %3218 = vmatpush.msra.mxu0 0.0
        %3219 = vmatpush.msra.mxu0 %v2846
        %3220 = vmatpush.msra.mxu0 %v2845
        %3221 = vmatpush.msra.mxu0 %v2844
        %3222 = vmatpush.msra.mxu0 %v2843
        %3223 = vmatpush.msra.mxu0 %v2842
        %3224 = vmatpush.msra.mxu0 %v2841
        %3225 = vmatpush.msra.mxu0 %v2840
        %3226 = vmatpush.msra.mxu0 %v2839
        %3227 = vmatmul.f32.gmra.mxu0 %v3209
        %v3228 = vpop.f32.mrf.mxu0
        %v3229 = vadd.f32 %v2865, %v3228
        %3230 = vdwg.mxu0
        %3231 = vmatpush.msra.mxu0 0.0
        %3232 = vmatpush.msra.mxu0 0.0
        %3233 = vmatpush.msra.mxu0 0.0
        %3234 = vmatpush.msra.mxu0 0.0
        %3235 = vmatpush.msra.mxu0 0.0
        %3236 = vmatpush.msra.mxu0 0.0
        %3237 = vmatpush.msra.mxu0 0.0
        %3238 = vmatpush.msra.mxu0 0.0
        %3239 = vmatpush.msra.mxu0 %v2855
        %3240 = vmatpush.msra.mxu0 %v2854
        %3241 = vmatpush.msra.mxu0 %v2853
        %3242 = vmatpush.msra.mxu0 %v2852
        %3243 = vmatpush.msra.mxu0 %v2851
        %3244 = vmatpush.msra.mxu0 %v2850
        %3245 = vmatpush.msra.mxu0 %v2849
        %3246 = vmatpush.msra.mxu0 %v2848
        %3247 = vmatmul.f32.gmra.mxu0 %v3209
        %v3248 = vpop.f32.mrf.mxu0
        %v3249 = vadd.f32 %v2866, %v3248
        %3250 = vdwg.mxu0
        %3251 = vmatpush.msra.mxu0 0.0
        %3252 = vmatpush.msra.mxu0 0.0
        %3253 = vmatpush.msra.mxu0 0.0
        %3254 = vmatpush.msra.mxu0 0.0
        %3255 = vmatpush.msra.mxu0 0.0
        %3256 = vmatpush.msra.mxu0 0.0
        %3257 = vmatpush.msra.mxu0 0.0
        %3258 = vmatpush.msra.mxu0 0.0
        %3259 = vmatpush.msra.mxu0 %v2864
        %3260 = vmatpush.msra.mxu0 %v2863
        %3261 = vmatpush.msra.mxu0 %v2862
        %3262 = vmatpush.msra.mxu0 %v2861
        %3263 = vmatpush.msra.mxu0 %v2860
        %3264 = vmatpush.msra.mxu0 %v2859
        %3265 = vmatpush.msra.mxu0 %v2858
        %3266 = vmatpush.msra.mxu0 %v2857
        %3267 = vmatmul.f32.gmra.mxu0 %v3209
        %v3268 = vpop.f32.mrf.mxu0
        %v3269 = vadd.f32 %v2867, %v3268
        %3270 = vdwg.mxu0
        %v3272 = vrot.slane %v3229, 6
        %v3274 = vadd.f32 %v2903, %v3272
        %v3275 = vxor.u32 %v3274, 2147483648
        %v3276 = vmul.f32 %v3275, 1.442695
        %v3277 = vpow.pop %v3276
        %v3278 = vadd.f32 %v3277, 1.0
        %v3279 = vrcp.pop %v3278
        %v3280 = vmul.f32 %v3278, %v3279
        %v3281 = vsub.f32 1.0, %v3280
        %v3282 = vmul.f32 %v3279, %v3281
        %v3283 = vadd.f32 %v3279, %v3282
        %vm3284 = vweird.f32 %v3278
        %vm3285 = vweird.f32 %v3279
        %vm3286 = vmor %vm3284, %vm3285
        %v3287 = vsel %vm3286, %v3279, %v3283
        %v3288 = vand.u32 2147483647, %v3278
        %vm3289 = vcmp.eq.f32.partialorder %v3288, 8.507059e+37
        %v3290 = vand.u32 %v3278, 2147483648
        %v3291 = vor.u32 1.1754944e-38, %v3290
        %v3292 = vsel %vm3289, %v3291, %v3287
        %v3293 = vmul.f32 1.0, %v3292
        %v3295 = vrot.slane %v3249, 6
        %v3297 = vadd.f32 %v2937, %v3295
        %v3298 = vxor.u32 %v3297, 2147483648
        %v3299 = vmul.f32 %v3298, 1.442695
        %v3300 = vpow.pop %v3299
        %v3301 = vadd.f32 %v3300, 1.0
        %v3302 = vrcp.pop %v3301
        %v3303 = vmul.f32 %v3301, %v3302
        %v3304 = vsub.f32 1.0, %v3303
        %v3305 = vmul.f32 %v3302, %v3304
        %v3306 = vadd.f32 %v3302, %v3305
        %vm3307 = vweird.f32 %v3301
        %vm3308 = vweird.f32 %v3302
        %vm3309 = vmor %vm3307, %vm3308
        %v3310 = vsel %vm3309, %v3302, %v3306
        %v3311 = vand.u32 2147483647, %v3301
        %vm3312 = vcmp.eq.f32.partialorder %v3311, 8.507059e+37
        %v3313 = vand.u32 %v3301, 2147483648
        %v3314 = vor.u32 1.1754944e-38, %v3313
        %v3315 = vsel %vm3312, %v3314, %v3310
        %v3316 = vmul.f32 1.0, %v3315
        %v3318 = vrot.slane %v3269, 6
        %v3320 = vmul.f32 %v3293, %v3318
        %v3321 = vadd.f32 %v2971, %v3320
        %v3322 = vtanh.pop %v3321
        %v3323 = vsub.f32 1.0, %v3316
        %v3324 = vmul.f32 %v3323, %v3322
        %v3325 = vrot.slane %v3206, 7
        %v3327 = vmul.f32 %v3316, %v3325
        %v3328 = vadd.f32 %v3324, %v3327
        %v3330 = vrot.slane %v3328, 2
        %v3331 = vsel %vm2878, %v3330, 0
        %3333 = vmatpush.msra.mxu0 0.0
        %3334 = vmatpush.msra.mxu0 0.0
        %3335 = vmatpush.msra.mxu0 0.0
        %3336 = vmatpush.msra.mxu0 0.0
        %3337 = vmatpush.msra.mxu0 0.0
        %3338 = vmatpush.msra.mxu0 0.0
        %3339 = vmatpush.msra.mxu0 0.0
        %3340 = vmatpush.msra.mxu0 0.0
        %3341 = vmatpush.msra.mxu0 %v2846
        %3342 = vmatpush.msra.mxu0 %v2845
        %3343 = vmatpush.msra.mxu0 %v2844
        %3344 = vmatpush.msra.mxu0 %v2843
        %3345 = vmatpush.msra.mxu0 %v2842
        %3346 = vmatpush.msra.mxu0 %v2841
        %3347 = vmatpush.msra.mxu0 %v2840
        %3348 = vmatpush.msra.mxu0 %v2839
        %3349 = vmatmul.f32.gmra.mxu0 %v3331
        %v3350 = vpop.f32.mrf.mxu0
        %v3351 = vadd.f32 %v2865, %v3350
        %3352 = vdwg.mxu0
        %3353 = vmatpush.msra.mxu0 0.0
        %3354 = vmatpush.msra.mxu0 0.0
        %3355 = vmatpush.msra.mxu0 0.0
        %3356 = vmatpush.msra.mxu0 0.0
        %3357 = vmatpush.msra.mxu0 0.0
        %3358 = vmatpush.msra.mxu0 0.0
        %3359 = vmatpush.msra.mxu0 0.0
        %3360 = vmatpush.msra.mxu0 0.0
        %3361 = vmatpush.msra.mxu0 %v2855
        %3362 = vmatpush.msra.mxu0 %v2854
        %3363 = vmatpush.msra.mxu0 %v2853
        %3364 = vmatpush.msra.mxu0 %v2852
        %3365 = vmatpush.msra.mxu0 %v2851
        %3366 = vmatpush.msra.mxu0 %v2850
        %3367 = vmatpush.msra.mxu0 %v2849
        %3368 = vmatpush.msra.mxu0 %v2848
        %3369 = vmatmul.f32.gmra.mxu0 %v3331
        %v3370 = vpop.f32.mrf.mxu0
        %v3371 = vadd.f32 %v2866, %v3370
        %3372 = vdwg.mxu0
        %3373 = vmatpush.msra.mxu0 0.0
        %3374 = vmatpush.msra.mxu0 0.0
        %3375 = vmatpush.msra.mxu0 0.0
        %3376 = vmatpush.msra.mxu0 0.0
        %3377 = vmatpush.msra.mxu0 0.0
        %3378 = vmatpush.msra.mxu0 0.0
        %3379 = vmatpush.msra.mxu0 0.0
        %3380 = vmatpush.msra.mxu0 0.0
        %3381 = vmatpush.msra.mxu0 %v2864
        %3382 = vmatpush.msra.mxu0 %v2863
        %3383 = vmatpush.msra.mxu0 %v2862
        %3384 = vmatpush.msra.mxu0 %v2861
        %3385 = vmatpush.msra.mxu0 %v2860
        %3386 = vmatpush.msra.mxu0 %v2859
        %3387 = vmatpush.msra.mxu0 %v2858
        %3388 = vmatpush.msra.mxu0 %v2857
        %3389 = vmatmul.f32.gmra.mxu0 %v3331
        %v3390 = vpop.f32.mrf.mxu0
        %v3391 = vadd.f32 %v2867, %v3390
        %3392 = vdwg.mxu0
        %v3394 = vrot.slane %v3351, 5
        %v3396 = vadd.f32 %v2903, %v3394
        %v3397 = vxor.u32 %v3396, 2147483648
        %v3398 = vmul.f32 %v3397, 1.442695
        %v3399 = vpow.pop %v3398
        %v3400 = vadd.f32 %v3399, 1.0
        %v3401 = vrcp.pop %v3400
        %v3402 = vmul.f32 %v3400, %v3401
        %v3403 = vsub.f32 1.0, %v3402
        %v3404 = vmul.f32 %v3401, %v3403
        %v3405 = vadd.f32 %v3401, %v3404
        %vm3406 = vweird.f32 %v3400
        %vm3407 = vweird.f32 %v3401
        %vm3408 = vmor %vm3406, %vm3407
        %v3409 = vsel %vm3408, %v3401, %v3405
        %v3410 = vand.u32 2147483647, %v3400
        %vm3411 = vcmp.eq.f32.partialorder %v3410, 8.507059e+37
        %v3412 = vand.u32 %v3400, 2147483648
        %v3413 = vor.u32 1.1754944e-38, %v3412
        %v3414 = vsel %vm3411, %v3413, %v3409
        %v3415 = vmul.f32 1.0, %v3414
        %v3417 = vrot.slane %v3371, 5
        %v3419 = vadd.f32 %v2937, %v3417
        %v3420 = vxor.u32 %v3419, 2147483648
        %v3421 = vmul.f32 %v3420, 1.442695
        %v3422 = vpow.pop %v3421
        %v3423 = vadd.f32 %v3422, 1.0
        %v3424 = vrcp.pop %v3423
        %v3425 = vmul.f32 %v3423, %v3424
        %v3426 = vsub.f32 1.0, %v3425
        %v3427 = vmul.f32 %v3424, %v3426
        %v3428 = vadd.f32 %v3424, %v3427
        %vm3429 = vweird.f32 %v3423
        %vm3430 = vweird.f32 %v3424
        %vm3431 = vmor %vm3429, %vm3430
        %v3432 = vsel %vm3431, %v3424, %v3428
        %v3433 = vand.u32 2147483647, %v3423
        %vm3434 = vcmp.eq.f32.partialorder %v3433, 8.507059e+37
        %v3435 = vand.u32 %v3423, 2147483648
        %v3436 = vor.u32 1.1754944e-38, %v3435
        %v3437 = vsel %vm3434, %v3436, %v3432
        %v3438 = vmul.f32 1.0, %v3437
        %v3440 = vrot.slane %v3391, 5
        %v3442 = vmul.f32 %v3415, %v3440
        %v3443 = vadd.f32 %v2971, %v3442
        %v3444 = vtanh.pop %v3443
        %v3445 = vsub.f32 1.0, %v3438
        %v3446 = vmul.f32 %v3445, %v3444
        %v3447 = vrot.slane %v3328, 7
        %v3449 = vmul.f32 %v3438, %v3447
        %v3450 = vadd.f32 %v3446, %v3449
        %v3452 = vrot.slane %v3450, 3
        %v3453 = vsel %vm2878, %v3452, 0
        %3455 = vmatpush.msra.mxu0 0.0
        %3456 = vmatpush.msra.mxu0 0.0
        %3457 = vmatpush.msra.mxu0 0.0
        %3458 = vmatpush.msra.mxu0 0.0
        %3459 = vmatpush.msra.mxu0 0.0
        %3460 = vmatpush.msra.mxu0 0.0
        %3461 = vmatpush.msra.mxu0 0.0
        %3462 = vmatpush.msra.mxu0 0.0
        %3463 = vmatpush.msra.mxu0 %v2846
        %3464 = vmatpush.msra.mxu0 %v2845
        %3465 = vmatpush.msra.mxu0 %v2844
        %3466 = vmatpush.msra.mxu0 %v2843
        %3467 = vmatpush.msra.mxu0 %v2842
        %3468 = vmatpush.msra.mxu0 %v2841
        %3469 = vmatpush.msra.mxu0 %v2840
        %3470 = vmatpush.msra.mxu0 %v2839
        %3471 = vmatmul.f32.gmra.mxu0 %v3453
        %v3472 = vpop.f32.mrf.mxu0
        %v3473 = vadd.f32 %v2865, %v3472
        %3474 = vdwg.mxu0
        %3475 = vmatpush.msra.mxu0 0.0
        %3476 = vmatpush.msra.mxu0 0.0
        %3477 = vmatpush.msra.mxu0 0.0
        %3478 = vmatpush.msra.mxu0 0.0
        %3479 = vmatpush.msra.mxu0 0.0
        %3480 = vmatpush.msra.mxu0 0.0
        %3481 = vmatpush.msra.mxu0 0.0
        %3482 = vmatpush.msra.mxu0 0.0
        %3483 = vmatpush.msra.mxu0 %v2855
        %3484 = vmatpush.msra.mxu0 %v2854
        %3485 = vmatpush.msra.mxu0 %v2853
        %3486 = vmatpush.msra.mxu0 %v2852
        %3487 = vmatpush.msra.mxu0 %v2851
        %3488 = vmatpush.msra.mxu0 %v2850
        %3489 = vmatpush.msra.mxu0 %v2849
        %3490 = vmatpush.msra.mxu0 %v2848
        %3491 = vmatmul.f32.gmra.mxu0 %v3453
        %v3492 = vpop.f32.mrf.mxu0
        %v3493 = vadd.f32 %v2866, %v3492
        %3494 = vdwg.mxu0
        %3495 = vmatpush.msra.mxu0 0.0
        %3496 = vmatpush.msra.mxu0 0.0
        %3497 = vmatpush.msra.mxu0 0.0
        %3498 = vmatpush.msra.mxu0 0.0
        %3499 = vmatpush.msra.mxu0 0.0
        %3500 = vmatpush.msra.mxu0 0.0
        %3501 = vmatpush.msra.mxu0 0.0
        %3502 = vmatpush.msra.mxu0 0.0
        %3503 = vmatpush.msra.mxu0 %v2864
        %3504 = vmatpush.msra.mxu0 %v2863
        %3505 = vmatpush.msra.mxu0 %v2862
        %3506 = vmatpush.msra.mxu0 %v2861
        %3507 = vmatpush.msra.mxu0 %v2860
        %3508 = vmatpush.msra.mxu0 %v2859
        %3509 = vmatpush.msra.mxu0 %v2858
        %3510 = vmatpush.msra.mxu0 %v2857
        %3511 = vmatmul.f32.gmra.mxu0 %v3453
        %v3512 = vpop.f32.mrf.mxu0
        %v3513 = vadd.f32 %v2867, %v3512
        %3514 = vdwg.mxu0
        %v3516 = vrot.slane %v3473, 4
        %v3518 = vadd.f32 %v2903, %v3516
        %v3519 = vxor.u32 %v3518, 2147483648
        %v3520 = vmul.f32 %v3519, 1.442695
        %v3521 = vpow.pop %v3520
        %v3522 = vadd.f32 %v3521, 1.0
        %v3523 = vrcp.pop %v3522
        %v3524 = vmul.f32 %v3522, %v3523
        %v3525 = vsub.f32 1.0, %v3524
        %v3526 = vmul.f32 %v3523, %v3525
        %v3527 = vadd.f32 %v3523, %v3526
        %vm3528 = vweird.f32 %v3522
        %vm3529 = vweird.f32 %v3523
        %vm3530 = vmor %vm3528, %vm3529
        %v3531 = vsel %vm3530, %v3523, %v3527
        %v3532 = vand.u32 2147483647, %v3522
        %vm3533 = vcmp.eq.f32.partialorder %v3532, 8.507059e+37
        %v3534 = vand.u32 %v3522, 2147483648
        %v3535 = vor.u32 1.1754944e-38, %v3534
        %v3536 = vsel %vm3533, %v3535, %v3531
        %v3537 = vmul.f32 1.0, %v3536
        %v3539 = vrot.slane %v3493, 4
        %v3541 = vadd.f32 %v2937, %v3539
        %v3542 = vxor.u32 %v3541, 2147483648
        %v3543 = vmul.f32 %v3542, 1.442695
        %v3544 = vpow.pop %v3543
        %v3545 = vadd.f32 %v3544, 1.0
        %v3546 = vrcp.pop %v3545
        %v3547 = vmul.f32 %v3545, %v3546
        %v3548 = vsub.f32 1.0, %v3547
        %v3549 = vmul.f32 %v3546, %v3548
        %v3550 = vadd.f32 %v3546, %v3549
        %vm3551 = vweird.f32 %v3545
        %vm3552 = vweird.f32 %v3546
        %vm3553 = vmor %vm3551, %vm3552
        %v3554 = vsel %vm3553, %v3546, %v3550
        %v3555 = vand.u32 2147483647, %v3545
        %vm3556 = vcmp.eq.f32.partialorder %v3555, 8.507059e+37
        %v3557 = vand.u32 %v3545, 2147483648
        %v3558 = vor.u32 1.1754944e-38, %v3557
        %v3559 = vsel %vm3556, %v3558, %v3554
        %v3560 = vmul.f32 1.0, %v3559
        %v3562 = vrot.slane %v3513, 4
        %v3564 = vmul.f32 %v3537, %v3562
        %v3565 = vadd.f32 %v2971, %v3564
        %v3566 = vtanh.pop %v3565
        %v3567 = vsub.f32 1.0, %v3560
        %v3568 = vmul.f32 %v3567, %v3566
        %v3569 = vrot.slane %v3450, 7
        %v3571 = vmul.f32 %v3560, %v3569
        %v3572 = vadd.f32 %v3568, %v3571
        %v3574 = vrot.slane %v3572, 4
        %v3575 = vsel %vm2878, %v3574, 0
        %3577 = vmatpush.msra.mxu0 0.0
        %3578 = vmatpush.msra.mxu0 0.0
        %3579 = vmatpush.msra.mxu0 0.0
        %3580 = vmatpush.msra.mxu0 0.0
        %3581 = vmatpush.msra.mxu0 0.0
        %3582 = vmatpush.msra.mxu0 0.0
        %3583 = vmatpush.msra.mxu0 0.0
        %3584 = vmatpush.msra.mxu0 0.0
        %3585 = vmatpush.msra.mxu0 %v2846
        %3586 = vmatpush.msra.mxu0 %v2845
        %3587 = vmatpush.msra.mxu0 %v2844
        %3588 = vmatpush.msra.mxu0 %v2843
        %3589 = vmatpush.msra.mxu0 %v2842
        %3590 = vmatpush.msra.mxu0 %v2841
        %3591 = vmatpush.msra.mxu0 %v2840
        %3592 = vmatpush.msra.mxu0 %v2839
        %3593 = vmatmul.f32.gmra.mxu0 %v3575
        %v3594 = vpop.f32.mrf.mxu0
        %v3595 = vadd.f32 %v2865, %v3594
        %3596 = vdwg.mxu0
        %3597 = vmatpush.msra.mxu0 0.0
        %3598 = vmatpush.msra.mxu0 0.0
        %3599 = vmatpush.msra.mxu0 0.0
        %3600 = vmatpush.msra.mxu0 0.0
        %3601 = vmatpush.msra.mxu0 0.0
        %3602 = vmatpush.msra.mxu0 0.0
        %3603 = vmatpush.msra.mxu0 0.0
        %3604 = vmatpush.msra.mxu0 0.0
        %3605 = vmatpush.msra.mxu0 %v2855
        %3606 = vmatpush.msra.mxu0 %v2854
        %3607 = vmatpush.msra.mxu0 %v2853
        %3608 = vmatpush.msra.mxu0 %v2852
        %3609 = vmatpush.msra.mxu0 %v2851
        %3610 = vmatpush.msra.mxu0 %v2850
        %3611 = vmatpush.msra.mxu0 %v2849
        %3612 = vmatpush.msra.mxu0 %v2848
        %3613 = vmatmul.f32.gmra.mxu0 %v3575
        %v3614 = vpop.f32.mrf.mxu0
        %v3615 = vadd.f32 %v2866, %v3614
        %3616 = vdwg.mxu0
        %3617 = vmatpush.msra.mxu0 0.0
        %3618 = vmatpush.msra.mxu0 0.0
        %3619 = vmatpush.msra.mxu0 0.0
        %3620 = vmatpush.msra.mxu0 0.0
        %3621 = vmatpush.msra.mxu0 0.0
        %3622 = vmatpush.msra.mxu0 0.0
        %3623 = vmatpush.msra.mxu0 0.0
        %3624 = vmatpush.msra.mxu0 0.0
        %3625 = vmatpush.msra.mxu0 %v2864
        %3626 = vmatpush.msra.mxu0 %v2863
        %3627 = vmatpush.msra.mxu0 %v2862
        %3628 = vmatpush.msra.mxu0 %v2861
        %3629 = vmatpush.msra.mxu0 %v2860
        %3630 = vmatpush.msra.mxu0 %v2859
        %3631 = vmatpush.msra.mxu0 %v2858
        %3632 = vmatpush.msra.mxu0 %v2857
        %3633 = vmatmul.f32.gmra.mxu0 %v3575
        %v3634 = vpop.f32.mrf.mxu0
        %v3635 = vadd.f32 %v2867, %v3634
        %3636 = vdwg.mxu0
        %v3638 = vrot.slane %v3595, 3
        %v3640 = vadd.f32 %v2903, %v3638
        %v3641 = vxor.u32 %v3640, 2147483648
        %v3642 = vmul.f32 %v3641, 1.442695
        %v3643 = vpow.pop %v3642
        %v3644 = vadd.f32 %v3643, 1.0
        %v3645 = vrcp.pop %v3644
        %v3646 = vmul.f32 %v3644, %v3645
        %v3647 = vsub.f32 1.0, %v3646
        %v3648 = vmul.f32 %v3645, %v3647
        %v3649 = vadd.f32 %v3645, %v3648
        %vm3650 = vweird.f32 %v3644
        %vm3651 = vweird.f32 %v3645
        %vm3652 = vmor %vm3650, %vm3651
        %v3653 = vsel %vm3652, %v3645, %v3649
        %v3654 = vand.u32 2147483647, %v3644
        %vm3655 = vcmp.eq.f32.partialorder %v3654, 8.507059e+37
        %v3656 = vand.u32 %v3644, 2147483648
        %v3657 = vor.u32 1.1754944e-38, %v3656
        %v3658 = vsel %vm3655, %v3657, %v3653
        %v3659 = vmul.f32 1.0, %v3658
        %v3661 = vrot.slane %v3615, 3
        %v3663 = vadd.f32 %v2937, %v3661
        %v3664 = vxor.u32 %v3663, 2147483648
        %v3665 = vmul.f32 %v3664, 1.442695
        %v3666 = vpow.pop %v3665
        %v3667 = vadd.f32 %v3666, 1.0
        %v3668 = vrcp.pop %v3667
        %v3669 = vmul.f32 %v3667, %v3668
        %v3670 = vsub.f32 1.0, %v3669
        %v3671 = vmul.f32 %v3668, %v3670
        %v3672 = vadd.f32 %v3668, %v3671
        %vm3673 = vweird.f32 %v3667
        %vm3674 = vweird.f32 %v3668
        %vm3675 = vmor %vm3673, %vm3674
        %v3676 = vsel %vm3675, %v3668, %v3672
        %v3677 = vand.u32 2147483647, %v3667
        %vm3678 = vcmp.eq.f32.partialorder %v3677, 8.507059e+37
        %v3679 = vand.u32 %v3667, 2147483648
        %v3680 = vor.u32 1.1754944e-38, %v3679
        %v3681 = vsel %vm3678, %v3680, %v3676
        %v3682 = vmul.f32 1.0, %v3681
        %v3684 = vrot.slane %v3635, 3
        %v3686 = vmul.f32 %v3659, %v3684
        %v3687 = vadd.f32 %v2971, %v3686
        %v3688 = vtanh.pop %v3687
        %v3689 = vsub.f32 1.0, %v3682
        %v3690 = vmul.f32 %v3689, %v3688
        %v3691 = vrot.slane %v3572, 7
        %v3693 = vmul.f32 %v3682, %v3691
        %v3694 = vadd.f32 %v3690, %v3693
        %v3696 = vrot.slane %v3694, 5
        %v3697 = vsel %vm2878, %v3696, 0
        %3699 = vmatpush.msra.mxu0 0.0
        %3700 = vmatpush.msra.mxu0 0.0
        %3701 = vmatpush.msra.mxu0 0.0
        %3702 = vmatpush.msra.mxu0 0.0
        %3703 = vmatpush.msra.mxu0 0.0
        %3704 = vmatpush.msra.mxu0 0.0
        %3705 = vmatpush.msra.mxu0 0.0
        %3706 = vmatpush.msra.mxu0 0.0
        %3707 = vmatpush.msra.mxu0 %v2846
        %3708 = vmatpush.msra.mxu0 %v2845
        %3709 = vmatpush.msra.mxu0 %v2844
        %3710 = vmatpush.msra.mxu0 %v2843
        %3711 = vmatpush.msra.mxu0 %v2842
        %3712 = vmatpush.msra.mxu0 %v2841
        %3713 = vmatpush.msra.mxu0 %v2840
        %3714 = vmatpush.msra.mxu0 %v2839
        %3715 = vmatmul.f32.gmra.mxu0 %v3697
        %v3716 = vpop.f32.mrf.mxu0
        %v3717 = vadd.f32 %v2865, %v3716
        %3718 = vdwg.mxu0
        %3719 = vmatpush.msra.mxu0 0.0
        %3720 = vmatpush.msra.mxu0 0.0
        %3721 = vmatpush.msra.mxu0 0.0
        %3722 = vmatpush.msra.mxu0 0.0
        %3723 = vmatpush.msra.mxu0 0.0
        %3724 = vmatpush.msra.mxu0 0.0
        %3725 = vmatpush.msra.mxu0 0.0
        %3726 = vmatpush.msra.mxu0 0.0
        %3727 = vmatpush.msra.mxu0 %v2855
        %3728 = vmatpush.msra.mxu0 %v2854
        %3729 = vmatpush.msra.mxu0 %v2853
        %3730 = vmatpush.msra.mxu0 %v2852
        %3731 = vmatpush.msra.mxu0 %v2851
        %3732 = vmatpush.msra.mxu0 %v2850
        %3733 = vmatpush.msra.mxu0 %v2849
        %3734 = vmatpush.msra.mxu0 %v2848
        %3735 = vmatmul.f32.gmra.mxu0 %v3697
        %v3736 = vpop.f32.mrf.mxu0
        %v3737 = vadd.f32 %v2866, %v3736
        %3738 = vdwg.mxu0
        %3739 = vmatpush.msra.mxu0 0.0
        %3740 = vmatpush.msra.mxu0 0.0
        %3741 = vmatpush.msra.mxu0 0.0
        %3742 = vmatpush.msra.mxu0 0.0
        %3743 = vmatpush.msra.mxu0 0.0
        %3744 = vmatpush.msra.mxu0 0.0
        %3745 = vmatpush.msra.mxu0 0.0
        %3746 = vmatpush.msra.mxu0 0.0
        %3747 = vmatpush.msra.mxu0 %v2864
        %3748 = vmatpush.msra.mxu0 %v2863
        %3749 = vmatpush.msra.mxu0 %v2862
        %3750 = vmatpush.msra.mxu0 %v2861
        %3751 = vmatpush.msra.mxu0 %v2860
        %3752 = vmatpush.msra.mxu0 %v2859
        %3753 = vmatpush.msra.mxu0 %v2858
        %3754 = vmatpush.msra.mxu0 %v2857
        %3755 = vmatmul.f32.gmra.mxu0 %v3697
        %v3756 = vpop.f32.mrf.mxu0
        %v3757 = vadd.f32 %v2867, %v3756
        %3758 = vdwg.mxu0
        %v3760 = vrot.slane %v3717, 2
        %v3762 = vadd.f32 %v2903, %v3760
        %v3763 = vxor.u32 %v3762, 2147483648
        %v3764 = vmul.f32 %v3763, 1.442695
        %v3765 = vpow.pop %v3764
        %v3766 = vadd.f32 %v3765, 1.0
        %v3767 = vrcp.pop %v3766
        %v3768 = vmul.f32 %v3766, %v3767
        %v3769 = vsub.f32 1.0, %v3768
        %v3770 = vmul.f32 %v3767, %v3769
        %v3771 = vadd.f32 %v3767, %v3770
        %vm3772 = vweird.f32 %v3766
        %vm3773 = vweird.f32 %v3767
        %vm3774 = vmor %vm3772, %vm3773
        %v3775 = vsel %vm3774, %v3767, %v3771
        %v3776 = vand.u32 2147483647, %v3766
        %vm3777 = vcmp.eq.f32.partialorder %v3776, 8.507059e+37
        %v3778 = vand.u32 %v3766, 2147483648
        %v3779 = vor.u32 1.1754944e-38, %v3778
        %v3780 = vsel %vm3777, %v3779, %v3775
        %v3781 = vmul.f32 1.0, %v3780
        %v3783 = vrot.slane %v3737, 2
        %v3785 = vadd.f32 %v2937, %v3783
        %v3786 = vxor.u32 %v3785, 2147483648
        %v3787 = vmul.f32 %v3786, 1.442695
        %v3788 = vpow.pop %v3787
        %v3789 = vadd.f32 %v3788, 1.0
        %v3790 = vrcp.pop %v3789
        %v3791 = vmul.f32 %v3789, %v3790
        %v3792 = vsub.f32 1.0, %v3791
        %v3793 = vmul.f32 %v3790, %v3792
        %v3794 = vadd.f32 %v3790, %v3793
        %vm3795 = vweird.f32 %v3789
        %vm3796 = vweird.f32 %v3790
        %vm3797 = vmor %vm3795, %vm3796
        %v3798 = vsel %vm3797, %v3790, %v3794
        %v3799 = vand.u32 2147483647, %v3789
        %vm3800 = vcmp.eq.f32.partialorder %v3799, 8.507059e+37
        %v3801 = vand.u32 %v3789, 2147483648
        %v3802 = vor.u32 1.1754944e-38, %v3801
        %v3803 = vsel %vm3800, %v3802, %v3798
        %v3804 = vmul.f32 1.0, %v3803
        %v3806 = vrot.slane %v3757, 2
        %v3808 = vmul.f32 %v3781, %v3806
        %v3809 = vadd.f32 %v2971, %v3808
        %v3810 = vtanh.pop %v3809
        %v3811 = vsub.f32 1.0, %v3804
        %v3812 = vmul.f32 %v3811, %v3810
        %v3813 = vrot.slane %v3694, 7
        %v3815 = vmul.f32 %v3804, %v3813
        %v3816 = vadd.f32 %v3812, %v3815
        %v3818 = vrot.slane %v3816, 6
        %v3819 = vsel %vm2878, %v3818, 0
        %3821 = vmatpush.msra.mxu0 0.0
        %3822 = vmatpush.msra.mxu0 0.0
        %3823 = vmatpush.msra.mxu0 0.0
        %3824 = vmatpush.msra.mxu0 0.0
        %3825 = vmatpush.msra.mxu0 0.0
        %3826 = vmatpush.msra.mxu0 0.0
        %3827 = vmatpush.msra.mxu0 0.0
        %3828 = vmatpush.msra.mxu0 0.0
        %3829 = vmatpush.msra.mxu0 %v2846
        %3830 = vmatpush.msra.mxu0 %v2845
        %3831 = vmatpush.msra.mxu0 %v2844
        %3832 = vmatpush.msra.mxu0 %v2843
        %3833 = vmatpush.msra.mxu0 %v2842
        %3834 = vmatpush.msra.mxu0 %v2841
        %3835 = vmatpush.msra.mxu0 %v2840
        %3836 = vmatpush.msra.mxu0 %v2839
        %3837 = vmatmul.f32.gmra.mxu0 %v3819
        %v3838 = vpop.f32.mrf.mxu0
        %v3839 = vadd.f32 %v2865, %v3838
        %3840 = vdwg.mxu0
        %3841 = vmatpush.msra.mxu0 0.0
        %3842 = vmatpush.msra.mxu0 0.0
        %3843 = vmatpush.msra.mxu0 0.0
        %3844 = vmatpush.msra.mxu0 0.0
        %3845 = vmatpush.msra.mxu0 0.0
        %3846 = vmatpush.msra.mxu0 0.0
        %3847 = vmatpush.msra.mxu0 0.0
        %3848 = vmatpush.msra.mxu0 0.0
        %3849 = vmatpush.msra.mxu0 %v2855
        %3850 = vmatpush.msra.mxu0 %v2854
        %3851 = vmatpush.msra.mxu0 %v2853
        %3852 = vmatpush.msra.mxu0 %v2852
        %3853 = vmatpush.msra.mxu0 %v2851
        %3854 = vmatpush.msra.mxu0 %v2850
        %3855 = vmatpush.msra.mxu0 %v2849
        %3856 = vmatpush.msra.mxu0 %v2848
        %3857 = vmatmul.f32.gmra.mxu0 %v3819
        %v3858 = vpop.f32.mrf.mxu0
        %v3859 = vadd.f32 %v2866, %v3858
        %3860 = vdwg.mxu0
        %3861 = vmatpush.msra.mxu0 0.0
        %3862 = vmatpush.msra.mxu0 0.0
        %3863 = vmatpush.msra.mxu0 0.0
        %3864 = vmatpush.msra.mxu0 0.0
        %3865 = vmatpush.msra.mxu0 0.0
        %3866 = vmatpush.msra.mxu0 0.0
        %3867 = vmatpush.msra.mxu0 0.0
        %3868 = vmatpush.msra.mxu0 0.0
        %3869 = vmatpush.msra.mxu0 %v2864
        %3870 = vmatpush.msra.mxu0 %v2863
        %3871 = vmatpush.msra.mxu0 %v2862
        %3872 = vmatpush.msra.mxu0 %v2861
        %3873 = vmatpush.msra.mxu0 %v2860
        %3874 = vmatpush.msra.mxu0 %v2859
        %3875 = vmatpush.msra.mxu0 %v2858
        %3876 = vmatpush.msra.mxu0 %v2857
        %3877 = vmatmul.f32.gmra.mxu0 %v3819
        %v3878 = vpop.f32.mrf.mxu0
        %v3879 = vadd.f32 %v2867, %v3878
        %3880 = vdwg.mxu0
        %v3882 = vrot.slane %v3839, 1
        %v3884 = vadd.f32 %v2903, %v3882
        %v3885 = vxor.u32 %v3884, 2147483648
        %v3886 = vmul.f32 %v3885, 1.442695
        %v3887 = vpow.pop %v3886
        %v3888 = vadd.f32 %v3887, 1.0
        %v3889 = vrcp.pop %v3888
        %v3890 = vmul.f32 %v3888, %v3889
        %v3891 = vsub.f32 1.0, %v3890
        %v3892 = vmul.f32 %v3889, %v3891
        %v3893 = vadd.f32 %v3889, %v3892
        %vm3894 = vweird.f32 %v3888
        %vm3895 = vweird.f32 %v3889
        %vm3896 = vmor %vm3894, %vm3895
        %v3897 = vsel %vm3896, %v3889, %v3893
        %v3898 = vand.u32 2147483647, %v3888
        %vm3899 = vcmp.eq.f32.partialorder %v3898, 8.507059e+37
        %v3900 = vand.u32 %v3888, 2147483648
        %v3901 = vor.u32 1.1754944e-38, %v3900
        %v3902 = vsel %vm3899, %v3901, %v3897
        %v3903 = vmul.f32 1.0, %v3902
        %v3905 = vrot.slane %v3859, 1
        %v3907 = vadd.f32 %v2937, %v3905
        %v3908 = vxor.u32 %v3907, 2147483648
        %v3909 = vmul.f32 %v3908, 1.442695
        %v3910 = vpow.pop %v3909
        %v3911 = vadd.f32 %v3910, 1.0
        %v3912 = vrcp.pop %v3911
        %v3913 = vmul.f32 %v3911, %v3912
        %v3914 = vsub.f32 1.0, %v3913
        %v3915 = vmul.f32 %v3912, %v3914
        %v3916 = vadd.f32 %v3912, %v3915
        %vm3917 = vweird.f32 %v3911
        %vm3918 = vweird.f32 %v3912
        %vm3919 = vmor %vm3917, %vm3918
        %v3920 = vsel %vm3919, %v3912, %v3916
        %v3921 = vand.u32 2147483647, %v3911
        %vm3922 = vcmp.eq.f32.partialorder %v3921, 8.507059e+37
        %v3923 = vand.u32 %v3911, 2147483648
        %v3924 = vor.u32 1.1754944e-38, %v3923
        %v3925 = vsel %vm3922, %v3924, %v3920
        %v3926 = vmul.f32 1.0, %v3925
        %v3928 = vrot.slane %v3879, 1
        %v3930 = vmul.f32 %v3903, %v3928
        %v3931 = vadd.f32 %v2971, %v3930
        %v3932 = vtanh.pop %v3931
        %v3933 = vsub.f32 1.0, %v3926
        %v3934 = vmul.f32 %v3933, %v3932
        %v3935 = vrot.slane %v3816, 7
        %v3937 = vmul.f32 %v3926, %v3935
        %v3938 = vadd.f32 %v3934, %v3937
        %v3940 = vrot.slane %v3938, 7
        %v3941 = vsel %vm2878, %v3940, 0
        %3943 = vmatpush.msra.mxu0 0.0
        %3944 = vmatpush.msra.mxu0 0.0
        %3945 = vmatpush.msra.mxu0 0.0
        %3946 = vmatpush.msra.mxu0 0.0
        %3947 = vmatpush.msra.mxu0 0.0
        %3948 = vmatpush.msra.mxu0 0.0
        %3949 = vmatpush.msra.mxu0 0.0
        %3950 = vmatpush.msra.mxu0 0.0
        %3951 = vmatpush.msra.mxu0 %v2846
        %3952 = vmatpush.msra.mxu0 %v2845
        %3953 = vmatpush.msra.mxu0 %v2844
        %3954 = vmatpush.msra.mxu0 %v2843
        %3955 = vmatpush.msra.mxu0 %v2842
        %3956 = vmatpush.msra.mxu0 %v2841
        %3957 = vmatpush.msra.mxu0 %v2840
        %3958 = vmatpush.msra.mxu0 %v2839
        %3959 = vmatmul.f32.gmra.mxu0 %v3941
        %v3960 = vpop.f32.mrf.mxu0
        %v3961 = vadd.f32 %v2865, %v3960
        %3962 = vdwg.mxu0
        %3963 = vmatpush.msra.mxu0 0.0
        %3964 = vmatpush.msra.mxu0 0.0
        %3965 = vmatpush.msra.mxu0 0.0
        %3966 = vmatpush.msra.mxu0 0.0
        %3967 = vmatpush.msra.mxu0 0.0
        %3968 = vmatpush.msra.mxu0 0.0
        %3969 = vmatpush.msra.mxu0 0.0
        %3970 = vmatpush.msra.mxu0 0.0
        %3971 = vmatpush.msra.mxu0 %v2855
        %3972 = vmatpush.msra.mxu0 %v2854
        %3973 = vmatpush.msra.mxu0 %v2853
        %3974 = vmatpush.msra.mxu0 %v2852
        %3975 = vmatpush.msra.mxu0 %v2851
        %3976 = vmatpush.msra.mxu0 %v2850
        %3977 = vmatpush.msra.mxu0 %v2849
        %3978 = vmatpush.msra.mxu0 %v2848
        %3979 = vmatmul.f32.gmra.mxu0 %v3941
        %v3980 = vpop.f32.mrf.mxu0
        %v3981 = vadd.f32 %v2866, %v3980
        %3982 = vdwg.mxu0
        %3983 = vmatpush.msra.mxu0 0.0
        %3984 = vmatpush.msra.mxu0 0.0
        %3985 = vmatpush.msra.mxu0 0.0
        %3986 = vmatpush.msra.mxu0 0.0
        %3987 = vmatpush.msra.mxu0 0.0
        %3988 = vmatpush.msra.mxu0 0.0
        %3989 = vmatpush.msra.mxu0 0.0
        %3990 = vmatpush.msra.mxu0 0.0
        %3991 = vmatpush.msra.mxu0 %v2864
        %3992 = vmatpush.msra.mxu0 %v2863
        %3993 = vmatpush.msra.mxu0 %v2862
        %3994 = vmatpush.msra.mxu0 %v2861
        %3995 = vmatpush.msra.mxu0 %v2860
        %3996 = vmatpush.msra.mxu0 %v2859
        %3997 = vmatpush.msra.mxu0 %v2858
        %3998 = vmatpush.msra.mxu0 %v2857
        %3999 = vmatmul.f32.gmra.mxu0 %v3941
        %v4000 = vpop.f32.mrf.mxu0
        %v4001 = vadd.f32 %v2867, %v4000
        %4002 = vdwg.mxu0
        %v4003 = vadd.f32 %v2906, %v3961
        %v4004 = vxor.u32 %v4003, 2147483648
        %v4005 = vmul.f32 %v4004, 1.442695
        %v4006 = vpow.pop %v4005
        %v4007 = vadd.f32 %v4006, 1.0
        %v4008 = vrcp.pop %v4007
        %v4009 = vmul.f32 %v4007, %v4008
        %v4010 = vsub.f32 1.0, %v4009
        %v4011 = vmul.f32 %v4008, %v4010
        %v4012 = vadd.f32 %v4008, %v4011
        %vm4013 = vweird.f32 %v4007
        %vm4014 = vweird.f32 %v4008
        %vm4015 = vmor %vm4013, %vm4014
        %v4016 = vsel %vm4015, %v4008, %v4012
        %v4017 = vand.u32 2147483647, %v4007
        %vm4018 = vcmp.eq.f32.partialorder %v4017, 8.507059e+37
        %v4019 = vand.u32 %v4007, 2147483648
        %v4020 = vor.u32 1.1754944e-38, %v4019
        %v4021 = vsel %vm4018, %v4020, %v4016
        %v4022 = vmul.f32 1.0, %v4021
        %v4023 = vadd.f32 %v2940, %v3981
        %v4024 = vxor.u32 %v4023, 2147483648
        %v4025 = vmul.f32 %v4024, 1.442695
        %v4026 = vpow.pop %v4025
        %v4027 = vadd.f32 %v4026, 1.0
        %v4028 = vrcp.pop %v4027
        %v4029 = vmul.f32 %v4027, %v4028
        %v4030 = vsub.f32 1.0, %v4029
        %v4031 = vmul.f32 %v4028, %v4030
        %v4032 = vadd.f32 %v4028, %v4031
        %vm4033 = vweird.f32 %v4027
        %vm4034 = vweird.f32 %v4028
        %vm4035 = vmor %vm4033, %vm4034
        %v4036 = vsel %vm4035, %v4028, %v4032
        %v4037 = vand.u32 2147483647, %v4027
        %vm4038 = vcmp.eq.f32.partialorder %v4037, 8.507059e+37
        %v4039 = vand.u32 %v4027, 2147483648
        %v4040 = vor.u32 1.1754944e-38, %v4039
        %v4041 = vsel %vm4038, %v4040, %v4036
        %v4042 = vmul.f32 1.0, %v4041
        %v4043 = vmul.f32 %v4022, %v4001
        %v4044 = vadd.f32 %v2974, %v4043
        %v4045 = vtanh.pop %v4044
        %v4046 = vsub.f32 1.0, %v4042
        %v4047 = vmul.f32 %v4046, %v4045
        %v4049 = vmul.f32 %v4042, %v3940
        %v4050 = vadd.f32 %v4047, %v4049
        %v4052 = vsel %vm2878, %v4050, 0
        %4054 = vmatpush.msra.mxu0 0.0
        %4055 = vmatpush.msra.mxu0 0.0
        %4056 = vmatpush.msra.mxu0 0.0
        %4057 = vmatpush.msra.mxu0 0.0
        %4058 = vmatpush.msra.mxu0 0.0
        %4059 = vmatpush.msra.mxu0 0.0
        %4060 = vmatpush.msra.mxu0 0.0
        %4061 = vmatpush.msra.mxu0 0.0
        %4062 = vmatpush.msra.mxu0 %v2846
        %4063 = vmatpush.msra.mxu0 %v2845
        %4064 = vmatpush.msra.mxu0 %v2844
        %4065 = vmatpush.msra.mxu0 %v2843
        %4066 = vmatpush.msra.mxu0 %v2842
        %4067 = vmatpush.msra.mxu0 %v2841
        %4068 = vmatpush.msra.mxu0 %v2840
        %4069 = vmatpush.msra.mxu0 %v2839
        %4070 = vmatmul.f32.gmra.mxu0 %v4052
        %v4071 = vpop.f32.mrf.mxu0
        %v4072 = vadd.f32 %v2865, %v4071
        %4073 = vdwg.mxu0
        %4074 = vmatpush.msra.mxu0 0.0
        %4075 = vmatpush.msra.mxu0 0.0
        %4076 = vmatpush.msra.mxu0 0.0
        %4077 = vmatpush.msra.mxu0 0.0
        %4078 = vmatpush.msra.mxu0 0.0
        %4079 = vmatpush.msra.mxu0 0.0
        %4080 = vmatpush.msra.mxu0 0.0
        %4081 = vmatpush.msra.mxu0 0.0
        %4082 = vmatpush.msra.mxu0 %v2855
        %4083 = vmatpush.msra.mxu0 %v2854
        %4084 = vmatpush.msra.mxu0 %v2853
        %4085 = vmatpush.msra.mxu0 %v2852
        %4086 = vmatpush.msra.mxu0 %v2851
        %4087 = vmatpush.msra.mxu0 %v2850
        %4088 = vmatpush.msra.mxu0 %v2849
        %4089 = vmatpush.msra.mxu0 %v2848
        %4090 = vmatmul.f32.gmra.mxu0 %v4052
        %v4091 = vpop.f32.mrf.mxu0
        %v4092 = vadd.f32 %v2866, %v4091
        %4093 = vdwg.mxu0
        %4094 = vmatpush.msra.mxu0 0.0
        %4095 = vmatpush.msra.mxu0 0.0
        %4096 = vmatpush.msra.mxu0 0.0
        %4097 = vmatpush.msra.mxu0 0.0
        %4098 = vmatpush.msra.mxu0 0.0
        %4099 = vmatpush.msra.mxu0 0.0
        %4100 = vmatpush.msra.mxu0 0.0
        %4101 = vmatpush.msra.mxu0 0.0
        %4102 = vmatpush.msra.mxu0 %v2864
        %4103 = vmatpush.msra.mxu0 %v2863
        %4104 = vmatpush.msra.mxu0 %v2862
        %4105 = vmatpush.msra.mxu0 %v2861
        %4106 = vmatpush.msra.mxu0 %v2860
        %4107 = vmatpush.msra.mxu0 %v2859
        %4108 = vmatpush.msra.mxu0 %v2858
        %4109 = vmatpush.msra.mxu0 %v2857
        %4110 = vmatmul.f32.gmra.mxu0 %v4052
        %v4111 = vpop.f32.mrf.mxu0
        %v4112 = vadd.f32 %v2867, %v4111
        %4113 = vdwg.mxu0
        %v4115 = vrot.slane %v4072, 7
        %v4117 = vadd.f32 %v2906, %v4115
        %v4118 = vxor.u32 %v4117, 2147483648
        %v4119 = vmul.f32 %v4118, 1.442695
        %v4120 = vpow.pop %v4119
        %v4121 = vadd.f32 %v4120, 1.0
        %v4122 = vrcp.pop %v4121
        %v4123 = vmul.f32 %v4121, %v4122
        %v4124 = vsub.f32 1.0, %v4123
        %v4125 = vmul.f32 %v4122, %v4124
        %v4126 = vadd.f32 %v4122, %v4125
        %vm4127 = vweird.f32 %v4121
        %vm4128 = vweird.f32 %v4122
        %vm4129 = vmor %vm4127, %vm4128
        %v4130 = vsel %vm4129, %v4122, %v4126
        %v4131 = vand.u32 2147483647, %v4121
        %vm4132 = vcmp.eq.f32.partialorder %v4131, 8.507059e+37
        %v4133 = vand.u32 %v4121, 2147483648
        %v4134 = vor.u32 1.1754944e-38, %v4133
        %v4135 = vsel %vm4132, %v4134, %v4130
        %v4136 = vmul.f32 1.0, %v4135
        %v4138 = vrot.slane %v4092, 7
        %v4140 = vadd.f32 %v2940, %v4138
        %v4141 = vxor.u32 %v4140, 2147483648
        %v4142 = vmul.f32 %v4141, 1.442695
        %v4143 = vpow.pop %v4142
        %v4144 = vadd.f32 %v4143, 1.0
        %v4145 = vrcp.pop %v4144
        %v4146 = vmul.f32 %v4144, %v4145
        %v4147 = vsub.f32 1.0, %v4146
        %v4148 = vmul.f32 %v4145, %v4147
        %v4149 = vadd.f32 %v4145, %v4148
        %vm4150 = vweird.f32 %v4144
        %vm4151 = vweird.f32 %v4145
        %vm4152 = vmor %vm4150, %vm4151
        %v4153 = vsel %vm4152, %v4145, %v4149
        %v4154 = vand.u32 2147483647, %v4144
        %vm4155 = vcmp.eq.f32.partialorder %v4154, 8.507059e+37
        %v4156 = vand.u32 %v4144, 2147483648
        %v4157 = vor.u32 1.1754944e-38, %v4156
        %v4158 = vsel %vm4155, %v4157, %v4153
        %v4159 = vmul.f32 1.0, %v4158
        %v4161 = vrot.slane %v4112, 7
        %v4163 = vmul.f32 %v4136, %v4161
        %v4164 = vadd.f32 %v2974, %v4163
        %v4165 = vtanh.pop %v4164
        %v4166 = vsub.f32 1.0, %v4159
        %v4167 = vmul.f32 %v4166, %v4165
        %v4168 = vrot.slane %v4050, 7
        %v4170 = vmul.f32 %v4159, %v4168
        %v4171 = vadd.f32 %v4167, %v4170
        %v4172 = vld [vmem:[%s15] sm:$0xff]
        %v4173 = vld [vmem:[%s15 + $0x8] sm:$0xff]
        %v4174 = vld [vmem:[%s15 + $0x10] sm:$0xff]
        %v4175 = vld [vmem:[%s15 + $0x18] sm:$0xff]
        %v4176 = vld [vmem:[%s15 + $0x20] sm:$0xff]
        %v4177 = vld [vmem:[%s15 + $0x28] sm:$0xff]
        %v4178 = vld [vmem:[%s15 + $0x30] sm:$0xff]
        %v4179 = vld [vmem:[%s15 + $0x38] sm:$0xff]
        %v4180 = vld [vmem:[#allocation18] sm:$0x1]
        %v4182 = vrot.slane %v4171, 1
        %v4183 = vsel %vm2878, %v4182, 0
        %4185 = vmatpush.msra.mxu0 0.0
        %4186 = vmatpush.msra.mxu0 0.0
        %4187 = vmatpush.msra.mxu0 0.0
        %4188 = vmatpush.msra.mxu0 0.0
        %4189 = vmatpush.msra.mxu0 0.0
        %4190 = vmatpush.msra.mxu0 0.0
        %4191 = vmatpush.msra.mxu0 0.0
        %4192 = vmatpush.msra.mxu0 0.0
        %4193 = vmatpush.msra.mxu0 %v4179
        %4194 = vmatpush.msra.mxu0 %v4178
        %4195 = vmatpush.msra.mxu0 %v4177
        %4196 = vmatpush.msra.mxu0 %v4176
        %4197 = vmatpush.msra.mxu0 %v4175
        %4198 = vmatpush.msra.mxu0 %v4174
        %4199 = vmatpush.msra.mxu0 %v4173
        %4200 = vmatpush.msra.mxu0 %v4172
        %4201 = vmatmul.f32.gmra.mxu0 %v4183
        %v4202 = vpop.f32.mrf.mxu0
        %v4203 = vadd.f32 %v4180, %v4202
        %4204 = vdwg.mxu0
        %v4205 = vmax.f32 %v4203, 0.0
        %v4206 = vld [vmem:[%s17] sm:$0xff]
        %v4207 = vld [vmem:[%s17 + $0x8] sm:$0xff]
        %v4208 = vld [vmem:[%s17 + $0x10] sm:$0xff]
        %v4209 = vld [vmem:[%s17 + $0x18] sm:$0xff]
        %v4210 = vld [vmem:[#allocation20] sm:$0x1]
        %v4212 = vsel %vm1807, %v4205, 0
        %4214 = vmatpush.msra.mxu0 0.0
        %4215 = vmatpush.msra.mxu0 0.0
        %4216 = vmatpush.msra.mxu0 0.0
        %4217 = vmatpush.msra.mxu0 0.0
        %4218 = vmatpush.msra.mxu0 0.0
        %4219 = vmatpush.msra.mxu0 0.0
        %4220 = vmatpush.msra.mxu0 0.0
        %4221 = vmatpush.msra.mxu0 0.0
        %4222 = vmatpush.msra.mxu0 0.0
        %4223 = vmatpush.msra.mxu0 0.0
        %4224 = vmatpush.msra.mxu0 0.0
        %4225 = vmatpush.msra.mxu0 0.0
        %4226 = vmatpush.msra.mxu0 %v4209
        %4227 = vmatpush.msra.mxu0 %v4208
        %4228 = vmatpush.msra.mxu0 %v4207
        %4229 = vmatpush.msra.mxu0 %v4206
        %4230 = vmatmul.f32.gmra.mxu0 %v4212
        %v4231 = vpop.f32.mrf.mxu0
        %v4232 = vadd.f32 %v4210, %v4231
        %4233 = vdwg.mxu0
        %v4234 = vld [vmem:[#allocation8] sm:$0x1]
        %4236 = vset.pattern.permute.xlu0 0
        %4237 = vperm.xlu0 %4236, %v4234
        %v4238 = vpop.permute.xlu0 %4237
        %v4240 = vperm.slane %v4238, 0
        %v4241 = vmul.f32 %v4232, %v4240
        %vm4242 = vcmask 24576
        %4243 = vst.msk [vmem:[%s733] sm:$0x1] %vm4242, %v4241
        %s4244 = sand.u32 %s473, 1
        %s4245 = scalar_lea.sflag [#allocation11], %s4244
        %s4246 = sand.u32 %s473, 1
        %s4247 = scalar_lea.vmem [#allocation21], %s4246
        // Predicated region
        $region129: #{sa_model_forward.1} parent=99 // pred_check
          %p4248 = pneg %p483
        $region130: #{sa_model_forward.1} parent=99 // pred_check_branch
          %4250 = sbr.rel (%p4248) target = $region132
        $region131: #{sa_model_forward.1} parent=99 // pred_region
          %4252 = vsyncadd %s4245, 0
          %s4253 = scalar_lea.hbm %s20, %s40
          %s4255 = sshll.u32 %s4247, 4
          %s4256 = int_to_ptr.vmem [resolvable:$true] %s4255
          %s4257 = sshll.u32 %s4253, 4
          %s4258 = int_to_ptr.hbm [resolvable:$true] %s4257
          %4260 = dma.vmem_to_hbm [thread:$0]  %s4256, 16, %s4258, %s4245
        $region132: #{sa_model_forward.1} parent=99 // pred_fallthru
          _
      $region100: #{sa_model_forward.1} parent=5 // pred_fallthru
        _
      %p4261 = scmp.le.s32.totalorder 2, %s35
      // Predicated region
      $region133: #{sa_model_forward.1} parent=5 // pred_check
        %p4262 = pneg %p4261
      $region134: #{sa_model_forward.1} parent=5 // pred_check_branch
        %4264 = sbr.rel (%p4262) target = $region136
      $region135: #{sa_model_forward.1} parent=5 // pred_region
        %s4265 = ssub.s32 %s35, 2
        // Predicated region
        $region137: #{sa_model_forward.1} parent=135 // pred_check
          %p4266 = pneg %p489
        $region138: #{sa_model_forward.1} parent=135 // pred_check_branch
          %4268 = sbr.rel (%p4266) target = $region140
        $region139: #{sa_model_forward.1} parent=135 // pred_region
          %s4269 = sand.u32 %s474, 1
          %s4270 = scalar_lea.sflag [#allocation11], %s4269
          %s4271 = sand.u32 %s474, 1
          %s4272 = scalar_lea.vmem [#allocation21], %s4271
          %4274 = dma.done %s4270, 16
        $region140: #{sa_model_forward.1} parent=135 // pred_fallthru
          _
      $region136: #{sa_model_forward.1} parent=5 // pred_fallthru
        _
    $region6: #{sa_model_forward.1} parent=1 // loop_footer
      %s39 = sadd.s32 1, %s35
    $region7: #{sa_model_forward.1} parent=1 // loop_footer_branch
      %34 = sbr.rel target = $region3
    $region8: #{sa_model_forward.1} parent=1 // loop_exit
      _
    %4275 = vsyncpa [#allocation10], 1
    %s4276 = scalar_lea.sflag [#allocation10], 1
    %4277 = vsyncpa %s4276, 1
    %4278 = vsyncpa [#allocation13], 1
    %4279 = vsyncpa [#allocation16], 1
    %4280 = vsyncpa [#allocation19], 1
    %4281 = vsyncpa [#allocation11], 1
    %s4282 = scalar_lea.sflag [#allocation11], 1
    %4283 = vsyncpa %s4282, 1

</llo_original>
